<compile_context>
chip_gen: v7x
topology: tpu7x:2x2x1
jax: 0.10.0
libtpu: 0.0.40
codegen_flags: <defaults>
</compile_context>

<pallas_src>
import functools

import jax
import jax.numpy as jnp
from jax.experimental import pallas as pl
from jax.experimental.pallas import tpu as pltpu


# --------------------------- hardware / tiling ------------------------------

def _detect_gen():
    try:
        kind = jax.devices()[0].device_kind.lower()
    except Exception:
        return "v6"
    if "v7" in kind:
        return "v7"
    if ("v5 lite" in kind or "v5lite" in kind or "v5e" in kind or
            "v5" in kind or "v4" in kind or "v3" in kind or "v2" in kind):
        return "v5"            # 128x128 MXU generations -> 128-wide tiles
    return "v6"


_GEN = _detect_gen()
_TN_CAP = 128 if _GEN == "v5" else 256
_TK_CAP = 1024 if _GEN == "v5" else 2048
_VMEM_LIMIT = 32 * 1024 * 1024           # explicit budget; safe on v5e/v6e/v7x
_FUSED_Y_ROWS = 1024                      # fused single-call path limits
_FUSED_Y_COLS = 512


def _round_up(x, m):
    return (x + m - 1) // m * m


def _largest_tile(padded, cap):
    """Largest multiple of 128 dividing `padded` and <= cap."""
    units = padded // 128
    cap_units = max(cap // 128, 1)
    best = 1
    for d in range(1, units + 1):
        if units % d == 0 and d <= cap_units:
            best = d
    return best * 128


def _row_tile(mp, cp):
    """Row tile for the elementwise affine+ReLU pass (bf16 in+out, 2x buffers)."""
    budget = (8 << 20) if _GEN == "v7" else (12 << 20)
    for rt in (8192, 4096, 2048, 1024, 512, 256, 128, 64, 32, 16, 8):
        if rt <= mp and mp % rt == 0 and rt * cp * 8 <= budget:
            return rt
    return mp


def _mm_tiles(m, kp, cp):
    tm = 128 if m >= 128 else _round_up(m, 8)
    mp = _round_up(m, tm)
    tn = _largest_tile(cp, _TN_CAP)
    # v7x has two TensorCores: keep at least one parallel axis with extent >= 2.
    if _GEN == "v7" and mp // tm == 1 and cp // tn == 1 and cp >= 256:
        tn = 128
    tk = _largest_tile(kp, _TK_CAP)
    return tm, mp, tn, tk


def _cparams(sem):
    return pltpu.CompilerParams(dimension_semantics=sem,
                                vmem_limit_bytes=_VMEM_LIMIT)


# ------------------------------ Pallas kernels ------------------------------

def _fused_block_kernel(a_ref, w_ref, agg_ref, g_ref, b_ref, o_ref, acc_ref,
                        *, inv_count, eps):
    """Whole _block layer in one call: K-gridded matmul into a resident f32
    accumulator, epilogue = BatchNorm batch stats + affine + ReLU + bf16 store.
    Per-channel statistics come from per-column sums via a 0/1 aggregation
    matmul (also broadcasts channel totals back to every phase column)."""
    k = pl.program_id(0)

    @pl.when(k == 0)
    def _():
        acc_ref[...] = jnp.zeros_like(acc_ref)

    acc_ref[...] += jnp.dot(a_ref[...], w_ref[...],
                            preferred_element_type=jnp.float32)

    @pl.when(k == pl.num_programs(0) - 1)
    def _():
        mp, cp = acc_ref.shape
        ps = jnp.zeros((8, cp), jnp.float32)
        pq = jnp.zeros((8, cp), jnp.float32)
        for r in range(0, mp, 8):                 # streamed 8-row stats fold
            blk = acc_ref[r:r + 8, :]
            ps = ps + blk
            pq = pq + blk * blk
        agg = agg_ref[...]
        tot1 = jnp.sum(jnp.dot(ps, agg, preferred_element_type=jnp.float32),
                       axis=0, keepdims=True)
        tot2 = jnp.sum(jnp.dot(pq, agg, preferred_element_type=jnp.float32),
                       axis=0, keepdims=True)
        mean = tot1 * inv_count
        var = jnp.maximum(tot2 * inv_count - mean * mean, 0.0)
        scale = g_ref[...] * jax.lax.rsqrt(var + eps)
        shift = b_ref[...] - mean * scale
        for r in range(0, mp, 8):                 # streamed normalize + store
            blk = acc_ref[r:r + 8, :]
            o_ref[r:r + 8, :] = jnp.maximum(blk * scale + shift,
                                            0.0).astype(o_ref.dtype)


def _mm_bn_stats_kernel(a_ref, w_ref, y_ref, sum_ref, sq_ref, acc_ref):
    """Fallback (large layers): K-tiled bf16 matmul with f32 accumulator.  The
    epilogue streams 8-row slices of the accumulator: bf16 y store + per-column
    sum / sum-of-squares partials (folded to 8 sublanes)."""
    @pl.when(pl.program_id(2) == 0)
    def _():
        acc_ref[...] = jnp.zeros_like(acc_ref)

    acc_ref[...] += jnp.dot(a_ref[...], w_ref[...],
                            preferred_element_type=jnp.float32)

    @pl.when(pl.program_id(2) == pl.num_programs(2) - 1)
    def _():
        tm, tn = acc_ref.shape
        ps = jnp.zeros((8, tn), jnp.float32)
        pq = jnp.zeros((8, tn), jnp.float32)
        for r in range(0, tm, 8):
            blk = acc_ref[r:r + 8, :]
            y_ref[r:r + 8, :] = blk.astype(y_ref.dtype)
            ps = ps + blk
            pq = pq + blk * blk
        sum_ref[...] = ps
        sq_ref[...] = pq


def _mm_bias_tanh_kernel(a_ref, w_ref, b_ref, o_ref, acc_ref):
    """Final layer: K-tiled matmul with fused bias + tanh epilogue."""
    @pl.when(pl.program_id(2) == 0)
    def _():
        acc_ref[...] = jnp.zeros_like(acc_ref)

    acc_ref[...] += jnp.dot(a_ref[...], w_ref[...],
                            preferred_element_type=jnp.float32)

    @pl.when(pl.program_id(2) == pl.num_programs(2) - 1)
    def _():
        o_ref[...] = jnp.tanh(acc_ref[...] + b_ref[...])


def _affine_relu_kernel(y_ref, scale_ref, shift_ref, o_ref):
    y = y_ref[...].astype(jnp.float32)
    o_ref[...] = jnp.maximum(y * scale_ref[...] + shift_ref[...],
                             0.0).astype(o_ref.dtype)


# ------------------------------ Pallas wrappers ------------------------------

def fused_block(a_pad, w_pad, agg, gamma_cols, beta_cols, count, tk, eps=1e-5):
    mp, kp = a_pad.shape
    _, cp = w_pad.shape
    kern = functools.partial(_fused_block_kernel,
                             inv_count=1.0 / float(count), eps=eps)
    return pl.pallas_call(
        kern,
        out_shape=jax.ShapeDtypeStruct((mp, cp), jnp.bfloat16),
        grid=(kp // tk,),
        in_specs=[pl.BlockSpec((mp, tk), lambda k: (0, k)),
                  pl.BlockSpec((tk, cp), lambda k: (k, 0)),
                  pl.BlockSpec((cp, cp), lambda k: (0, 0)),
                  pl.BlockSpec((1, cp), lambda k: (0, 0)),
                  pl.BlockSpec((1, cp), lambda k: (0, 0))],
        out_specs=pl.BlockSpec((mp, cp), lambda k: (0, 0)),
        scratch_shapes=[pltpu.VMEM((mp, cp), jnp.float32)],
        compiler_params=_cparams(("arbitrary",)),
    )(a_pad, w_pad, agg, gamma_cols, beta_cols)


def matmul_bn_stats(a_pad, w_pad, tm, tn, tk):
    mp, kp = a_pad.shape
    _, cp = w_pad.shape
    mt, nt, kt = mp // tm, cp // tn, kp // tk
    y, psum, psq = pl.pallas_call(
        _mm_bn_stats_kernel,
        out_shape=(jax.ShapeDtypeStruct((mp, cp), jnp.bfloat16),
                   jax.ShapeDtypeStruct((mt * 8, cp), jnp.float32),
                   jax.ShapeDtypeStruct((mt * 8, cp), jnp.float32)),
        grid=(mt, nt, kt),
        in_specs=[pl.BlockSpec((tm, tk), lambda i, j, k: (i, k)),
                  pl.BlockSpec((tk, tn), lambda i, j, k: (k, j))],
        out_specs=(pl.BlockSpec((tm, tn), lambda i, j, k: (i, j)),
                   pl.BlockSpec((8, tn), lambda i, j, k: (i, j)),
                   pl.BlockSpec((8, tn), lambda i, j, k: (i, j))),
        scratch_shapes=[pltpu.VMEM((tm, tn), jnp.float32)],
        compiler_params=_cparams(("parallel", "parallel", "arbitrary")),
    )(a_pad, w_pad)
    return y, jnp.sum(psum, axis=0), jnp.sum(psq, axis=0)


def matmul_bias_tanh(a_pad, w_pad, bias_cols, tm, tn, tk):
    mp, kp = a_pad.shape
    _, cp = w_pad.shape
    mt, nt, kt = mp // tm, cp // tn, kp // tk
    return pl.pallas_call(
        _mm_bias_tanh_kernel,
        out_shape=jax.ShapeDtypeStruct((mp, cp), jnp.float32),
        grid=(mt, nt, kt),
        in_specs=[pl.BlockSpec((tm, tk), lambda i, j, k: (i, k)),
                  pl.BlockSpec((tk, tn), lambda i, j, k: (k, j)),
                  pl.BlockSpec((1, tn), lambda i, j, k: (0, j))],
        out_specs=pl.BlockSpec((tm, tn), lambda i, j, k: (i, j)),
        scratch_shapes=[pltpu.VMEM((tm, tn), jnp.float32)],
        compiler_params=_cparams(("parallel", "parallel", "arbitrary")),
    )(a_pad, w_pad, bias_cols)


def affine_relu(y_pad, scale_cols, shift_cols):
    mp, cp = y_pad.shape
    rt = _row_tile(mp, cp)
    return pl.pallas_call(
        _affine_relu_kernel,
        out_shape=jax.ShapeDtypeStruct((mp, cp), jnp.bfloat16),
        grid=(mp // rt,),
        in_specs=[pl.BlockSpec((rt, cp), lambda i: (i, 0)),
                  pl.BlockSpec((1, cp), lambda i: (0, 0)),
                  pl.BlockSpec((1, cp), lambda i: (0, 0))],
        out_specs=pl.BlockSpec((rt, cp), lambda i: (i, 0)),
        compiler_params=_cparams(("parallel",)),
    )(y_pad, scale_cols, shift_cols)


# -------------------------------- JAX glue ----------------------------------

def _subpixel_patches(x_nhwc):
    """3x3 dense im2col on the un-dilated input (padding 1), bf16 in/out.
    Returns [N*H*W, 9*Cin] with column index = (dh*3+dw)*Cin + ci."""
    # TODO(synk): fuse this im2col into the matmul kernel (halo-tiled x input)
    # so the 9xCin patch matrix is never materialized in HBM.
    n, h, w, cin = x_nhwc.shape
    xp = jnp.pad(x_nhwc, ((0, 0), (1, 1), (1, 1), (0, 0)))
    taps = [xp[:, dh:dh + h, dw:dw + w, :] for dh in range(3) for dw in range(3)]
    patches = jnp.stack(taps, axis=3)                  # [N, H, W, 9, Cin]
    return patches.reshape(n * h * w, 9 * cin)


def _subpixel_weight_matrix(w):
    """ConvTranspose2d(k=4, s=2, p=1) weight [Cin, Cout, 4, 4] -> [9*Cin, 4*Cout]
    for the sub-pixel formulation.  Row = (tap dh*3+dw, ci); col = (phase, co),
    phase = ph*2+pw = (oh%2, ow%2).  Taps a phase does not use stay zero."""
    cin, cout = w.shape[0], w.shape[1]
    w3 = jnp.zeros((9, cin, 4, cout), w.dtype)
    for ph in range(2):
        for pw in range(2):
            for dh in (ph, ph + 1):
                for dw in (pw, pw + 1):
                    kh = 3 + ph - 2 * dh
                    kw = 3 + pw - 2 * dw
                    w3 = w3.at[dh * 3 + dw, :, ph * 2 + pw, :].set(w[:, :, kh, kw])
    return w3.reshape(9 * cin, 4 * cout)


def _phase_to_nhwc(y, n, h, w, cout):
    """[N*H*W, 4*Cout] phase-grouped output -> NHWC [N, 2H, 2W, Cout]."""
    # TODO(synk): keep activations phase-grouped between layers so this XLA
    # transpose (and the next layer's halo pad) disappears.
    return (y.reshape(n, h, w, 2, 2, cout)
              .transpose(0, 1, 3, 2, 4, 5)
              .reshape(n, 2 * h, 2 * w, cout))


class GeneratorPallas:
    """JAX/Pallas port of the WGAN_GP Generator forward pass."""

    def __init__(self, channels_noise, channels_img, features_g, img_size,
                 condi, embed_size=None, embed_type=None, label_type="1d",
                 num_classes=None, key=None, force_fallback=False):
        if key is None:
            key = jax.random.PRNGKey(0)
        self.channels_noise = channels_noise
        self.channels_img = channels_img
        self.features_g = features_g
        self.img_size = img_size
        self.condi = condi
        self.embed_size = embed_size
        self.embed_type = embed_type
        self.label_type = label_type
        self.num_classes = num_classes
        self.force_fallback = force_fallback

        keys = iter(jax.random.split(key, 32))
        self.params = {}
        self.ref_weights = []
        block_in = channels_noise

        if condi and embed_type is not None:
            block_in = channels_noise + embed_size
            if embed_type == "torch":
                self.params["embed_table"] = jax.random.normal(
                    next(keys), (num_classes, embed_size), jnp.float32)
            elif embed_type == "linear":
                self.params["embed_w"] = 0.05 * jax.random.normal(
                    next(keys), (num_classes, embed_size), jnp.float32)
                self.params["embed_b"] = jnp.zeros((embed_size,), jnp.float32)
            else:
                raise ValueError(f"embed_type '{embed_type}' not supported")

        fg = features_g
        if img_size == 128:
            chans = [block_in, fg * 32, fg * 16, fg * 8, fg * 4, fg * 2]
        elif img_size == 64:
            chans = [block_in, fg * 16, fg * 8, fg * 4, fg * 2]
        elif img_size == 32:
            chans = [block_in, fg * 8, fg * 4, fg * 2]
        else:
            raise ValueError(f"Image size {img_size} not supported")

        # _block layers: ConvTranspose2d(bias=False) + BatchNorm2d + ReLU.
        self.layer_meta = []
        for li in range(len(chans) - 1):
            cin, cout = chans[li], chans[li + 1]
            w = 0.05 * jax.random.normal(next(keys), (cin, cout, 4, 4), jnp.float32)
            self.ref_weights.append(w)
            if li == 0:
                # ConvTranspose2d(k=4, s=1, p=0) on the 1x1 latent is a plain
                # matmul; columns grouped as (kh, kw, co) -> 16 groups.
                wmat = jnp.transpose(w, (0, 2, 3, 1)).reshape(cin, 16 * cout)
                kind, grp = "first", 16
            else:
                wmat = _subpixel_weight_matrix(w)
                kind, grp = "sub", 4
            K, C = wmat.shape
            kp, cp = _round_up(K, 128), _round_up(C, 128)
            self.params[f"wpad{li}"] = jnp.pad(
                wmat, ((0, kp - K), (0, cp - C))).astype(jnp.bfloat16)
            self.params[f"gamma{li}"] = jnp.ones((cout,), jnp.float32)
            self.params[f"beta{li}"] = jnp.zeros((cout,), jnp.float32)
            if cp <= _FUSED_Y_COLS:
                # 0/1 matrix: agg[i, j] = 1 iff columns i, j map to the same
                # output channel (col = group*cout + co).  Used by the fused
                # kernel to aggregate + broadcast BN stats in one matmul.
                cols = jnp.arange(cp)
                valid = cols < C
                same = (cols[:, None] % cout) == (cols[None, :] % cout)
                self.params[f"agg{li}"] = (
                    same & valid[:, None] & valid[None, :]).astype(jnp.float32)
            self.layer_meta.append(dict(kind=kind, cout=cout, grp=grp,
                                        K=K, C=C, Kp=kp, Cp=cp))

        # Final ConvTranspose2d(fg*2, channels_img, 4, 2, 1) with bias, then Tanh.
        w = 0.05 * jax.random.normal(
            next(keys), (chans[-1], channels_img, 4, 4), jnp.float32)
        self.ref_w_out = w
        wmat = _subpixel_weight_matrix(w)
        K, C = wmat.shape
        kp, cp = _round_up(K, 128), _round_up(C, 128)
        self.params["wpad_out"] = jnp.pad(
            wmat, ((0, kp - K), (0, cp - C))).astype(jnp.bfloat16)
        self.params["b_out"] = jnp.zeros((channels_img,), jnp.float32)
        self.out_meta = dict(cout=channels_img, K=K, C=C, Kp=kp, Cp=cp)

        self._forward_jit = jax.jit(self._forward_impl)

    # ---------------- per-layer forward ----------------

    def _bn_relu_layer(self, x, params, li, meta, eps=1e-5):
        kind, cout, grp = meta["kind"], meta["cout"], meta["grp"]
        K, kp, cp = meta["K"], meta["Kp"], meta["Cp"]
        wpad = params[f"wpad{li}"]
        gamma, beta = params[f"gamma{li}"], params[f"beta{li}"]
        n, h, w, _ = x.shape
        if kind == "first":                       # 1x1 latent -> 4x4
            patches = x.reshape(n, -1)
            m = n
        else:                                     # sub-pixel transposed conv
            patches = _subpixel_patches(x)
            m = n * h * w

        count = m * grp                           # = N * Ho * Wo per channel
        mp8 = _round_up(m, 8)
        use_fused = (not self.force_fallback and f"agg{li}" in params
                     and mp8 <= _FUSED_Y_ROWS and cp <= _FUSED_Y_COLS)

        if use_fused:
            # Single pallas_call: matmul + BN (batch stats) + affine + ReLU.
            gcols = jnp.pad(jnp.tile(gamma, grp), (0, cp - grp * cout))[None, :]
            bcols = jnp.pad(jnp.tile(beta, grp), (0, cp - grp * cout))[None, :]
            a = jnp.pad(patches, ((0, mp8 - m), (0, kp - K)))
            tk = _largest_tile(kp, _TK_CAP)
            y = fused_block(a, wpad, params[f"agg{li}"], gcols, bcols,
                            count, tk, eps)[:m, :grp * cout]
        else:
            # Two calls: tiled matmul with fused stats, then affine+ReLU.
            tm, mp, tn, tk = _mm_tiles(m, kp, cp)
            a = jnp.pad(patches, ((0, mp - m), (0, kp - K)))
            y, col_sum, col_sq = matmul_bn_stats(a, wpad, tm, tn, tk)
            ch_sum = col_sum[:grp * cout].reshape(grp, cout).sum(axis=0)
            ch_sq = col_sq[:grp * cout].reshape(grp, cout).sum(axis=0)
            mean = ch_sum / count
            var = jnp.maximum(ch_sq / count - mean * mean, 0.0)
            inv = jax.lax.rsqrt(var + eps)
            scale = gamma * inv
            shift = beta - mean * scale
            scale_cols = jnp.pad(jnp.tile(scale, grp),
                                 (0, cp - grp * cout))[None, :]
            shift_cols = jnp.pad(jnp.tile(shift, grp),
                                 (0, cp - grp * cout))[None, :]
            y = affine_relu(y, scale_cols, shift_cols)[:m, :grp * cout]

        if kind == "first":
            return y.reshape(n, 4, 4, cout)       # (kh, kw, co) -> NHWC
        return _phase_to_nhwc(y, n, h, w, cout)

    def _tanh_layer(self, x, params, meta):
        cout = meta["cout"]
        K, kp, cp = meta["K"], meta["Kp"], meta["Cp"]
        n, h, w, _ = x.shape
        patches = _subpixel_patches(x)
        m = n * h * w
        tm, mp, tn, tk = _mm_tiles(m, kp, cp)
        a = jnp.pad(patches, ((0, mp - m), (0, kp - K)))
        bias_cols = jnp.pad(jnp.tile(params["b_out"], 4),
                            (0, cp - 4 * cout))[None, :]
        y = matmul_bias_tanh(a, params["wpad_out"], bias_cols,
                             tm, tn, tk)[:m, :4 * cout]
        return _phase_to_nhwc(y, n, h, w, cout)

    # ---------------- full forward ----------------

    def _forward_impl(self, params, x, labels):
        x = jnp.transpose(x, (0, 2, 3, 1))        # NCHW -> NHWC (once)
        if self.condi:
            if self.embed_type == "linear" and self.label_type == "one_hot":
                lab = jax.nn.one_hot(labels, self.num_classes, dtype=jnp.float32)
                emb = lab @ params["embed_w"] + params["embed_b"]
            elif self.embed_type == "torch":
                emb = params["embed_table"][labels]
            else:
                emb = labels @ params["embed_w"] + params["embed_b"]
            x = jnp.concatenate([x, emb[:, None, None, :]], axis=-1)
        x = x.astype(jnp.bfloat16)

        for li, meta in enumerate(self.layer_meta):
            x = self._bn_relu_layer(x, params, li, meta)
        x = self._tanh_layer(x, params, self.out_meta)
        return jnp.transpose(x, (0, 3, 1, 2))     # NHWC -> NCHW (once)

    def forward(self, x, labels=None):
        return self._forward_jit(self.params, x, labels)


# ---------------------- pure-JAX reference (f32) ----------------------------

def _ref_conv_transpose(x, w, stride, padding):
    """PyTorch ConvTranspose2d semantics: x NCHW, w [Cin, Cout, kh, kw]."""
    k = w.shape[2]
    wt = jnp.transpose(w, (1, 0, 2, 3))[:, :, ::-1, ::-1]     # OIHW, flipped
    pad = k - 1 - padding
    return jax.lax.conv_general_dilated(
        x, wt, window_strides=(1, 1), padding=[(pad, pad), (pad, pad)],
        lhs_dilation=(stride, stride),
        dimension_numbers=("NCHW", "OIHW", "NCHW"))


def reference_forward(gen, x, labels):
    params = gen.params
    if gen.condi:
        if gen.embed_type == "linear" and gen.label_type == "one_hot":
            lab = jax.nn.one_hot(labels, gen.num_classes, dtype=jnp.float32)
            emb = lab @ params["embed_w"] + params["embed_b"]
        elif gen.embed_type == "torch":
            emb = params["embed_table"][labels]
        else:
            emb = labels @ params["embed_w"] + params["embed_b"]
        x = jnp.concatenate([x, emb[:, :, None, None]], axis=1)
    for li, w in enumerate(gen.ref_weights):
        s, p = (1, 0) if li == 0 else (2, 1)
        y = _ref_conv_transpose(x, w, s, p)
        mean = y.mean(axis=(0, 2, 3), keepdims=True)
        var = y.var(axis=(0, 2, 3), keepdims=True)
        yn = (y - mean) * jax.lax.rsqrt(var + 1e-5)
        g = params[f"gamma{li}"][None, :, None, None]
        b = params[f"beta{li}"][None, :, None, None]
        x = jnp.maximum(yn * g + b, 0.0)
    y = _ref_conv_transpose(x, gen.ref_w_out, 2, 1)
    y = y + params["b_out"][None, :, None, None]
    return jnp.tanh(y)


if __name__ == "__main__":
    key = jax.random.PRNGKey(0)
    k_x, k_params = jax.random.split(key)

    batch = 2
    channels_noise = 8
    channels_img = 3
    features_g = 4
    img_size = 32
    embed_size = 8
    num_classes = 5

    gen = GeneratorPallas(channels_noise, channels_img, features_g, img_size,
                          condi=True, embed_size=embed_size, embed_type="torch",
                          label_type="1d", num_classes=num_classes, key=k_params)
    # Same weights, but every BN block forced through the tiled two-call
    # fallback (matmul+stats, affine+ReLU) that big layers would use.
    gen_fb = GeneratorPallas(channels_noise, channels_img, features_g, img_size,
                             condi=True, embed_size=embed_size,
                             embed_type="torch", label_type="1d",
                             num_classes=num_classes, key=k_params,
                             force_fallback=True)

    x = jax.random.normal(k_x, (batch, channels_noise, 1, 1), jnp.float32)
    labels = jnp.array([1, 3], dtype=jnp.int32)

    out = jax.block_until_ready(gen.forward(x, labels))
    out_fb = jax.block_until_ready(gen_fb.forward(x, labels))

    assert out.shape == (batch, channels_img, img_size, img_size), out.shape
    assert bool(jnp.all(jnp.isfinite(out)))
    assert bool(jnp.all(jnp.abs(out) <= 1.0 + 1e-6))   # tanh range

    ref = reference_forward(gen, x, labels)
    err_fused = float(jnp.max(jnp.abs(out - ref)))
    err_fb = float(jnp.max(jnp.abs(out_fb - ref)))
    assert err_fused < 0.1, f"fused path mismatch vs reference: {err_fused}"
    assert err_fb < 0.1, f"fallback path mismatch vs reference: {err_fb}"

    print("KERNEL_OK")
</pallas_src>

<mosaic_0001>
module attributes {stable_mosaic.version = 11 : i64} {
  func.func @_fused_block_kernel(%arg0: i32, %arg1: memref<8x128xbf16, #tpu.memory_space<vmem>>, %arg2: memref<128x512xbf16, #tpu.memory_space<vmem>>, %arg3: memref<512x512xf32, #tpu.memory_space<vmem>>, %arg4: memref<1x512xf32, #tpu.memory_space<vmem>>, %arg5: memref<1x512xf32, #tpu.memory_space<vmem>>, %arg6: memref<8x512xbf16, #tpu.memory_space<vmem>>, %arg7: memref<8x512xf32, #tpu.memory_space<vmem>>) attributes {dimension_semantics = [#tpu.dimension_semantics<arbitrary>], iteration_bounds = array<i64: 1>, scalar_prefetch = 0 : i64, scratch_operands = 1 : i64, tpu.core_type = #tpu.core_type<tc>, window_params = [{transform_indices = @transform_0, window_bounds = array<i64: 8, 128>}, {transform_indices = @transform_1, window_bounds = array<i64: 128, 512>}, {pipeline_mode = #tpu.pipeline_mode<synchronous>, transform_indices = @transform_2, window_bounds = array<i64: 512, 512>}, {pipeline_mode = #tpu.pipeline_mode<synchronous>, transform_indices = @transform_3, window_bounds = array<i64: 1, 512>}, {pipeline_mode = #tpu.pipeline_mode<synchronous>, transform_indices = @transform_4, window_bounds = array<i64: 1, 512>}, {pipeline_mode = #tpu.pipeline_mode<synchronous>, transform_indices = @transform_5, window_bounds = array<i64: 8, 512>}]} {
    %c0_i32 = arith.constant 0 : i32
    %0 = arith.cmpi eq, %arg0, %c0_i32 : i32
    %1 = arith.extui %0 : i1 to i32
    %c0_i32_0 = arith.constant 0 : i32
    %2 = arith.cmpi ne, %1, %c0_i32_0 : i32
    scf.if %2 {
      %cst_10 = arith.constant 0.000000e+00 : f32
      %12 = vector.broadcast %cst_10 : f32 to vector<8x512xf32>
      %c0_11 = arith.constant 0 : index
      %c0_12 = arith.constant 0 : index
      %13 = vector.load %arg7[%c0_11, %c0_12] : memref<8x512xf32, #tpu.memory_space<vmem>>, vector<8x512xf32>
      tpu.vector_store %arg7[%c0_11, %c0_12], %12 {strides = array<i32>} : memref<8x512xf32, #tpu.memory_space<vmem>>, vector<8x512xf32>,
    } else {
    }
    %c0 = arith.constant 0 : index
    %c0_1 = arith.constant 0 : index
    %3 = vector.load %arg7[%c0, %c0_1] : memref<8x512xf32, #tpu.memory_space<vmem>>, vector<8x512xf32>
    %c0_2 = arith.constant 0 : index
    %c0_3 = arith.constant 0 : index
    %4 = vector.load %arg1[%c0_2, %c0_3] : memref<8x128xbf16, #tpu.memory_space<vmem>>, vector<8x128xbf16>
    %c0_4 = arith.constant 0 : index
    %c0_5 = arith.constant 0 : index
    %5 = vector.load %arg2[%c0_4, %c0_5] : memref<128x512xbf16, #tpu.memory_space<vmem>>, vector<128x512xbf16>
    %cst = arith.constant dense<0.000000e+00> : vector<8x512xf32>
    %6 = tpu.matmul %4, %5, %cst {dimension_numbers = #tpu.dot_dimension_numbers<[1], [0], [0], [1], [0, 0, 1, 1], [], []>} : vector<8x128xbf16>, vector<128x512xbf16>, vector<8x512xf32> -> vector<8x512xf32>
    %7 = arith.addf %3, %6 : vector<8x512xf32>
    %c0_6 = arith.constant 0 : index
    %c0_7 = arith.constant 0 : index
    %8 = vector.load %arg7[%c0_6, %c0_7] : memref<8x512xf32, #tpu.memory_space<vmem>>, vector<8x512xf32>
    tpu.vector_store %arg7[%c0_6, %c0_7], %7 {strides = array<i32>} : memref<8x512xf32, #tpu.memory_space<vmem>>, vector<8x512xf32>,
    %c0_i32_8 = arith.constant 0 : i32
    %9 = arith.cmpi eq, %arg0, %c0_i32_8 : i32
    %10 = arith.extui %9 : i1 to i32
    %c0_i32_9 = arith.constant 0 : i32
    %11 = arith.cmpi ne, %10, %c0_i32_9 : i32
    scf.if %11 {
      %cst_10 = arith.constant 0.000000e+00 : f32
      %12 = vector.broadcast %cst_10 : f32 to vector<8x512xf32>
      %cst_11 = arith.constant 0.000000e+00 : f32
      %13 = vector.broadcast %cst_11 : f32 to vector<8x512xf32>
      %c0_12 = arith.constant 0 : index
      %c0_13 = arith.constant 0 : index
      %14 = vector.load %arg7[%c0_12, %c0_13] : memref<8x512xf32, #tpu.memory_space<vmem>>, vector<8x512xf32>
      %15 = arith.addf %12, %14 : vector<8x512xf32>
      %16 = arith.mulf %14, %14 : vector<8x512xf32>
      %17 = arith.addf %13, %16 : vector<8x512xf32>
      %c0_14 = arith.constant 0 : index
      %c0_15 = arith.constant 0 : index
      %18 = vector.load %arg3[%c0_14, %c0_15] : memref<512x512xf32, #tpu.memory_space<vmem>>, vector<512x512xf32>
      %cst_16 = arith.constant dense<0.000000e+00> : vector<8x512xf32>
      %19 = tpu.matmul %15, %18, %cst_16 {dimension_numbers = #tpu.dot_dimension_numbers<[1], [0], [0], [1], [0, 0, 1, 1], [], []>} : vector<8x512xf32>, vector<512x512xf32>, vector<8x512xf32> -> vector<8x512xf32>
      %cst_17 = arith.constant dense<0.000000e+00> : vector<512xf32>
      %20 = vector.multi_reduction <add>, %19, %cst_17 [0] : vector<8x512xf32> to vector<512xf32>
      %21 = vector.shape_cast %20 : vector<512xf32> to vector<1x512xf32>
      %cst_18 = arith.constant dense<0.000000e+00> : vector<8x512xf32>
      %22 = tpu.matmul %17, %18, %cst_18 {dimension_numbers = #tpu.dot_dimension_numbers<[1], [0], [0], [1], [0, 0, 1, 1], [], []>} : vector<8x512xf32>, vector<512x512xf32>, vector<8x512xf32> -> vector<8x512xf32>
      %cst_19 = arith.constant dense<0.000000e+00> : vector<512xf32>
      %23 = vector.multi_reduction <add>, %22, %cst_19 [0] : vector<8x512xf32> to vector<512xf32>
      %24 = vector.shape_cast %23 : vector<512xf32> to vector<1x512xf32>
      %cst_20 = arith.constant 3.125000e-02 : f32
      %25 = vector.broadcast %cst_20 : f32 to vector<1x512xf32>
      %26 = arith.mulf %21, %25 : vector<1x512xf32>
      %cst_21 = arith.constant 3.125000e-02 : f32
      %27 = vector.broadcast %cst_21 : f32 to vector<1x512xf32>
      %28 = arith.mulf %24, %27 : vector<1x512xf32>
      %29 = arith.mulf %26, %26 : vector<1x512xf32>
      %30 = arith.subf %28, %29 : vector<1x512xf32>
      %cst_22 = arith.constant 0.000000e+00 : f32
      %31 = vector.broadcast %cst_22 : f32 to vector<1x512xf32>
      %32 = arith.maximumf %30, %31 : vector<1x512xf32>
      %c0_23 = arith.constant 0 : index
      %c0_24 = arith.constant 0 : index
      %33 = vector.load %arg4[%c0_23, %c0_24] : memref<1x512xf32, #tpu.memory_space<vmem>>, vector<1x512xf32>
      %cst_25 = arith.constant 9.99999974E-6 : f32
      %34 = vector.broadcast %cst_25 : f32 to vector<1x512xf32>
      %35 = arith.addf %32, %34 : vector<1x512xf32>
      %36 = math.rsqrt %35 : vector<1x512xf32>
      %37 = arith.mulf %33, %36 : vector<1x512xf32>
      %c0_26 = arith.constant 0 : index
      %c0_27 = arith.constant 0 : index
      %38 = vector.load %arg5[%c0_26, %c0_27] : memref<1x512xf32, #tpu.memory_space<vmem>>, vector<1x512xf32>
      %39 = arith.mulf %26, %37 : vector<1x512xf32>
      %40 = arith.subf %38, %39 : vector<1x512xf32>
      %c0_28 = arith.constant 0 : index
      %c0_29 = arith.constant 0 : index
      %41 = vector.load %arg7[%c0_28, %c0_29] : memref<8x512xf32, #tpu.memory_space<vmem>>, vector<8x512xf32>
      %42 = vector.broadcast %37 : vector<1x512xf32> to vector<8x512xf32>
      %43 = arith.mulf %41, %42 : vector<8x512xf32>
      %44 = vector.broadcast %40 : vector<1x512xf32> to vector<8x512xf32>
      %45 = arith.addf %43, %44 : vector<8x512xf32>
      %cst_30 = arith.constant 0.000000e+00 : f32
      %46 = vector.broadcast %cst_30 : f32 to vector<8x512xf32>
      %47 = arith.maximumf %45, %46 : vector<8x512xf32>
      %48 = arith.truncf %47 : vector<8x512xf32> to vector<8x512xbf16>
      %c0_31 = arith.constant 0 : index
      %c0_32 = arith.constant 0 : index
      %49 = vector.load %arg6[%c0_31, %c0_32] : memref<8x512xbf16, #tpu.memory_space<vmem>>, vector<8x512xbf16>
      tpu.vector_store %arg6[%c0_31, %c0_32], %48 {strides = array<i32>} : memref<8x512xbf16, #tpu.memory_space<vmem>>, vector<8x512xbf16>,
    } else {
    }
    return
  }
  func.func @transform_0(%arg0: i32) -> (i32, i32) {
    %c0_i32 = arith.constant 0 : i32
    %c0_i32_0 = arith.constant 0 : i32
    return %c0_i32, %arg0 : i32, i32
  }
  func.func @transform_1(%arg0: i32) -> (i32, i32) {
    %c0_i32 = arith.constant 0 : i32
    %c0_i32_0 = arith.constant 0 : i32
    return %arg0, %c0_i32 : i32, i32
  }
  func.func @transform_2(%arg0: i32) -> (i32, i32) {
    %c0_i32 = arith.constant 0 : i32
    %c0_i32_0 = arith.constant 0 : i32
    %c0_i32_1 = arith.constant 0 : i32
    return %c0_i32, %c0_i32_0 : i32, i32
  }
  func.func @transform_3(%arg0: i32) -> (i32, i32) {
    %c0_i32 = arith.constant 0 : i32
    %c0_i32_0 = arith.constant 0 : i32
    %c0_i32_1 = arith.constant 0 : i32
    return %c0_i32, %c0_i32_0 : i32, i32
  }
  func.func @transform_4(%arg0: i32) -> (i32, i32) {
    %c0_i32 = arith.constant 0 : i32
    %c0_i32_0 = arith.constant 0 : i32
    %c0_i32_1 = arith.constant 0 : i32
    return %c0_i32, %c0_i32_0 : i32, i32
  }
  func.func @transform_5(%arg0: i32) -> (i32, i32) {
    %c0_i32 = arith.constant 0 : i32
    %c0_i32_0 = arith.constant 0 : i32
    %c0_i32_1 = arith.constant 0 : i32
    return %c0_i32, %c0_i32_0 : i32, i32
  }
}

module attributes {stable_mosaic.version = 11 : i64} {
  func.func @_fused_block_kernel(%arg0: i32, %arg1: memref<32x384xbf16, #tpu.memory_space<vmem>>, %arg2: memref<384x128xbf16, #tpu.memory_space<vmem>>, %arg3: memref<128x128xf32, #tpu.memory_space<vmem>>, %arg4: memref<1x128xf32, #tpu.memory_space<vmem>>, %arg5: memref<1x128xf32, #tpu.memory_space<vmem>>, %arg6: memref<32x128xbf16, #tpu.memory_space<vmem>>, %arg7: memref<32x128xf32, #tpu.memory_space<vmem>>) attributes {dimension_semantics = [#tpu.dimension_semantics<arbitrary>], iteration_bounds = array<i64: 1>, scalar_prefetch = 0 : i64, scratch_operands = 1 : i64, tpu.core_type = #tpu.core_type<tc>, window_params = [{transform_indices = @transform_0, window_bounds = array<i64: 32, 384>}, {transform_indices = @transform_1, window_bounds = array<i64: 384, 128>}, {pipeline_mode = #tpu.pipeline_mode<synchronous>, transform_indices = @transform_2, window_bounds = array<i64: 128, 128>}, {pipeline_mode = #tpu.pipeline_mode<synchronous>, transform_indices = @transform_3, window_bounds = array<i64: 1, 128>}, {pipeline_mode = #tpu.pipeline_mode<synchronous>, transform_indices = @transform_4, window_bounds = array<i64: 1, 128>}, {pipeline_mode = #tpu.pipeline_mode<synchronous>, transform_indices = @transform_5, window_bounds = array<i64: 32, 128>}]} {
    %c0_i32 = arith.constant 0 : i32
    %0 = arith.cmpi eq, %arg0, %c0_i32 : i32
    %1 = arith.extui %0 : i1 to i32
    %c0_i32_0 = arith.constant 0 : i32
    %2 = arith.cmpi ne, %1, %c0_i32_0 : i32
    scf.if %2 {
      %cst_10 = arith.constant 0.000000e+00 : f32
      %12 = vector.broadcast %cst_10 : f32 to vector<32x128xf32>
      %c0_11 = arith.constant 0 : index
      %c0_12 = arith.constant 0 : index
      %13 = vector.load %arg7[%c0_11, %c0_12] : memref<32x128xf32, #tpu.memory_space<vmem>>, vector<32x128xf32>
      tpu.vector_store %arg7[%c0_11, %c0_12], %12 {strides = array<i32>} : memref<32x128xf32, #tpu.memory_space<vmem>>, vector<32x128xf32>,
    } else {
    }
    %c0 = arith.constant 0 : index
    %c0_1 = arith.constant 0 : index
    %3 = vector.load %arg7[%c0, %c0_1] : memref<32x128xf32, #tpu.memory_space<vmem>>, vector<32x128xf32>
    %c0_2 = arith.constant 0 : index
    %c0_3 = arith.constant 0 : index
    %4 = vector.load %arg1[%c0_2, %c0_3] : memref<32x384xbf16, #tpu.memory_space<vmem>>, vector<32x384xbf16>
    %c0_4 = arith.constant 0 : index
    %c0_5 = arith.constant 0 : index
    %5 = vector.load %arg2[%c0_4, %c0_5] : memref<384x128xbf16, #tpu.memory_space<vmem>>, vector<384x128xbf16>
    %cst = arith.constant dense<0.000000e+00> : vector<32x128xf32>
    %6 = tpu.matmul %4, %5, %cst {dimension_numbers = #tpu.dot_dimension_numbers<[1], [0], [0], [1], [0, 0, 1, 1], [], []>} : vector<32x384xbf16>, vector<384x128xbf16>, vector<32x128xf32> -> vector<32x128xf32>
    %7 = arith.addf %3, %6 : vector<32x128xf32>
    %c0_6 = arith.constant 0 : index
    %c0_7 = arith.constant 0 : index
    %8 = vector.load %arg7[%c0_6, %c0_7] : memref<32x128xf32, #tpu.memory_space<vmem>>, vector<32x128xf32>
    tpu.vector_store %arg7[%c0_6, %c0_7], %7 {strides = array<i32>} : memref<32x128xf32, #tpu.memory_space<vmem>>, vector<32x128xf32>,
    %c0_i32_8 = arith.constant 0 : i32
    %9 = arith.cmpi eq, %arg0, %c0_i32_8 : i32
    %10 = arith.extui %9 : i1 to i32
    %c0_i32_9 = arith.constant 0 : i32
    %11 = arith.cmpi ne, %10, %c0_i32_9 : i32
    scf.if %11 {
      %cst_10 = arith.constant 0.000000e+00 : f32
      %12 = vector.broadcast %cst_10 : f32 to vector<8x128xf32>
      %cst_11 = arith.constant 0.000000e+00 : f32
      %13 = vector.broadcast %cst_11 : f32 to vector<8x128xf32>
      %c0_12 = arith.constant 0 : index
      %c0_13 = arith.constant 0 : index
      %14 = vector.load %arg7[%c0_12, %c0_13] : memref<32x128xf32, #tpu.memory_space<vmem>>, vector<8x128xf32>
      %15 = arith.addf %12, %14 : vector<8x128xf32>
      %16 = arith.mulf %14, %14 : vector<8x128xf32>
      %17 = arith.addf %13, %16 : vector<8x128xf32>
      %c8 = arith.constant 8 : index
      %c0_14 = arith.constant 0 : index
      %18 = vector.load %arg7[%c8, %c0_14] : memref<32x128xf32, #tpu.memory_space<vmem>>, vector<8x128xf32>
      %19 = arith.addf %15, %18 : vector<8x128xf32>
      %20 = arith.mulf %18, %18 : vector<8x128xf32>
      %21 = arith.addf %17, %20 : vector<8x128xf32>
      %c16 = arith.constant 16 : index
      %c0_15 = arith.constant 0 : index
      %22 = vector.load %arg7[%c16, %c0_15] : memref<32x128xf32, #tpu.memory_space<vmem>>, vector<8x128xf32>
      %23 = arith.addf %19, %22 : vector<8x128xf32>
      %24 = arith.mulf %22, %22 : vector<8x128xf32>
      %25 = arith.addf %21, %24 : vector<8x128xf32>
      %c24 = arith.constant 24 : index
      %c0_16 = arith.constant 0 : index
      %26 = vector.load %arg7[%c24, %c0_16] : memref<32x128xf32, #tpu.memory_space<vmem>>, vector<8x128xf32>
      %27 = arith.addf %23, %26 : vector<8x128xf32>
      %28 = arith.mulf %26, %26 : vector<8x128xf32>
      %29 = arith.addf %25, %28 : vector<8x128xf32>
      %c0_17 = arith.constant 0 : index
      %c0_18 = arith.constant 0 : index
      %30 = vector.load %arg3[%c0_17, %c0_18] : memref<128x128xf32, #tpu.memory_space<vmem>>, vector<128x128xf32>
      %cst_19 = arith.constant dense<0.000000e+00> : vector<8x128xf32>
      %31 = tpu.matmul %27, %30, %cst_19 {dimension_numbers = #tpu.dot_dimension_numbers<[1], [0], [0], [1], [0, 0, 1, 1], [], []>} : vector<8x128xf32>, vector<128x128xf32>, vector<8x128xf32> -> vector<8x128xf32>
      %cst_20 = arith.constant dense<0.000000e+00> : vector<128xf32>
      %32 = vector.multi_reduction <add>, %31, %cst_20 [0] : vector<8x128xf32> to vector<128xf32>
      %33 = vector.shape_cast %32 : vector<128xf32> to vector<1x128xf32>
      %cst_21 = arith.constant dense<0.000000e+00> : vector<8x128xf32>
      %34 = tpu.matmul %29, %30, %cst_21 {dimension_numbers = #tpu.dot_dimension_numbers<[1], [0], [0], [1], [0, 0, 1, 1], [], []>} : vector<8x128xf32>, vector<128x128xf32>, vector<8x128xf32> -> vector<8x128xf32>
      %cst_22 = arith.constant dense<0.000000e+00> : vector<128xf32>
      %35 = vector.multi_reduction <add>, %34, %cst_22 [0] : vector<8x128xf32> to vector<128xf32>
      %36 = vector.shape_cast %35 : vector<128xf32> to vector<1x128xf32>
      %cst_23 = arith.constant 7.812500e-03 : f32
      %37 = vector.broadcast %cst_23 : f32 to vector<1x128xf32>
      %38 = arith.mulf %33, %37 : vector<1x128xf32>
      %cst_24 = arith.constant 7.812500e-03 : f32
      %39 = vector.broadcast %cst_24 : f32 to vector<1x128xf32>
      %40 = arith.mulf %36, %39 : vector<1x128xf32>
      %41 = arith.mulf %38, %38 : vector<1x128xf32>
      %42 = arith.subf %40, %41 : vector<1x128xf32>
      %cst_25 = arith.constant 0.000000e+00 : f32
      %43 = vector.broadcast %cst_25 : f32 to vector<1x128xf32>
      %44 = arith.maximumf %42, %43 : vector<1x128xf32>
      %c0_26 = arith.constant 0 : index
      %c0_27 = arith.constant 0 : index
      %45 = vector.load %arg4[%c0_26, %c0_27] : memref<1x128xf32, #tpu.memory_space<vmem>>, vector<1x128xf32>
      %cst_28 = arith.constant 9.99999974E-6 : f32
      %46 = vector.broadcast %cst_28 : f32 to vector<1x128xf32>
      %47 = arith.addf %44, %46 : vector<1x128xf32>
      %48 = math.rsqrt %47 : vector<1x128xf32>
      %49 = arith.mulf %45, %48 : vector<1x128xf32>
      %c0_29 = arith.constant 0 : index
      %c0_30 = arith.constant 0 : index
      %50 = vector.load %arg5[%c0_29, %c0_30] : memref<1x128xf32, #tpu.memory_space<vmem>>, vector<1x128xf32>
      %51 = arith.mulf %38, %49 : vector<1x128xf32>
      %52 = arith.subf %50, %51 : vector<1x128xf32>
      %c0_31 = arith.constant 0 : index
      %c0_32 = arith.constant 0 : index
      %53 = vector.load %arg7[%c0_31, %c0_32] : memref<32x128xf32, #tpu.memory_space<vmem>>, vector<8x128xf32>
      %54 = vector.broadcast %49 : vector<1x128xf32> to vector<8x128xf32>
      %55 = arith.mulf %53, %54 : vector<8x128xf32>
      %56 = vector.broadcast %52 : vector<1x128xf32> to vector<8x128xf32>
      %57 = arith.addf %55, %56 : vector<8x128xf32>
      %cst_33 = arith.constant 0.000000e+00 : f32
      %58 = vector.broadcast %cst_33 : f32 to vector<8x128xf32>
      %59 = arith.maximumf %57, %58 : vector<8x128xf32>
      %60 = arith.truncf %59 : vector<8x128xf32> to vector<8x128xbf16>
      %c0_34 = arith.constant 0 : index
      %c0_35 = arith.constant 0 : index
      %61 = vector.load %arg6[%c0_34, %c0_35] : memref<32x128xbf16, #tpu.memory_space<vmem>>, vector<8x128xbf16>
      tpu.vector_store %arg6[%c0_34, %c0_35], %60 {strides = array<i32>} : memref<32x128xbf16, #tpu.memory_space<vmem>>, vector<8x128xbf16>,
      %c8_36 = arith.constant 8 : index
      %c0_37 = arith.constant 0 : index
      %62 = vector.load %arg7[%c8_36, %c0_37] : memref<32x128xf32, #tpu.memory_space<vmem>>, vector<8x128xf32>
      %63 = vector.broadcast %49 : vector<1x128xf32> to vector<8x128xf32>
      %64 = arith.mulf %62, %63 : vector<8x128xf32>
      %65 = vector.broadcast %52 : vector<1x128xf32> to vector<8x128xf32>
      %66 = arith.addf %64, %65 : vector<8x128xf32>
      %cst_38 = arith.constant 0.000000e+00 : f32
      %67 = vector.broadcast %cst_38 : f32 to vector<8x128xf32>
      %68 = arith.maximumf %66, %67 : vector<8x128xf32>
      %69 = arith.truncf %68 : vector<8x128xf32> to vector<8x128xbf16>
      %c8_39 = arith.constant 8 : index
      %c0_40 = arith.constant 0 : index
      %70 = vector.load %arg6[%c8_39, %c0_40] : memref<32x128xbf16, #tpu.memory_space<vmem>>, vector<8x128xbf16>
      tpu.vector_store %arg6[%c8_39, %c0_40], %69 {strides = array<i32>} : memref<32x128xbf16, #tpu.memory_space<vmem>>, vector<8x128xbf16>,
      %c16_41 = arith.constant 16 : index
      %c0_42 = arith.constant 0 : index
      %71 = vector.load %arg7[%c16_41, %c0_42] : memref<32x128xf32, #tpu.memory_space<vmem>>, vector<8x128xf32>
      %72 = vector.broadcast %49 : vector<1x128xf32> to vector<8x128xf32>
      %73 = arith.mulf %71, %72 : vector<8x128xf32>
      %74 = vector.broadcast %52 : vector<1x128xf32> to vector<8x128xf32>
      %75 = arith.addf %73, %74 : vector<8x128xf32>
      %cst_43 = arith.constant 0.000000e+00 : f32
      %76 = vector.broadcast %cst_43 : f32 to vector<8x128xf32>
      %77 = arith.maximumf %75, %76 : vector<8x128xf32>
      %78 = arith.truncf %77 : vector<8x128xf32> to vector<8x128xbf16>
      %c16_44 = arith.constant 16 : index
      %c0_45 = arith.constant 0 : index
      %79 = vector.load %arg6[%c16_44, %c0_45] : memref<32x128xbf16, #tpu.memory_space<vmem>>, vector<8x128xbf16>
      tpu.vector_store %arg6[%c16_44, %c0_45], %78 {strides = array<i32>} : memref<32x128xbf16, #tpu.memory_space<vmem>>, vector<8x128xbf16>,
      %c24_46 = arith.constant 24 : index
      %c0_47 = arith.constant 0 : index
      %80 = vector.load %arg7[%c24_46, %c0_47] : memref<32x128xf32, #tpu.memory_space<vmem>>, vector<8x128xf32>
      %81 = vector.broadcast %49 : vector<1x128xf32> to vector<8x128xf32>
      %82 = arith.mulf %80, %81 : vector<8x128xf32>
      %83 = vector.broadcast %52 : vector<1x128xf32> to vector<8x128xf32>
      %84 = arith.addf %82, %83 : vector<8x128xf32>
      %cst_48 = arith.constant 0.000000e+00 : f32
      %85 = vector.broadcast %cst_48 : f32 to vector<8x128xf32>
      %86 = arith.maximumf %84, %85 : vector<8x128xf32>
      %87 = arith.truncf %86 : vector<8x128xf32> to vector<8x128xbf16>
      %c24_49 = arith.constant 24 : index
      %c0_50 = arith.constant 0 : index
      %88 = vector.load %arg6[%c24_49, %c0_50] : memref<32x128xbf16, #tpu.memory_space<vmem>>, vector<8x128xbf16>
      tpu.vector_store %arg6[%c24_49, %c0_50], %87 {strides = array<i32>} : memref<32x128xbf16, #tpu.memory_space<vmem>>, vector<8x128xbf16>,
    } else {
    }
    return
  }
  func.func @transform_0(%arg0: i32) -> (i32, i32) {
    %c0_i32 = arith.constant 0 : i32
    %c0_i32_0 = arith.constant 0 : i32
    return %c0_i32, %arg0 : i32, i32
  }
  func.func @transform_1(%arg0: i32) -> (i32, i32) {
    %c0_i32 = arith.constant 0 : i32
    %c0_i32_0 = arith.constant 0 : i32
    return %arg0, %c0_i32 : i32, i32
  }
  func.func @transform_2(%arg0: i32) -> (i32, i32) {
    %c0_i32 = arith.constant 0 : i32
    %c0_i32_0 = arith.constant 0 : i32
    %c0_i32_1 = arith.constant 0 : i32
    return %c0_i32, %c0_i32_0 : i32, i32
  }
  func.func @transform_3(%arg0: i32) -> (i32, i32) {
    %c0_i32 = arith.constant 0 : i32
    %c0_i32_0 = arith.constant 0 : i32
    %c0_i32_1 = arith.constant 0 : i32
    return %c0_i32, %c0_i32_0 : i32, i32
  }
  func.func @transform_4(%arg0: i32) -> (i32, i32) {
    %c0_i32 = arith.constant 0 : i32
    %c0_i32_0 = arith.constant 0 : i32
    %c0_i32_1 = arith.constant 0 : i32
    return %c0_i32, %c0_i32_0 : i32, i32
  }
  func.func @transform_5(%arg0: i32) -> (i32, i32) {
    %c0_i32 = arith.constant 0 : i32
    %c0_i32_0 = arith.constant 0 : i32
    %c0_i32_1 = arith.constant 0 : i32
    return %c0_i32, %c0_i32_0 : i32, i32
  }
}

module attributes {stable_mosaic.version = 11 : i64} {
  func.func @_fused_block_kernel(%arg0: i32, %arg1: memref<128x256xbf16, #tpu.memory_space<vmem>>, %arg2: memref<256x128xbf16, #tpu.memory_space<vmem>>, %arg3: memref<128x128xf32, #tpu.memory_space<vmem>>, %arg4: memref<1x128xf32, #tpu.memory_space<vmem>>, %arg5: memref<1x128xf32, #tpu.memory_space<vmem>>, %arg6: memref<128x128xbf16, #tpu.memory_space<vmem>>, %arg7: memref<128x128xf32, #tpu.memory_space<vmem>>) attributes {dimension_semantics = [#tpu.dimension_semantics<arbitrary>], iteration_bounds = array<i64: 1>, scalar_prefetch = 0 : i64, scratch_operands = 1 : i64, tpu.core_type = #tpu.core_type<tc>, window_params = [{transform_indices = @transform_0, window_bounds = array<i64: 128, 256>}, {transform_indices = @transform_1, window_bounds = array<i64: 256, 128>}, {pipeline_mode = #tpu.pipeline_mode<synchronous>, transform_indices = @transform_2, window_bounds = array<i64: 128, 128>}, {pipeline_mode = #tpu.pipeline_mode<synchronous>, transform_indices = @transform_3, window_bounds = array<i64: 1, 128>}, {pipeline_mode = #tpu.pipeline_mode<synchronous>, transform_indices = @transform_4, window_bounds = array<i64: 1, 128>}, {pipeline_mode = #tpu.pipeline_mode<synchronous>, transform_indices = @transform_5, window_bounds = array<i64: 128, 128>}]} {
    %c0_i32 = arith.constant 0 : i32
    %0 = arith.cmpi eq, %arg0, %c0_i32 : i32
    %1 = arith.extui %0 : i1 to i32
    %c0_i32_0 = arith.constant 0 : i32
    %2 = arith.cmpi ne, %1, %c0_i32_0 : i32
    scf.if %2 {
      %cst_10 = arith.constant 0.000000e+00 : f32
      %12 = vector.broadcast %cst_10 : f32 to vector<128x128xf32>
      %c0_11 = arith.constant 0 : index
      %c0_12 = arith.constant 0 : index
      %13 = vector.load %arg7[%c0_11, %c0_12] : memref<128x128xf32, #tpu.memory_space<vmem>>, vector<128x128xf32>
      tpu.vector_store %arg7[%c0_11, %c0_12], %12 {strides = array<i32>} : memref<128x128xf32, #tpu.memory_space<vmem>>, vector<128x128xf32>,
    } else {
    }
    %c0 = arith.constant 0 : index
    %c0_1 = arith.constant 0 : index
    %3 = vector.load %arg7[%c0, %c0_1] : memref<128x128xf32, #tpu.memory_space<vmem>>, vector<128x128xf32>
    %c0_2 = arith.constant 0 : index
    %c0_3 = arith.constant 0 : index
    %4 = vector.load %arg1[%c0_2, %c0_3] : memref<128x256xbf16, #tpu.memory_space<vmem>>, vector<128x256xbf16>
    %c0_4 = arith.constant 0 : index
    %c0_5 = arith.constant 0 : index
    %5 = vector.load %arg2[%c0_4, %c0_5] : memref<256x128xbf16, #tpu.memory_space<vmem>>, vector<256x128xbf16>
    %cst = arith.constant dense<0.000000e+00> : vector<128x128xf32>
    %6 = tpu.matmul %4, %5, %cst {dimension_numbers = #tpu.dot_dimension_numbers<[1], [0], [0], [1], [0, 0, 1, 1], [], []>} : vector<128x256xbf16>, vector<256x128xbf16>, vector<128x128xf32> -> vector<128x128xf32>
    %7 = arith.addf %3, %6 : vector<128x128xf32>
    %c0_6 = arith.constant 0 : index
    %c0_7 = arith.constant 0 : index
    %8 = vector.load %arg7[%c0_6, %c0_7] : memref<128x128xf32, #tpu.memory_space<vmem>>, vector<128x128xf32>
    tpu.vector_store %arg7[%c0_6, %c0_7], %7 {strides = array<i32>} : memref<128x128xf32, #tpu.memory_space<vmem>>, vector<128x128xf32>,
    %c0_i32_8 = arith.constant 0 : i32
    %9 = arith.cmpi eq, %arg0, %c0_i32_8 : i32
    %10 = arith.extui %9 : i1 to i32
    %c0_i32_9 = arith.constant 0 : i32
    %11 = arith.cmpi ne, %10, %c0_i32_9 : i32
    scf.if %11 {
      %cst_10 = arith.constant 0.000000e+00 : f32
      %12 = vector.broadcast %cst_10 : f32 to vector<8x128xf32>
      %cst_11 = arith.constant 0.000000e+00 : f32
      %13 = vector.broadcast %cst_11 : f32 to vector<8x128xf32>
      %c0_12 = arith.constant 0 : index
      %c0_13 = arith.constant 0 : index
      %14 = vector.load %arg7[%c0_12, %c0_13] : memref<128x128xf32, #tpu.memory_space<vmem>>, vector<8x128xf32>
      %15 = arith.addf %12, %14 : vector<8x128xf32>
      %16 = arith.mulf %14, %14 : vector<8x128xf32>
      %17 = arith.addf %13, %16 : vector<8x128xf32>
      %c8 = arith.constant 8 : index
      %c0_14 = arith.constant 0 : index
      %18 = vector.load %arg7[%c8, %c0_14] : memref<128x128xf32, #tpu.memory_space<vmem>>, vector<8x128xf32>
      %19 = arith.addf %15, %18 : vector<8x128xf32>
      %20 = arith.mulf %18, %18 : vector<8x128xf32>
      %21 = arith.addf %17, %20 : vector<8x128xf32>
      %c16 = arith.constant 16 : index
      %c0_15 = arith.constant 0 : index
      %22 = vector.load %arg7[%c16, %c0_15] : memref<128x128xf32, #tpu.memory_space<vmem>>, vector<8x128xf32>
      %23 = arith.addf %19, %22 : vector<8x128xf32>
      %24 = arith.mulf %22, %22 : vector<8x128xf32>
      %25 = arith.addf %21, %24 : vector<8x128xf32>
      %c24 = arith.constant 24 : index
      %c0_16 = arith.constant 0 : index
      %26 = vector.load %arg7[%c24, %c0_16] : memref<128x128xf32, #tpu.memory_space<vmem>>, vector<8x128xf32>
      %27 = arith.addf %23, %26 : vector<8x128xf32>
      %28 = arith.mulf %26, %26 : vector<8x128xf32>
      %29 = arith.addf %25, %28 : vector<8x128xf32>
      %c32 = arith.constant 32 : index
      %c0_17 = arith.constant 0 : index
      %30 = vector.load %arg7[%c32, %c0_17] : memref<128x128xf32, #tpu.memory_space<vmem>>, vector<8x128xf32>
      %31 = arith.addf %27, %30 : vector<8x128xf32>
      %32 = arith.mulf %30, %30 : vector<8x128xf32>
      %33 = arith.addf %29, %32 : vector<8x128xf32>
      %c40 = arith.constant 40 : index
      %c0_18 = arith.constant 0 : index
      %34 = vector.load %arg7[%c40, %c0_18] : memref<128x128xf32, #tpu.memory_space<vmem>>, vector<8x128xf32>
      %35 = arith.addf %31, %34 : vector<8x128xf32>
      %36 = arith.mulf %34, %34 : vector<8x128xf32>
      %37 = arith.addf %33, %36 : vector<8x128xf32>
      %c48 = arith.constant 48 : index
      %c0_19 = arith.constant 0 : index
      %38 = vector.load %arg7[%c48, %c0_19] : memref<128x128xf32, #tpu.memory_space<vmem>>, vector<8x128xf32>
      %39 = arith.addf %35, %38 : vector<8x128xf32>
      %40 = arith.mulf %38, %38 : vector<8x128xf32>
      %41 = arith.addf %37, %40 : vector<8x128xf32>
      %c56 = arith.constant 56 : index
      %c0_20 = arith.constant 0 : index
      %42 = vector.load %arg7[%c56, %c0_20] : memref<128x128xf32, #tpu.memory_space<vmem>>, vector<8x128xf32>
      %43 = arith.addf %39, %42 : vector<8x128xf32>
      %44 = arith.mulf %42, %42 : vector<8x128xf32>
      %45 = arith.addf %41, %44 : vector<8x128xf32>
      %c64 = arith.constant 64 : index
      %c0_21 = arith.constant 0 : index
      %46 = vector.load %arg7[%c64, %c0_21] : memref<128x128xf32, #tpu.memory_space<vmem>>, vector<8x128xf32>
      %47 = arith.addf %43, %46 : vector<8x128xf32>
      %48 = arith.mulf %46, %46 : vector<8x128xf32>
      %49 = arith.addf %45, %48 : vector<8x128xf32>
      %c72 = arith.constant 72 : index
      %c0_22 = arith.constant 0 : index
      %50 = vector.load %arg7[%c72, %c0_22] : memref<128x128xf32, #tpu.memory_space<vmem>>, vector<8x128xf32>
      %51 = arith.addf %47, %50 : vector<8x128xf32>
      %52 = arith.mulf %50, %50 : vector<8x128xf32>
      %53 = arith.addf %49, %52 : vector<8x128xf32>
      %c80 = arith.constant 80 : index
      %c0_23 = arith.constant 0 : index
      %54 = vector.load %arg7[%c80, %c0_23] : memref<128x128xf32, #tpu.memory_space<vmem>>, vector<8x128xf32>
      %55 = arith.addf %51, %54 : vector<8x128xf32>
      %56 = arith.mulf %54, %54 : vector<8x128xf32>
      %57 = arith.addf %53, %56 : vector<8x128xf32>
      %c88 = arith.constant 88 : index
      %c0_24 = arith.constant 0 : index
      %58 = vector.load %arg7[%c88, %c0_24] : memref<128x128xf32, #tpu.memory_space<vmem>>, vector<8x128xf32>
      %59 = arith.addf %55, %58 : vector<8x128xf32>
      %60 = arith.mulf %58, %58 : vector<8x128xf32>
      %61 = arith.addf %57, %60 : vector<8x128xf32>
      %c96 = arith.constant 96 : index
      %c0_25 = arith.constant 0 : index
      %62 = vector.load %arg7[%c96, %c0_25] : memref<128x128xf32, #tpu.memory_space<vmem>>, vector<8x128xf32>
      %63 = arith.addf %59, %62 : vector<8x128xf32>
      %64 = arith.mulf %62, %62 : vector<8x128xf32>
      %65 = arith.addf %61, %64 : vector<8x128xf32>
      %c104 = arith.constant 104 : index
      %c0_26 = arith.constant 0 : index
      %66 = vector.load %arg7[%c104, %c0_26] : memref<128x128xf32, #tpu.memory_space<vmem>>, vector<8x128xf32>
      %67 = arith.addf %63, %66 : vector<8x128xf32>
      %68 = arith.mulf %66, %66 : vector<8x128xf32>
      %69 = arith.addf %65, %68 : vector<8x128xf32>
      %c112 = arith.constant 112 : index
      %c0_27 = arith.constant 0 : index
      %70 = vector.load %arg7[%c112, %c0_27] : memref<128x128xf32, #tpu.memory_space<vmem>>, vector<8x128xf32>
      %71 = arith.addf %67, %70 : vector<8x128xf32>
      %72 = arith.mulf %70, %70 : vector<8x128xf32>
      %73 = arith.addf %69, %72 : vector<8x128xf32>
      %c120 = arith.constant 120 : index
      %c0_28 = arith.constant 0 : index
      %74 = vector.load %arg7[%c120, %c0_28] : memref<128x128xf32, #tpu.memory_space<vmem>>, vector<8x128xf32>
      %75 = arith.addf %71, %74 : vector<8x128xf32>
      %76 = arith.mulf %74, %74 : vector<8x128xf32>
      %77 = arith.addf %73, %76 : vector<8x128xf32>
      %c0_29 = arith.constant 0 : index
      %c0_30 = arith.constant 0 : index
      %78 = vector.load %arg3[%c0_29, %c0_30] : memref<128x128xf32, #tpu.memory_space<vmem>>, vector<128x128xf32>
      %cst_31 = arith.constant dense<0.000000e+00> : vector<8x128xf32>
      %79 = tpu.matmul %75, %78, %cst_31 {dimension_numbers = #tpu.dot_dimension_numbers<[1], [0], [0], [1], [0, 0, 1, 1], [], []>} : vector<8x128xf32>, vector<128x128xf32>, vector<8x128xf32> -> vector<8x128xf32>
      %cst_32 = arith.constant dense<0.000000e+00> : vector<128xf32>
      %80 = vector.multi_reduction <add>, %79, %cst_32 [0] : vector<8x128xf32> to vector<128xf32>
      %81 = vector.shape_cast %80 : vector<128xf32> to vector<1x128xf32>
      %cst_33 = arith.constant dense<0.000000e+00> : vector<8x128xf32>
      %82 = tpu.matmul %77, %78, %cst_33 {dimension_numbers = #tpu.dot_dimension_numbers<[1], [0], [0], [1], [0, 0, 1, 1], [], []>} : vector<8x128xf32>, vector<128x128xf32>, vector<8x128xf32> -> vector<8x128xf32>
      %cst_34 = arith.constant dense<0.000000e+00> : vector<128xf32>
      %83 = vector.multi_reduction <add>, %82, %cst_34 [0] : vector<8x128xf32> to vector<128xf32>
      %84 = vector.shape_cast %83 : vector<128xf32> to vector<1x128xf32>
      %cst_35 = arith.constant 0.001953125 : f32
      %85 = vector.broadcast %cst_35 : f32 to vector<1x128xf32>
      %86 = arith.mulf %81, %85 : vector<1x128xf32>
      %cst_36 = arith.constant 0.001953125 : f32
      %87 = vector.broadcast %cst_36 : f32 to vector<1x128xf32>
      %88 = arith.mulf %84, %87 : vector<1x128xf32>
      %89 = arith.mulf %86, %86 : vector<1x128xf32>
      %90 = arith.subf %88, %89 : vector<1x128xf32>
      %cst_37 = arith.constant 0.000000e+00 : f32
      %91 = vector.broadcast %cst_37 : f32 to vector<1x128xf32>
      %92 = arith.maximumf %90, %91 : vector<1x128xf32>
      %c0_38 = arith.constant 0 : index
      %c0_39 = arith.constant 0 : index
      %93 = vector.load %arg4[%c0_38, %c0_39] : memref<1x128xf32, #tpu.memory_space<vmem>>, vector<1x128xf32>
      %cst_40 = arith.constant 9.99999974E-6 : f32
      %94 = vector.broadcast %cst_40 : f32 to vector<1x128xf32>
      %95 = arith.addf %92, %94 : vector<1x128xf32>
      %96 = math.rsqrt %95 : vector<1x128xf32>
      %97 = arith.mulf %93, %96 : vector<1x128xf32>
      %c0_41 = arith.constant 0 : index
      %c0_42 = arith.constant 0 : index
      %98 = vector.load %arg5[%c0_41, %c0_42] : memref<1x128xf32, #tpu.memory_space<vmem>>, vector<1x128xf32>
      %99 = arith.mulf %86, %97 : vector<1x128xf32>
      %100 = arith.subf %98, %99 : vector<1x128xf32>
      %c0_43 = arith.constant 0 : index
      %c0_44 = arith.constant 0 : index
      %101 = vector.load %arg7[%c0_43, %c0_44] : memref<128x128xf32, #tpu.memory_space<vmem>>, vector<8x128xf32>
      %102 = vector.broadcast %97 : vector<1x128xf32> to vector<8x128xf32>
      %103 = arith.mulf %101, %102 : vector<8x128xf32>
      %104 = vector.broadcast %100 : vector<1x128xf32> to vector<8x128xf32>
      %105 = arith.addf %103, %104 : vector<8x128xf32>
      %cst_45 = arith.constant 0.000000e+00 : f32
      %106 = vector.broadcast %cst_45 : f32 to vector<8x128xf32>
      %107 = arith.maximumf %105, %106 : vector<8x128xf32>
      %108 = arith.truncf %107 : vector<8x128xf32> to vector<8x128xbf16>
      %c0_46 = arith.constant 0 : index
      %c0_47 = arith.constant 0 : index
      %109 = vector.load %arg6[%c0_46, %c0_47] : memref<128x128xbf16, #tpu.memory_space<vmem>>, vector<8x128xbf16>
      tpu.vector_store %arg6[%c0_46, %c0_47], %108 {strides = array<i32>} : memref<128x128xbf16, #tpu.memory_space<vmem>>, vector<8x128xbf16>,
      %c8_48 = arith.constant 8 : index
      %c0_49 = arith.constant 0 : index
      %110 = vector.load %arg7[%c8_48, %c0_49] : memref<128x128xf32, #tpu.memory_space<vmem>>, vector<8x128xf32>
      %111 = vector.broadcast %97 : vector<1x128xf32> to vector<8x128xf32>
      %112 = arith.mulf %110, %111 : vector<8x128xf32>
      %113 = vector.broadcast %100 : vector<1x128xf32> to vector<8x128xf32>
      %114 = arith.addf %112, %113 : vector<8x128xf32>
      %cst_50 = arith.constant 0.000000e+00 : f32
      %115 = vector.broadcast %cst_50 : f32 to vector<8x128xf32>
      %116 = arith.maximumf %114, %115 : vector<8x128xf32>
      %117 = arith.truncf %116 : vector<8x128xf32> to vector<8x128xbf16>
      %c8_51 = arith.constant 8 : index
      %c0_52 = arith.constant 0 : index
      %118 = vector.load %arg6[%c8_51, %c0_52] : memref<128x128xbf16, #tpu.memory_space<vmem>>, vector<8x128xbf16>
      tpu.vector_store %arg6[%c8_51, %c0_52], %117 {strides = array<i32>} : memref<128x128xbf16, #tpu.memory_space<vmem>>, vector<8x128xbf16>,
      %c16_53 = arith.constant 16 : index
      %c0_54 = arith.constant 0 : index
      %119 = vector.load %arg7[%c16_53, %c0_54] : memref<128x128xf32, #tpu.memory_space<vmem>>, vector<8x128xf32>
      %120 = vector.broadcast %97 : vector<1x128xf32> to vector<8x128xf32>
      %121 = arith.mulf %119, %120 : vector<8x128xf32>
      %122 = vector.broadcast %100 : vector<1x128xf32> to vector<8x128xf32>
      %123 = arith.addf %121, %122 : vector<8x128xf32>
      %cst_55 = arith.constant 0.000000e+00 : f32
      %124 = vector.broadcast %cst_55 : f32 to vector<8x128xf32>
      %125 = arith.maximumf %123, %124 : vector<8x128xf32>
      %126 = arith.truncf %125 : vector<8x128xf32> to vector<8x128xbf16>
      %c16_56 = arith.constant 16 : index
      %c0_57 = arith.constant 0 : index
      %127 = vector.load %arg6[%c16_56, %c0_57] : memref<128x128xbf16, #tpu.memory_space<vmem>>, vector<8x128xbf16>
      tpu.vector_store %arg6[%c16_56, %c0_57], %126 {strides = array<i32>} : memref<128x128xbf16, #tpu.memory_space<vmem>>, vector<8x128xbf16>,
      %c24_58 = arith.constant 24 : index
      %c0_59 = arith.constant 0 : index
      %128 = vector.load %arg7[%c24_58, %c0_59] : memref<128x128xf32, #tpu.memory_space<vmem>>, vector<8x128xf32>
      %129 = vector.broadcast %97 : vector<1x128xf32> to vector<8x128xf32>
      %130 = arith.mulf %128, %129 : vector<8x128xf32>
      %131 = vector.broadcast %100 : vector<1x128xf32> to vector<8x128xf32>
      %132 = arith.addf %130, %131 : vector<8x128xf32>
      %cst_60 = arith.constant 0.000000e+00 : f32
      %133 = vector.broadcast %cst_60 : f32 to vector<8x128xf32>
      %134 = arith.maximumf %132, %133 : vector<8x128xf32>
      %135 = arith.truncf %134 : vector<8x128xf32> to vector<8x128xbf16>
      %c24_61 = arith.constant 24 : index
      %c0_62 = arith.constant 0 : index
      %136 = vector.load %arg6[%c24_61, %c0_62] : memref<128x128xbf16, #tpu.memory_space<vmem>>, vector<8x128xbf16>
      tpu.vector_store %arg6[%c24_61, %c0_62], %135 {strides = array<i32>} : memref<128x128xbf16, #tpu.memory_space<vmem>>, vector<8x128xbf16>,
      %c32_63 = arith.constant 32 : index
      %c0_64 = arith.constant 0 : index
      %137 = vector.load %arg7[%c32_63, %c0_64] : memref<128x128xf32, #tpu.memory_space<vmem>>, vector<8x128xf32>
      %138 = vector.broadcast %97 : vector<1x128xf32> to vector<8x128xf32>
      %139 = arith.mulf %137, %138 : vector<8x128xf32>
      %140 = vector.broadcast %100 : vector<1x128xf32> to vector<8x128xf32>
      %141 = arith.addf %139, %140 : vector<8x128xf32>
      %cst_65 = arith.constant 0.000000e+00 : f32
      %142 = vector.broadcast %cst_65 : f32 to vector<8x128xf32>
      %143 = arith.maximumf %141, %142 : vector<8x128xf32>
      %144 = arith.truncf %143 : vector<8x128xf32> to vector<8x128xbf16>
      %c32_66 = arith.constant 32 : index
      %c0_67 = arith.constant 0 : index
      %145 = vector.load %arg6[%c32_66, %c0_67] : memref<128x128xbf16, #tpu.memory_space<vmem>>, vector<8x128xbf16>
      tpu.vector_store %arg6[%c32_66, %c0_67], %144 {strides = array<i32>} : memref<128x128xbf16, #tpu.memory_space<vmem>>, vector<8x128xbf16>,
      %c40_68 = arith.constant 40 : index
      %c0_69 = arith.constant 0 : index
      %146 = vector.load %arg7[%c40_68, %c0_69] : memref<128x128xf32, #tpu.memory_space<vmem>>, vector<8x128xf32>
      %147 = vector.broadcast %97 : vector<1x128xf32> to vector<8x128xf32>
      %148 = arith.mulf %146, %147 : vector<8x128xf32>
      %149 = vector.broadcast %100 : vector<1x128xf32> to vector<8x128xf32>
      %150 = arith.addf %148, %149 : vector<8x128xf32>
      %cst_70 = arith.constant 0.000000e+00 : f32
      %151 = vector.broadcast %cst_70 : f32 to vector<8x128xf32>
      %152 = arith.maximumf %150, %151 : vector<8x128xf32>
      %153 = arith.truncf %152 : vector<8x128xf32> to vector<8x128xbf16>
      %c40_71 = arith.constant 40 : index
      %c0_72 = arith.constant 0 : index
      %154 = vector.load %arg6[%c40_71, %c0_72] : memref<128x128xbf16, #tpu.memory_space<vmem>>, vector<8x128xbf16>
      tpu.vector_store %arg6[%c40_71, %c0_72], %153 {strides = array<i32>} : memref<128x128xbf16, #tpu.memory_space<vmem>>, vector<8x128xbf16>,
      %c48_73 = arith.constant 48 : index
      %c0_74 = arith.constant 0 : index
      %155 = vector.load %arg7[%c48_73, %c0_74] : memref<128x128xf32, #tpu.memory_space<vmem>>, vector<8x128xf32>
      %156 = vector.broadcast %97 : vector<1x128xf32> to vector<8x128xf32>
      %157 = arith.mulf %155, %156 : vector<8x128xf32>
      %158 = vector.broadcast %100 : vector<1x128xf32> to vector<8x128xf32>
      %159 = arith.addf %157, %158 : vector<8x128xf32>
      %cst_75 = arith.constant 0.000000e+00 : f32
      %160 = vector.broadcast %cst_75 : f32 to vector<8x128xf32>
      %161 = arith.maximumf %159, %160 : vector<8x128xf32>
      %162 = arith.truncf %161 : vector<8x128xf32> to vector<8x128xbf16>
      %c48_76 = arith.constant 48 : index
      %c0_77 = arith.constant 0 : index
      %163 = vector.load %arg6[%c48_76, %c0_77] : memref<128x128xbf16, #tpu.memory_space<vmem>>, vector<8x128xbf16>
      tpu.vector_store %arg6[%c48_76, %c0_77], %162 {strides = array<i32>} : memref<128x128xbf16, #tpu.memory_space<vmem>>, vector<8x128xbf16>,
      %c56_78 = arith.constant 56 : index
      %c0_79 = arith.constant 0 : index
      %164 = vector.load %arg7[%c56_78, %c0_79] : memref<128x128xf32, #tpu.memory_space<vmem>>, vector<8x128xf32>
      %165 = vector.broadcast %97 : vector<1x128xf32> to vector<8x128xf32>
      %166 = arith.mulf %164, %165 : vector<8x128xf32>
      %167 = vector.broadcast %100 : vector<1x128xf32> to vector<8x128xf32>
      %168 = arith.addf %166, %167 : vector<8x128xf32>
      %cst_80 = arith.constant 0.000000e+00 : f32
      %169 = vector.broadcast %cst_80 : f32 to vector<8x128xf32>
      %170 = arith.maximumf %168, %169 : vector<8x128xf32>
      %171 = arith.truncf %170 : vector<8x128xf32> to vector<8x128xbf16>
      %c56_81 = arith.constant 56 : index
      %c0_82 = arith.constant 0 : index
      %172 = vector.load %arg6[%c56_81, %c0_82] : memref<128x128xbf16, #tpu.memory_space<vmem>>, vector<8x128xbf16>
      tpu.vector_store %arg6[%c56_81, %c0_82], %171 {strides = array<i32>} : memref<128x128xbf16, #tpu.memory_space<vmem>>, vector<8x128xbf16>,
      %c64_83 = arith.constant 64 : index
      %c0_84 = arith.constant 0 : index
      %173 = vector.load %arg7[%c64_83, %c0_84] : memref<128x128xf32, #tpu.memory_space<vmem>>, vector<8x128xf32>
      %174 = vector.broadcast %97 : vector<1x128xf32> to vector<8x128xf32>
      %175 = arith.mulf %173, %174 : vector<8x128xf32>
      %176 = vector.broadcast %100 : vector<1x128xf32> to vector<8x128xf32>
      %177 = arith.addf %175, %176 : vector<8x128xf32>
      %cst_85 = arith.constant 0.000000e+00 : f32
      %178 = vector.broadcast %cst_85 : f32 to vector<8x128xf32>
      %179 = arith.maximumf %177, %178 : vector<8x128xf32>
      %180 = arith.truncf %179 : vector<8x128xf32> to vector<8x128xbf16>
      %c64_86 = arith.constant 64 : index
      %c0_87 = arith.constant 0 : index
      %181 = vector.load %arg6[%c64_86, %c0_87] : memref<128x128xbf16, #tpu.memory_space<vmem>>, vector<8x128xbf16>
      tpu.vector_store %arg6[%c64_86, %c0_87], %180 {strides = array<i32>} : memref<128x128xbf16, #tpu.memory_space<vmem>>, vector<8x128xbf16>,
      %c72_88 = arith.constant 72 : index
      %c0_89 = arith.constant 0 : index
      %182 = vector.load %arg7[%c72_88, %c0_89] : memref<128x128xf32, #tpu.memory_space<vmem>>, vector<8x128xf32>
      %183 = vector.broadcast %97 : vector<1x128xf32> to vector<8x128xf32>
      %184 = arith.mulf %182, %183 : vector<8x128xf32>
      %185 = vector.broadcast %100 : vector<1x128xf32> to vector<8x128xf32>
      %186 = arith.addf %184, %185 : vector<8x128xf32>
      %cst_90 = arith.constant 0.000000e+00 : f32
      %187 = vector.broadcast %cst_90 : f32 to vector<8x128xf32>
      %188 = arith.maximumf %186, %187 : vector<8x128xf32>
      %189 = arith.truncf %188 : vector<8x128xf32> to vector<8x128xbf16>
      %c72_91 = arith.constant 72 : index
      %c0_92 = arith.constant 0 : index
      %190 = vector.load %arg6[%c72_91, %c0_92] : memref<128x128xbf16, #tpu.memory_space<vmem>>, vector<8x128xbf16>
      tpu.vector_store %arg6[%c72_91, %c0_92], %189 {strides = array<i32>} : memref<128x128xbf16, #tpu.memory_space<vmem>>, vector<8x128xbf16>,
      %c80_93 = arith.constant 80 : index
      %c0_94 = arith.constant 0 : index
      %191 = vector.load %arg7[%c80_93, %c0_94] : memref<128x128xf32, #tpu.memory_space<vmem>>, vector<8x128xf32>
      %192 = vector.broadcast %97 : vector<1x128xf32> to vector<8x128xf32>
      %193 = arith.mulf %191, %192 : vector<8x128xf32>
      %194 = vector.broadcast %100 : vector<1x128xf32> to vector<8x128xf32>
      %195 = arith.addf %193, %194 : vector<8x128xf32>
      %cst_95 = arith.constant 0.000000e+00 : f32
      %196 = vector.broadcast %cst_95 : f32 to vector<8x128xf32>
      %197 = arith.maximumf %195, %196 : vector<8x128xf32>
      %198 = arith.truncf %197 : vector<8x128xf32> to vector<8x128xbf16>
      %c80_96 = arith.constant 80 : index
      %c0_97 = arith.constant 0 : index
      %199 = vector.load %arg6[%c80_96, %c0_97] : memref<128x128xbf16, #tpu.memory_space<vmem>>, vector<8x128xbf16>
      tpu.vector_store %arg6[%c80_96, %c0_97], %198 {strides = array<i32>} : memref<128x128xbf16, #tpu.memory_space<vmem>>, vector<8x128xbf16>,
      %c88_98 = arith.constant 88 : index
      %c0_99 = arith.constant 0 : index
      %200 = vector.load %arg7[%c88_98, %c0_99] : memref<128x128xf32, #tpu.memory_space<vmem>>, vector<8x128xf32>
      %201 = vector.broadcast %97 : vector<1x128xf32> to vector<8x128xf32>
      %202 = arith.mulf %200, %201 : vector<8x128xf32>
      %203 = vector.broadcast %100 : vector<1x128xf32> to vector<8x128xf32>
      %204 = arith.addf %202, %203 : vector<8x128xf32>
      %cst_100 = arith.constant 0.000000e+00 : f32
      %205 = vector.broadcast %cst_100 : f32 to vector<8x128xf32>
      %206 = arith.maximumf %204, %205 : vector<8x128xf32>
      %207 = arith.truncf %206 : vector<8x128xf32> to vector<8x128xbf16>
      %c88_101 = arith.constant 88 : index
      %c0_102 = arith.constant 0 : index
      %208 = vector.load %arg6[%c88_101, %c0_102] : memref<128x128xbf16, #tpu.memory_space<vmem>>, vector<8x128xbf16>
      tpu.vector_store %arg6[%c88_101, %c0_102], %207 {strides = array<i32>} : memref<128x128xbf16, #tpu.memory_space<vmem>>, vector<8x128xbf16>,
      %c96_103 = arith.constant 96 : index
      %c0_104 = arith.constant 0 : index
      %209 = vector.load %arg7[%c96_103, %c0_104] : memref<128x128xf32, #tpu.memory_space<vmem>>, vector<8x128xf32>
      %210 = vector.broadcast %97 : vector<1x128xf32> to vector<8x128xf32>
      %211 = arith.mulf %209, %210 : vector<8x128xf32>
      %212 = vector.broadcast %100 : vector<1x128xf32> to vector<8x128xf32>
      %213 = arith.addf %211, %212 : vector<8x128xf32>
      %cst_105 = arith.constant 0.000000e+00 : f32
      %214 = vector.broadcast %cst_105 : f32 to vector<8x128xf32>
      %215 = arith.maximumf %213, %214 : vector<8x128xf32>
      %216 = arith.truncf %215 : vector<8x128xf32> to vector<8x128xbf16>
      %c96_106 = arith.constant 96 : index
      %c0_107 = arith.constant 0 : index
      %217 = vector.load %arg6[%c96_106, %c0_107] : memref<128x128xbf16, #tpu.memory_space<vmem>>, vector<8x128xbf16>
      tpu.vector_store %arg6[%c96_106, %c0_107], %216 {strides = array<i32>} : memref<128x128xbf16, #tpu.memory_space<vmem>>, vector<8x128xbf16>,
      %c104_108 = arith.constant 104 : index
      %c0_109 = arith.constant 0 : index
      %218 = vector.load %arg7[%c104_108, %c0_109] : memref<128x128xf32, #tpu.memory_space<vmem>>, vector<8x128xf32>
      %219 = vector.broadcast %97 : vector<1x128xf32> to vector<8x128xf32>
      %220 = arith.mulf %218, %219 : vector<8x128xf32>
      %221 = vector.broadcast %100 : vector<1x128xf32> to vector<8x128xf32>
      %222 = arith.addf %220, %221 : vector<8x128xf32>
      %cst_110 = arith.constant 0.000000e+00 : f32
      %223 = vector.broadcast %cst_110 : f32 to vector<8x128xf32>
      %224 = arith.maximumf %222, %223 : vector<8x128xf32>
      %225 = arith.truncf %224 : vector<8x128xf32> to vector<8x128xbf16>
      %c104_111 = arith.constant 104 : index
      %c0_112 = arith.constant 0 : index
      %226 = vector.load %arg6[%c104_111, %c0_112] : memref<128x128xbf16, #tpu.memory_space<vmem>>, vector<8x128xbf16>
      tpu.vector_store %arg6[%c104_111, %c0_112], %225 {strides = array<i32>} : memref<128x128xbf16, #tpu.memory_space<vmem>>, vector<8x128xbf16>,
      %c112_113 = arith.constant 112 : index
      %c0_114 = arith.constant 0 : index
      %227 = vector.load %arg7[%c112_113, %c0_114] : memref<128x128xf32, #tpu.memory_space<vmem>>, vector<8x128xf32>
      %228 = vector.broadcast %97 : vector<1x128xf32> to vector<8x128xf32>
      %229 = arith.mulf %227, %228 : vector<8x128xf32>
      %230 = vector.broadcast %100 : vector<1x128xf32> to vector<8x128xf32>
      %231 = arith.addf %229, %230 : vector<8x128xf32>
      %cst_115 = arith.constant 0.000000e+00 : f32
      %232 = vector.broadcast %cst_115 : f32 to vector<8x128xf32>
      %233 = arith.maximumf %231, %232 : vector<8x128xf32>
      %234 = arith.truncf %233 : vector<8x128xf32> to vector<8x128xbf16>
      %c112_116 = arith.constant 112 : index
      %c0_117 = arith.constant 0 : index
      %235 = vector.load %arg6[%c112_116, %c0_117] : memref<128x128xbf16, #tpu.memory_space<vmem>>, vector<8x128xbf16>
      tpu.vector_store %arg6[%c112_116, %c0_117], %234 {strides = array<i32>} : memref<128x128xbf16, #tpu.memory_space<vmem>>, vector<8x128xbf16>,
      %c120_118 = arith.constant 120 : index
      %c0_119 = arith.constant 0 : index
      %236 = vector.load %arg7[%c120_118, %c0_119] : memref<128x128xf32, #tpu.memory_space<vmem>>, vector<8x128xf32>
      %237 = vector.broadcast %97 : vector<1x128xf32> to vector<8x128xf32>
      %238 = arith.mulf %236, %237 : vector<8x128xf32>
      %239 = vector.broadcast %100 : vector<1x128xf32> to vector<8x128xf32>
      %240 = arith.addf %238, %239 : vector<8x128xf32>
      %cst_120 = arith.constant 0.000000e+00 : f32
      %241 = vector.broadcast %cst_120 : f32 to vector<8x128xf32>
      %242 = arith.maximumf %240, %241 : vector<8x128xf32>
      %243 = arith.truncf %242 : vector<8x128xf32> to vector<8x128xbf16>
      %c120_121 = arith.constant 120 : index
      %c0_122 = arith.constant 0 : index
      %244 = vector.load %arg6[%c120_121, %c0_122] : memref<128x128xbf16, #tpu.memory_space<vmem>>, vector<8x128xbf16>
      tpu.vector_store %arg6[%c120_121, %c0_122], %243 {strides = array<i32>} : memref<128x128xbf16, #tpu.memory_space<vmem>>, vector<8x128xbf16>,
    } else {
    }
    return
  }
  func.func @transform_0(%arg0: i32) -> (i32, i32) {
    %c0_i32 = arith.constant 0 : i32
    %c0_i32_0 = arith.constant 0 : i32
    return %c0_i32, %arg0 : i32, i32
  }
  func.func @transform_1(%arg0: i32) -> (i32, i32) {
    %c0_i32 = arith.constant 0 : i32
    %c0_i32_0 = arith.constant 0 : i32
    return %arg0, %c0_i32 : i32, i32
  }
  func.func @transform_2(%arg0: i32) -> (i32, i32) {
    %c0_i32 = arith.constant 0 : i32
    %c0_i32_0 = arith.constant 0 : i32
    %c0_i32_1 = arith.constant 0 : i32
    return %c0_i32, %c0_i32_0 : i32, i32
  }
  func.func @transform_3(%arg0: i32) -> (i32, i32) {
    %c0_i32 = arith.constant 0 : i32
    %c0_i32_0 = arith.constant 0 : i32
    %c0_i32_1 = arith.constant 0 : i32
    return %c0_i32, %c0_i32_0 : i32, i32
  }
  func.func @transform_4(%arg0: i32) -> (i32, i32) {
    %c0_i32 = arith.constant 0 : i32
    %c0_i32_0 = arith.constant 0 : i32
    %c0_i32_1 = arith.constant 0 : i32
    return %c0_i32, %c0_i32_0 : i32, i32
  }
  func.func @transform_5(%arg0: i32) -> (i32, i32) {
    %c0_i32 = arith.constant 0 : i32
    %c0_i32_0 = arith.constant 0 : i32
    %c0_i32_1 = arith.constant 0 : i32
    return %c0_i32, %c0_i32_0 : i32, i32
  }
}

module attributes {stable_mosaic.version = 11 : i64} {
  func.func @_mm_bias_tanh_kernel(%arg0: i32, %arg1: i32, %arg2: i32, %arg3: memref<128x128xbf16, #tpu.memory_space<vmem>>, %arg4: memref<128x128xbf16, #tpu.memory_space<vmem>>, %arg5: memref<1x128xf32, #tpu.memory_space<vmem>>, %arg6: memref<128x128xf32, #tpu.memory_space<vmem>>, %arg7: memref<128x128xf32, #tpu.memory_space<vmem>>) attributes {dimension_semantics = [#tpu.dimension_semantics<parallel>, #tpu.dimension_semantics<parallel>, #tpu.dimension_semantics<arbitrary>], iteration_bounds = array<i64: 4, 1, 1>, scalar_prefetch = 0 : i64, scratch_operands = 1 : i64, tpu.core_type = #tpu.core_type<tc>, window_params = [{transform_indices = @transform_0, window_bounds = array<i64: 128, 128>}, {transform_indices = @transform_1, window_bounds = array<i64: 128, 128>}, {transform_indices = @transform_2, window_bounds = array<i64: 1, 128>}, {transform_indices = @transform_3, window_bounds = array<i64: 128, 128>}]} {
    %c0_i32 = arith.constant 0 : i32
    %0 = arith.cmpi eq, %arg2, %c0_i32 : i32
    %1 = arith.extui %0 : i1 to i32
    %c0_i32_0 = arith.constant 0 : i32
    %2 = arith.cmpi ne, %1, %c0_i32_0 : i32
    scf.if %2 {
      %cst_10 = arith.constant 0.000000e+00 : f32
      %12 = vector.broadcast %cst_10 : f32 to vector<128x128xf32>
      %c0_11 = arith.constant 0 : index
      %c0_12 = arith.constant 0 : index
      %13 = vector.load %arg7[%c0_11, %c0_12] : memref<128x128xf32, #tpu.memory_space<vmem>>, vector<128x128xf32>
      tpu.vector_store %arg7[%c0_11, %c0_12], %12 {strides = array<i32>} : memref<128x128xf32, #tpu.memory_space<vmem>>, vector<128x128xf32>,
    } else {
    }
    %c0 = arith.constant 0 : index
    %c0_1 = arith.constant 0 : index
    %3 = vector.load %arg7[%c0, %c0_1] : memref<128x128xf32, #tpu.memory_space<vmem>>, vector<128x128xf32>
    %c0_2 = arith.constant 0 : index
    %c0_3 = arith.constant 0 : index
    %4 = vector.load %arg3[%c0_2, %c0_3] : memref<128x128xbf16, #tpu.memory_space<vmem>>, vector<128x128xbf16>
    %c0_4 = arith.constant 0 : index
    %c0_5 = arith.constant 0 : index
    %5 = vector.load %arg4[%c0_4, %c0_5] : memref<128x128xbf16, #tpu.memory_space<vmem>>, vector<128x128xbf16>
    %cst = arith.constant dense<0.000000e+00> : vector<128x128xf32>
    %6 = tpu.matmul %4, %5, %cst {dimension_numbers = #tpu.dot_dimension_numbers<[1], [0], [0], [1], [0, 0, 1, 1], [], []>} : vector<128x128xbf16>, vector<128x128xbf16>, vector<128x128xf32> -> vector<128x128xf32>
    %7 = arith.addf %3, %6 : vector<128x128xf32>
    %c0_6 = arith.constant 0 : index
    %c0_7 = arith.constant 0 : index
    %8 = vector.load %arg7[%c0_6, %c0_7] : memref<128x128xf32, #tpu.memory_space<vmem>>, vector<128x128xf32>
    tpu.vector_store %arg7[%c0_6, %c0_7], %7 {strides = array<i32>} : memref<128x128xf32, #tpu.memory_space<vmem>>, vector<128x128xf32>,
    %c0_i32_8 = arith.constant 0 : i32
    %9 = arith.cmpi eq, %arg2, %c0_i32_8 : i32
    %10 = arith.extui %9 : i1 to i32
    %c0_i32_9 = arith.constant 0 : i32
    %11 = arith.cmpi ne, %10, %c0_i32_9 : i32
    scf.if %11 {
      %c0_10 = arith.constant 0 : index
      %c0_11 = arith.constant 0 : index
      %12 = vector.load %arg7[%c0_10, %c0_11] : memref<128x128xf32, #tpu.memory_space<vmem>>, vector<128x128xf32>
      %c0_12 = arith.constant 0 : index
      %c0_13 = arith.constant 0 : index
      %13 = vector.load %arg5[%c0_12, %c0_13] : memref<1x128xf32, #tpu.memory_space<vmem>>, vector<1x128xf32>
      %14 = vector.broadcast %13 : vector<1x128xf32> to vector<128x128xf32>
      %15 = arith.addf %12, %14 : vector<128x128xf32>
      %16 = math.tanh %15 : vector<128x128xf32>
      %c0_14 = arith.constant 0 : index
      %c0_15 = arith.constant 0 : index
      %17 = vector.load %arg6[%c0_14, %c0_15] : memref<128x128xf32, #tpu.memory_space<vmem>>, vector<128x128xf32>
      tpu.vector_store %arg6[%c0_14, %c0_15], %16 {strides = array<i32>} : memref<128x128xf32, #tpu.memory_space<vmem>>, vector<128x128xf32>,
    } else {
    }
    return
  }
  func.func @transform_0(%arg0: i32, %arg1: i32, %arg2: i32) -> (i32, i32) {
    %c0_i32 = arith.constant 0 : i32
    return %arg0, %arg2 : i32, i32
  }
  func.func @transform_1(%arg0: i32, %arg1: i32, %arg2: i32) -> (i32, i32) {
    %c0_i32 = arith.constant 0 : i32
    return %arg2, %arg1 : i32, i32
  }
  func.func @transform_2(%arg0: i32, %arg1: i32, %arg2: i32) -> (i32, i32) {
    %c0_i32 = arith.constant 0 : i32
    %c0_i32_0 = arith.constant 0 : i32
    return %c0_i32, %arg1 : i32, i32
  }
  func.func @transform_3(%arg0: i32, %arg1: i32, %arg2: i32) -> (i32, i32) {
    %c0_i32 = arith.constant 0 : i32
    return %arg0, %arg1 : i32, i32
  }
}

</mosaic_0001>

<llo_original>
// kernel: tile.38
$region0: #{tile.38}
  #allocation2 [shape = 's32[1]{0}', space=sflag, size = 0x4, scoped, tag = 'scoped memory for tile.38']
  %s0 = inlined_call_operand.hbm [shape: f32[32], index: 0, kind: input, shape index: {}]
  %s1 = inlined_call_operand.vmem [shape: f32[16,32], index: 1, kind: output, shape index: {}]
  $region1: #{tile.38} parent=0
    #allocation0 [shape = 'u8[512]{0}', space=vmem, size = 0x400, scoped, tag = 'operand span for operand 0']
    #allocation1 [shape = 's32[1]{0}', space=sflag, size = 0x4, scoped, tag = 'scoped memory for tile.38']
    %2 = vsyncpa [#allocation1], 0
    // Predicated region
    $region2: #{tile.38} parent=1 // pred_check
      _
    $region3: #{tile.38} parent=1 // pred_check_branch
      %4 = sbr.rel (0) target = $region5
    $region4: #{tile.38} parent=1 // pred_region
      %s6 = ssub.s32 16, 16
      %7 = vsyncadd [#allocation1], %s6
      %s9 = sshll.u32 [#allocation0], 4
      %s10 = int_to_ptr.vmem [resolvable:$true] %s9
      %12 = dma.hbm_to_vmem [thread:$0]  %s0, 16, %s10, [#allocation1]
    $region5: #{tile.38} parent=1 // pred_fallthru
      _
    // Predicated region
    $region6: #{tile.38} parent=1 // pred_check
      _
    $region7: #{tile.38} parent=1 // pred_check_branch
      %14 = sbr.rel (0) target = $region9
    $region8: #{tile.38} parent=1 // pred_region
      %15 = dma.done [#allocation1], 16
    $region9: #{tile.38} parent=1 // pred_fallthru
      _
    %v16 = vld [vmem:[#allocation0] ss:$0 sm:$0xff]
    %17 = vst [vmem:[%s1] sm:$0xff] %v16
    %s18 = scalar_lea.vmem %s1, 8
    %19 = vst [vmem:[%s18] sm:$0xff] %v16
    %20 = vsyncpa [#allocation1], 1

// kernel: tile.48
$region0: #{tile.48}
  #allocation0 [shape = 's32[1]{0}', space=sflag, size = 0x4, scoped, tag = 'scoped memory for tile.48']
  %s0 = inlined_call_operand.vmem [shape: f32[16], index: 0, kind: input, shape index: {}]
  %s1 = inlined_call_operand.vmem [shape: f32[4,16], index: 1, kind: output, shape index: {}]
  // Predicated region
  $region2: #{tile.48} parent=0 // pred_check
    _
  $region3: #{tile.48} parent=0 // pred_check_branch
    %3 = sbr.rel (0) target = $region5
  $region4: #{tile.48} parent=0 // pred_region
    _
  $region5: #{tile.48} parent=0 // pred_fallthru
    _
  %v4 = vld [vmem:[%s0] ss:$0 sm:$0xff]
  %5 = vst [vmem:[%s1] sm:$0xf] %v4

// kernel: tile.49
$region0: #{tile.49}
  %s0 = inlined_call_operand.vmem [shape: f32[4,16], index: 0, kind: input, shape index: {}]
  %s1 = inlined_call_operand.vmem [shape: f32[64], index: 1, kind: output, shape index: {}]
  $region1: #{tile.49} parent=0
    #allocation0 [shape = 'u8[4096]{0}', space=vmem, size = 0x1000, scoped, tag = 'scoped mem for output reshape']
    #allocation1 [shape = 'u8[4096]{0}', space=vmem, size = 0x1000, scoped, tag = 'scoped mem for input reshape']
    %s3 = sshllo.u32 0, 4
    %v4 = vld [vmem:[%s0] sm:%s3]
    %5 = vst [vmem:[#allocation1] sm:%s3] %v4
    %v6 = vld [vmem:[#allocation1] sm:$0x1]
    %vm7 = vcmask 130048
    %8 = vst.msk [vmem:[#allocation0] sm:$0x1] %vm7, %v6
    %s9 = scalar_lea.vmem [#allocation1], 3
    %v10 = vld [vmem:[%s9] sm:$0x1]
    %11 = vrot.lane.b32.xlu0 %v10, 48
    %v12 = vpop.permute.xlu0 %11
    %vm13 = vcmask 523648
    %14 = vst.msk [vmem:[#allocation0] sm:$0x1] %vm13, %v12
    %s15 = scalar_lea.vmem [#allocation1], 2
    %v16 = vld [vmem:[%s15] sm:$0x1]
    %17 = vrot.lane.b32.xlu0 %v16, 32
    %v18 = vpop.permute.xlu0 %17
    %vm19 = vcmask 392448
    %20 = vst.msk [vmem:[#allocation0] sm:$0x1] %vm19, %v18
    %s21 = scalar_lea.vmem [#allocation1], 1
    %v22 = vld [vmem:[%s21] sm:$0x1]
    %23 = vrot.lane.b32.xlu0 %v22, 16
    %v24 = vpop.permute.xlu0 %23
    %vm25 = vcmask 261248
    %26 = vst.msk [vmem:[#allocation0] sm:$0x1] %vm25, %v24
    %s28 = sshllo.u32 0, 1
    %v30 = vld [vmem:[#allocation0] sm:%s28]
    %s31 = sshllo.u32 0, 1
    %32 = vst [vmem:[%s1] sm:%s31] %v30

// kernel: _forward_impl.5
$region0: #{_forward_impl.5}
  #allocation0 [shape = 'u32[]', space=smem, size = 0x4, offset = 0x4, fixed_abs, tag = 'smem constant byte address 0x4 - core index']
  #allocation1 [shape = 'u32[144,128]{1,0:T(1,128)}', space=vmem, size = 0x12000, scoped, tag = 'internal scratch']
  #allocation2 [shape = 'f32[32,128]{1,0:T(8,128)}', space=vmem, size = 0x4000, scoped, tag = 'scratch operand']
  %s0 = inlined_call_operand.vmem [shape: bf16[32,384], index: 0, kind: input, shape index: {}]
  %s1 = inlined_call_operand.vmem [shape: bf16[384,128], index: 1, kind: input, shape index: {}]
  %s2 = inlined_call_operand.vmem [shape: f32[128,128], index: 2, kind: input, shape index: {}]
  %s3 = inlined_call_operand.vmem [shape: f32[1,128], index: 3, kind: input, shape index: {}]
  %s4 = inlined_call_operand.vmem [shape: f32[1,128], index: 4, kind: input, shape index: {}]
  %s5 = inlined_call_operand.vmem [shape: bf16[32,128], index: 5, kind: output, shape index: {}]
  %s6 = sld [smem:[#allocation0]]
  $region38: #{_forward_impl.5} parent=0
    _
  %s8 = ssub.s32 1, %s6
  %s9 = scalar_select 0, %s8, %s6
  // Predicated region
  $region2: #{_forward_impl.5} parent=0 // pred_check
    _
  $region3: #{_forward_impl.5} parent=0 // pred_check_branch
    %11 = sbr.rel (0) target = $region5
  $region4: #{_forward_impl.5} parent=0 // pred_region
    _
  $region5: #{_forward_impl.5} parent=0 // pred_fallthru
    _
  // Predicated region
  $region6: #{_forward_impl.5} parent=0 // pred_check
    _
  $region7: #{_forward_impl.5} parent=0 // pred_check_branch
    %13 = sbr.rel (0) target = $region9
  $region8: #{_forward_impl.5} parent=0 // pred_region
    _
  $region9: #{_forward_impl.5} parent=0 // pred_fallthru
    _
  // Predicated region
  $region10: #{_forward_impl.5} parent=0 // pred_check
    _
  $region11: #{_forward_impl.5} parent=0 // pred_check_branch
    %15 = sbr.rel (0) target = $region13
  $region12: #{_forward_impl.5} parent=0 // pred_region
    _
  $region13: #{_forward_impl.5} parent=0 // pred_fallthru
    _
  // Predicated region
  $region14: #{_forward_impl.5} parent=0 // pred_check
    _
  $region15: #{_forward_impl.5} parent=0 // pred_check_branch
    %17 = sbr.rel (0) target = $region17
  $region16: #{_forward_impl.5} parent=0 // pred_region
    _
  $region17: #{_forward_impl.5} parent=0 // pred_fallthru
    _
  // Predicated region
  $region18: #{_forward_impl.5} parent=0 // pred_check
    _
  $region19: #{_forward_impl.5} parent=0 // pred_check_branch
    %19 = sbr.rel (0) target = $region21
  $region20: #{_forward_impl.5} parent=0 // pred_region
    _
  $region21: #{_forward_impl.5} parent=0 // pred_fallthru
    _
  %p21 = scmp.eq.s32.totalorder 0, 0
  // Predicated region
  $region22: #{_forward_impl.5} parent=0 // pred_check
    %p22 = pneg %p21
  $region23: #{_forward_impl.5} parent=0 // pred_check_branch
    %24 = sbr.rel (%p22) target = $region25
  $region24: #{_forward_impl.5} parent=0 // pred_region
    %25 = vst [vmem:[#allocation2] sm:$0xff] 0.0
    %26 = vst [vmem:[#allocation2 + $0x8] sm:$0xff] 0.0
    %27 = vst [vmem:[#allocation2 + $0x10] sm:$0xff] 0.0
    %28 = vst [vmem:[#allocation2 + $0x18] sm:$0xff] 0.0
  $region25: #{_forward_impl.5} parent=0 // pred_fallthru
    _
  %v29 = vld [vmem:[#allocation2] sm:$0xff]
  %v30 = vld [vmem:[#allocation2 + $0x8] sm:$0xff]
  %v31 = vld [vmem:[#allocation2 + $0x10] sm:$0xff]
  %v32 = vld [vmem:[#allocation2 + $0x18] sm:$0xff]
  %v33 = vld [vmem:[%s0] sm:$0xff]
  %v34 = vld [vmem:[%s0 + $0x8] sm:$0xf]
  %v35 = vld [vmem:[%s0 + $0xc] sm:$0xff]
  %v36 = vld [vmem:[%s0 + $0x14] sm:$0xf]
  %v37 = vld [vmem:[%s0 + $0x18] sm:$0xff]
  %v38 = vld [vmem:[%s0 + $0x20] sm:$0xf]
  %v39 = vld [vmem:[%s0 + $0x24] sm:$0xff]
  %v40 = vld [vmem:[%s0 + $0x2c] sm:$0xf]
  %v41 = vld [vmem:[%s1] sm:$0xf]
  %v42 = vld [vmem:[%s1 + $0x4] sm:$0xf]
  %v43 = vld [vmem:[%s1 + $0x8] sm:$0xf]
  %v44 = vld [vmem:[%s1 + $0xc] sm:$0xf]
  %v45 = vld [vmem:[%s1 + $0x10] sm:$0xf]
  %v46 = vld [vmem:[%s1 + $0x14] sm:$0xf]
  %v47 = vld [vmem:[%s1 + $0x18] sm:$0xf]
  %v48 = vld [vmem:[%s1 + $0x1c] sm:$0xf]
  %v49 = vld [vmem:[%s1 + $0x20] sm:$0xf]
  %v50 = vld [vmem:[%s1 + $0x24] sm:$0xf]
  %v51 = vld [vmem:[%s1 + $0x28] sm:$0xf]
  %v52 = vld [vmem:[%s1 + $0x2c] sm:$0xf]
  %v53 = vld [vmem:[%s1 + $0x30] sm:$0xf]
  %v54 = vld [vmem:[%s1 + $0x34] sm:$0xf]
  %v55 = vld [vmem:[%s1 + $0x38] sm:$0xf]
  %v56 = vld [vmem:[%s1 + $0x3c] sm:$0xf]
  %v57 = vld [vmem:[%s1 + $0x40] sm:$0xf]
  %v58 = vld [vmem:[%s1 + $0x44] sm:$0xf]
  %v59 = vld [vmem:[%s1 + $0x48] sm:$0xf]
  %v60 = vld [vmem:[%s1 + $0x4c] sm:$0xf]
  %v61 = vld [vmem:[%s1 + $0x50] sm:$0xf]
  %v62 = vld [vmem:[%s1 + $0x54] sm:$0xf]
  %v63 = vld [vmem:[%s1 + $0x58] sm:$0xf]
  %v64 = vld [vmem:[%s1 + $0x5c] sm:$0xf]
  %v65 = vld [vmem:[%s1 + $0x60] sm:$0xf]
  %v66 = vld [vmem:[%s1 + $0x64] sm:$0xf]
  %v67 = vld [vmem:[%s1 + $0x68] sm:$0xf]
  %v68 = vld [vmem:[%s1 + $0x6c] sm:$0xf]
  %v69 = vld [vmem:[%s1 + $0x70] sm:$0xf]
  %v70 = vld [vmem:[%s1 + $0x74] sm:$0xf]
  %v71 = vld [vmem:[%s1 + $0x78] sm:$0xf]
  %v72 = vld [vmem:[%s1 + $0x7c] sm:$0xf]
  %v73 = vld [vmem:[%s1 + $0x80] sm:$0xf]
  %v74 = vld [vmem:[%s1 + $0x84] sm:$0xf]
  %v75 = vld [vmem:[%s1 + $0x88] sm:$0xf]
  %v76 = vld [vmem:[%s1 + $0x8c] sm:$0xf]
  %v77 = vld [vmem:[%s1 + $0x90] sm:$0xf]
  %v78 = vld [vmem:[%s1 + $0x94] sm:$0xf]
  %v79 = vld [vmem:[%s1 + $0x98] sm:$0xf]
  %v80 = vld [vmem:[%s1 + $0x9c] sm:$0xf]
  %v81 = vld [vmem:[%s1 + $0xa0] sm:$0xf]
  %v82 = vld [vmem:[%s1 + $0xa4] sm:$0xf]
  %v83 = vld [vmem:[%s1 + $0xa8] sm:$0xf]
  %v84 = vld [vmem:[%s1 + $0xac] sm:$0xf]
  %v85 = vld [vmem:[%s1 + $0xb0] sm:$0xf]
  %v86 = vld [vmem:[%s1 + $0xb4] sm:$0xf]
  %v87 = vld [vmem:[%s1 + $0xb8] sm:$0xf]
  %v88 = vld [vmem:[%s1 + $0xbc] sm:$0xf]
  %v97 = vunpack.c.l.b16 %v33
  %v98 = vunpack.c.h.b16 %v33
  %v99 = vunpack.c.l.b16 %v34
  %v100 = vunpack.c.l.b16 %v35
  %v101 = vunpack.c.h.b16 %v35
  %v102 = vunpack.c.l.b16 %v36
  %v103 = vunpack.c.l.b16 %v37
  %v104 = vunpack.c.h.b16 %v37
  %v105 = vunpack.c.l.b16 %v38
  %v106 = vunpack.c.l.b16 %v39
  %v107 = vunpack.c.h.b16 %v39
  %v108 = vunpack.c.l.b16 %v40
  %v109 = vpack.c.b16 %v100, %v97
  %v110 = vpack.c.b16 %v101, %v98
  %v111 = vpack.c.b16 %v102, %v99
  %v112 = vpack.c.b16 %v106, %v103
  %v113 = vpack.c.b16 %v107, %v104
  %v114 = vpack.c.b16 %v108, %v105
  %v169 = vunpack.c.l.b16 %v41
  %v170 = vunpack.c.l.b16 %v42
  %v171 = vunpack.c.l.b16 %v43
  %v172 = vunpack.c.l.b16 %v44
  %v173 = vunpack.c.l.b16 %v45
  %v174 = vunpack.c.l.b16 %v46
  %v175 = vunpack.c.l.b16 %v47
  %v176 = vunpack.c.l.b16 %v48
  %v177 = vunpack.c.l.b16 %v49
  %v178 = vunpack.c.l.b16 %v50
  %v179 = vunpack.c.l.b16 %v51
  %v180 = vunpack.c.l.b16 %v52
  %v181 = vunpack.c.l.b16 %v53
  %v182 = vunpack.c.l.b16 %v54
  %v183 = vunpack.c.l.b16 %v55
  %v184 = vunpack.c.l.b16 %v56
  %v185 = vunpack.c.l.b16 %v57
  %v186 = vunpack.c.l.b16 %v58
  %v187 = vunpack.c.l.b16 %v59
  %v188 = vunpack.c.l.b16 %v60
  %v189 = vunpack.c.l.b16 %v61
  %v190 = vunpack.c.l.b16 %v62
  %v191 = vunpack.c.l.b16 %v63
  %v192 = vunpack.c.l.b16 %v64
  %v193 = vunpack.c.l.b16 %v65
  %v194 = vunpack.c.l.b16 %v66
  %v195 = vunpack.c.l.b16 %v67
  %v196 = vunpack.c.l.b16 %v68
  %v197 = vunpack.c.l.b16 %v69
  %v198 = vunpack.c.l.b16 %v70
  %v199 = vunpack.c.l.b16 %v71
  %v200 = vunpack.c.l.b16 %v72
  %v201 = vunpack.c.l.b16 %v73
  %v202 = vunpack.c.l.b16 %v74
  %v203 = vunpack.c.l.b16 %v75
  %v204 = vunpack.c.l.b16 %v76
  %v205 = vunpack.c.l.b16 %v77
  %v206 = vunpack.c.l.b16 %v78
  %v207 = vunpack.c.l.b16 %v79
  %v208 = vunpack.c.l.b16 %v80
  %v209 = vunpack.c.l.b16 %v81
  %v210 = vunpack.c.l.b16 %v82
  %v211 = vunpack.c.l.b16 %v83
  %v212 = vunpack.c.l.b16 %v84
  %v213 = vunpack.c.l.b16 %v85
  %v214 = vunpack.c.l.b16 %v86
  %v215 = vunpack.c.l.b16 %v87
  %v216 = vunpack.c.l.b16 %v88
  %v217 = vpack.c.b16 %v170, %v169
  %v218 = vpack.c.b16 %v172, %v171
  %v219 = vpack.c.b16 %v174, %v173
  %v220 = vpack.c.b16 %v176, %v175
  %v221 = vpack.c.b16 %v178, %v177
  %v222 = vpack.c.b16 %v180, %v179
  %v223 = vpack.c.b16 %v182, %v181
  %v224 = vpack.c.b16 %v184, %v183
  %v225 = vpack.c.b16 %v186, %v185
  %v226 = vpack.c.b16 %v188, %v187
  %v227 = vpack.c.b16 %v190, %v189
  %v228 = vpack.c.b16 %v192, %v191
  %v229 = vpack.c.b16 %v194, %v193
  %v230 = vpack.c.b16 %v196, %v195
  %v231 = vpack.c.b16 %v198, %v197
  %v232 = vpack.c.b16 %v200, %v199
  %v233 = vpack.c.b16 %v202, %v201
  %v234 = vpack.c.b16 %v204, %v203
  %v235 = vpack.c.b16 %v206, %v205
  %v236 = vpack.c.b16 %v208, %v207
  %v237 = vpack.c.b16 %v210, %v209
  %v238 = vpack.c.b16 %v212, %v211
  %v239 = vpack.c.b16 %v214, %v213
  %v240 = vpack.c.b16 %v216, %v215
  %265 = vmatprep.subr.bf16.mxu0 0
  %266 = vmatpush1.bf16.msra.mxu0 %v217
  %267 = vmatprep.subr.bf16.mxu0 0
  %268 = vmatpush1.bf16.msra.mxu0 %v218
  %269 = vmatprep.subr.bf16.mxu0 0
  %270 = vmatpush1.bf16.msra.mxu0 %v219
  %271 = vmatprep.subr.bf16.mxu0 0
  %272 = vmatpush1.bf16.msra.mxu0 %v220
  %273 = vmatprep.subr.bf16.mxu0 0
  %274 = vmatpush1.bf16.msra.mxu0 %v221
  %275 = vmatprep.subr.bf16.mxu0 0
  %276 = vmatpush1.bf16.msra.mxu0 %v222
  %277 = vmatprep.subr.bf16.mxu0 0
  %278 = vmatpush1.bf16.msra.mxu0 %v223
  %279 = vmatprep.subr.bf16.mxu0 0
  %280 = vmatpush1.bf16.msra.mxu0 %v224
  %281 = vmatprep.subr.bf16.mxu0 0
  %282 = vmatpush1.bf16.msra.mxu0 %v225
  %283 = vmatprep.subr.bf16.mxu0 0
  %284 = vmatpush1.bf16.msra.mxu0 %v226
  %285 = vmatprep.subr.bf16.mxu0 0
  %286 = vmatpush1.bf16.msra.mxu0 %v227
  %287 = vmatprep.subr.bf16.mxu0 0
  %288 = vmatpush1.bf16.msra.mxu0 %v228
  %289 = vmatprep.subr.bf16.mxu0 0
  %290 = vmatpush1.bf16.msra.mxu0 %v229
  %291 = vmatprep.subr.bf16.mxu0 0
  %292 = vmatpush1.bf16.msra.mxu0 %v230
  %293 = vmatprep.subr.bf16.mxu0 0
  %294 = vmatpush1.bf16.msra.mxu0 %v231
  %295 = vmatprep.subr.bf16.mxu0 0
  %296 = vmatpush1.bf16.msra.mxu0 %v232
  %297 = vmatprep.mubr.bf16.mxu0 %v110
  %298 = vmatmul.mubr.bf16.gmra.mrb[0].mxu0 %v109
  %v299 = vpop.f32.mrb[0].mxu0
  %v300 = vadd.f32 0.0, %v299
  %v301 = vpop.f32.mrb[0].mxu0
  %v302 = vpop.f32.mrb[0].mxu0
  %v303 = vadd.f32 0.0, %v302
  %v304 = vpop.f32.mrb[0].mxu0
  %305 = vmatprep.mubr.bf16.mxu0 %v113
  %306 = vmatmul.mubr.bf16.gmra.mrb[0].mxu0 %v112
  %v307 = vpop.f32.mrb[0].mxu0
  %v308 = vadd.f32 0.0, %v307
  %v309 = vpop.f32.mrb[0].mxu0
  %v310 = vpop.f32.mrb[0].mxu0
  %v311 = vadd.f32 0.0, %v310
  %v312 = vpop.f32.mrb[0].mxu0
  %313 = vdwg.mxu0
  %314 = vmatprep.subr.bf16.mxu0 0
  %315 = vmatpush1.bf16.msra.mxu0 %v233
  %316 = vmatprep.subr.bf16.mxu0 0
  %317 = vmatpush1.bf16.msra.mxu0 %v234
  %318 = vmatprep.subr.bf16.mxu0 0
  %319 = vmatpush1.bf16.msra.mxu0 %v235
  %320 = vmatprep.subr.bf16.mxu0 0
  %321 = vmatpush1.bf16.msra.mxu0 %v236
  %322 = vmatprep.subr.bf16.mxu0 0
  %323 = vmatpush1.bf16.msra.mxu0 %v237
  %324 = vmatprep.subr.bf16.mxu0 0
  %325 = vmatpush1.bf16.msra.mxu0 %v238
  %326 = vmatprep.subr.bf16.mxu0 0
  %327 = vmatpush1.bf16.msra.mxu0 %v239
  %328 = vmatprep.subr.bf16.mxu0 0
  %329 = vmatpush1.bf16.msra.mxu0 %v240
  %330 = vmatprep.subr.bf16.mxu0 0
  %331 = vmatpush1.bf16.msra.mxu0 0
  %332 = vmatprep.subr.bf16.mxu0 0
  %333 = vmatpush1.bf16.msra.mxu0 0
  %334 = vmatprep.subr.bf16.mxu0 0
  %335 = vmatpush1.bf16.msra.mxu0 0
  %336 = vmatprep.subr.bf16.mxu0 0
  %337 = vmatpush1.bf16.msra.mxu0 0
  %338 = vmatprep.subr.bf16.mxu0 0
  %339 = vmatpush1.bf16.msra.mxu0 0
  %340 = vmatprep.subr.bf16.mxu0 0
  %341 = vmatpush1.bf16.msra.mxu0 0
  %342 = vmatprep.subr.bf16.mxu0 0
  %343 = vmatpush1.bf16.msra.mxu0 0
  %344 = vmatprep.subr.bf16.mxu0 0
  %345 = vmatpush1.bf16.msra.mxu0 0
  %346 = vmatprep.mubr.bf16.mxu0 0
  %347 = vmatmul.mubr.bf16.gmra.mrb[0].mxu0 %v111
  %v348 = vpop.f32.mrb[0].mxu0
  %v349 = vadd.f32 %v300, %v348
  %v350 = vpop.f32.mrb[0].mxu0
  %v351 = vpop.f32.mrb[0].mxu0
  %v352 = vadd.f32 %v303, %v351
  %v353 = vpop.f32.mrb[0].mxu0
  %354 = vmatprep.mubr.bf16.mxu0 0
  %355 = vmatmul.mubr.bf16.gmra.mrb[0].mxu0 %v114
  %v356 = vpop.f32.mrb[0].mxu0
  %v357 = vadd.f32 %v308, %v356
  %v358 = vpop.f32.mrb[0].mxu0
  %v359 = vpop.f32.mrb[0].mxu0
  %v360 = vadd.f32 %v311, %v359
  %v361 = vpop.f32.mrb[0].mxu0
  %362 = vdwg.mxu0
  %v363 = vadd.f32 %v29, %v349
  %v364 = vadd.f32 %v30, %v352
  %v365 = vadd.f32 %v31, %v357
  %v366 = vadd.f32 %v32, %v360
  %367 = vst [vmem:[#allocation2] sm:$0xff] %v363
  %368 = vst [vmem:[#allocation2 + $0x8] sm:$0xff] %v364
  %369 = vst [vmem:[#allocation2 + $0x10] sm:$0xff] %v365
  %370 = vst [vmem:[#allocation2 + $0x18] sm:$0xff] %v366
  // Predicated region
  $region26: #{_forward_impl.5} parent=0 // pred_check
    %p371 = pneg %p21
  $region27: #{_forward_impl.5} parent=0 // pred_check_branch
    %373 = sbr.rel (%p371) target = $region29
  $region28: #{_forward_impl.5} parent=0 // pred_region
    %v374 = vld [vmem:[#allocation2] sm:$0xff]
    %v375 = vadd.f32 %v374, 0.0
    %v376 = vmul.f32 %v374, %v374
    %v377 = vadd.f32 %v376, 0.0
    %v378 = vld [vmem:[#allocation2 + $0x8] sm:$0xff]
    %v379 = vadd.f32 %v375, %v378
    %v380 = vmul.f32 %v378, %v378
    %v381 = vadd.f32 %v377, %v380
    %v382 = vld [vmem:[#allocation2 + $0x10] sm:$0xff]
    %v383 = vadd.f32 %v379, %v382
    %v384 = vmul.f32 %v382, %v382
    %v385 = vadd.f32 %v381, %v384
    %v386 = vld [vmem:[#allocation2 + $0x18] sm:$0xff]
    %v387 = vadd.f32 %v383, %v386
    %v388 = vmul.f32 %v386, %v386
    %v389 = vadd.f32 %v385, %v388
    %v390 = vld [vmem:[%s2] sm:$0xff]
    %v391 = vld [vmem:[%s2 + $0x8] sm:$0xff]
    %v392 = vld [vmem:[%s2 + $0x10] sm:$0xff]
    %v393 = vld [vmem:[%s2 + $0x18] sm:$0xff]
    %v394 = vld [vmem:[%s2 + $0x20] sm:$0xff]
    %v395 = vld [vmem:[%s2 + $0x28] sm:$0xff]
    %v396 = vld [vmem:[%s2 + $0x30] sm:$0xff]
    %v397 = vld [vmem:[%s2 + $0x38] sm:$0xff]
    %v398 = vld [vmem:[%s2 + $0x40] sm:$0xff]
    %v399 = vld [vmem:[%s2 + $0x48] sm:$0xff]
    %v400 = vld [vmem:[%s2 + $0x50] sm:$0xff]
    %v401 = vld [vmem:[%s2 + $0x58] sm:$0xff]
    %v402 = vld [vmem:[%s2 + $0x60] sm:$0xff]
    %v403 = vld [vmem:[%s2 + $0x68] sm:$0xff]
    %v404 = vld [vmem:[%s2 + $0x70] sm:$0xff]
    %v405 = vld [vmem:[%s2 + $0x78] sm:$0xff]
    %406 = vmatprep.subr.mxu0 0.0
    %407 = vmatpush1.msra.mxu0 %v390
    %408 = vmatprep.subr.mxu0 0.0
    %409 = vmatpush1.msra.mxu0 %v391
    %410 = vmatprep.subr.mxu0 0.0
    %411 = vmatpush1.msra.mxu0 %v392
    %412 = vmatprep.subr.mxu0 0.0
    %413 = vmatpush1.msra.mxu0 %v393
    %414 = vmatprep.subr.mxu0 0.0
    %415 = vmatpush1.msra.mxu0 %v394
    %416 = vmatprep.subr.mxu0 0.0
    %417 = vmatpush1.msra.mxu0 %v395
    %418 = vmatprep.subr.mxu0 0.0
    %419 = vmatpush1.msra.mxu0 %v396
    %420 = vmatprep.subr.mxu0 0.0
    %421 = vmatpush1.msra.mxu0 %v397
    %422 = vmatprep.subr.mxu0 0.0
    %423 = vmatpush1.msra.mxu0 %v398
    %424 = vmatprep.subr.mxu0 0.0
    %425 = vmatpush1.msra.mxu0 %v399
    %426 = vmatprep.subr.mxu0 0.0
    %427 = vmatpush1.msra.mxu0 %v400
    %428 = vmatprep.subr.mxu0 0.0
    %429 = vmatpush1.msra.mxu0 %v401
    %430 = vmatprep.subr.mxu0 0.0
    %431 = vmatpush1.msra.mxu0 %v402
    %432 = vmatprep.subr.mxu0 0.0
    %433 = vmatpush1.msra.mxu0 %v403
    %434 = vmatprep.subr.mxu0 0.0
    %435 = vmatpush1.msra.mxu0 %v404
    %436 = vmatprep.subr.mxu0 0.0
    %437 = vmatpush1.msra.mxu0 %v405
    %438 = vmatprep.subr.mxu0 0.0
    %439 = vmatpush1.msra.mxu0 0.0
    %440 = vmatprep.subr.mxu0 0.0
    %441 = vmatpush1.msra.mxu0 0.0
    %442 = vmatprep.subr.mxu0 0.0
    %443 = vmatpush1.msra.mxu0 0.0
    %444 = vmatprep.subr.mxu0 0.0
    %445 = vmatpush1.msra.mxu0 0.0
    %446 = vmatprep.subr.mxu0 0.0
    %447 = vmatpush1.msra.mxu0 0.0
    %448 = vmatprep.subr.mxu0 0.0
    %449 = vmatpush1.msra.mxu0 0.0
    %450 = vmatprep.subr.mxu0 0.0
    %451 = vmatpush1.msra.mxu0 0.0
    %452 = vmatprep.subr.mxu0 0.0
    %453 = vmatpush1.msra.mxu0 0.0
    %454 = vmatprep.subr.mxu0 0.0
    %455 = vmatpush1.msra.mxu0 0.0
    %456 = vmatprep.subr.mxu0 0.0
    %457 = vmatpush1.msra.mxu0 0.0
    %458 = vmatprep.subr.mxu0 0.0
    %459 = vmatpush1.msra.mxu0 0.0
    %460 = vmatprep.subr.mxu0 0.0
    %461 = vmatpush1.msra.mxu0 0.0
    %462 = vmatprep.subr.mxu0 0.0
    %463 = vmatpush1.msra.mxu0 0.0
    %464 = vmatprep.subr.mxu0 0.0
    %465 = vmatpush1.msra.mxu0 0.0
    %466 = vmatprep.subr.mxu0 0.0
    %467 = vmatpush1.msra.mxu0 0.0
    %468 = vmatprep.subr.mxu0 0.0
    %469 = vmatpush1.msra.mxu0 0.0
    %470 = vmatprep.mubr.f32.mxu0 0.0
    %471 = vmatmul.mubr.f32.gmra.mrb[0].mxu0 %v387
    %v472 = vpop.f32.mrb[0].mxu0
    %v473 = vadd.f32 0.0, %v472
    %v474 = vpop.f32.mrb[0].mxu0
    %475 = vdwg.mxu0
    %v476 = vrot.slane %v473, 4
    %v477 = vadd.f32 %v473, %v476
    %v478 = vrot.slane %v477, 2
    %v479 = vadd.f32 %v477, %v478
    %v480 = vrot.slane %v479, 1
    %v481 = vadd.f32 %v479, %v480
    %482 = vmatprep.subr.mxu0 0.0
    %483 = vmatpush1.msra.mxu0 %v390
    %484 = vmatprep.subr.mxu0 0.0
    %485 = vmatpush1.msra.mxu0 %v391
    %486 = vmatprep.subr.mxu0 0.0
    %487 = vmatpush1.msra.mxu0 %v392
    %488 = vmatprep.subr.mxu0 0.0
    %489 = vmatpush1.msra.mxu0 %v393
    %490 = vmatprep.subr.mxu0 0.0
    %491 = vmatpush1.msra.mxu0 %v394
    %492 = vmatprep.subr.mxu0 0.0
    %493 = vmatpush1.msra.mxu0 %v395
    %494 = vmatprep.subr.mxu0 0.0
    %495 = vmatpush1.msra.mxu0 %v396
    %496 = vmatprep.subr.mxu0 0.0
    %497 = vmatpush1.msra.mxu0 %v397
    %498 = vmatprep.subr.mxu0 0.0
    %499 = vmatpush1.msra.mxu0 %v398
    %500 = vmatprep.subr.mxu0 0.0
    %501 = vmatpush1.msra.mxu0 %v399
    %502 = vmatprep.subr.mxu0 0.0
    %503 = vmatpush1.msra.mxu0 %v400
    %504 = vmatprep.subr.mxu0 0.0
    %505 = vmatpush1.msra.mxu0 %v401
    %506 = vmatprep.subr.mxu0 0.0
    %507 = vmatpush1.msra.mxu0 %v402
    %508 = vmatprep.subr.mxu0 0.0
    %509 = vmatpush1.msra.mxu0 %v403
    %510 = vmatprep.subr.mxu0 0.0
    %511 = vmatpush1.msra.mxu0 %v404
    %512 = vmatprep.subr.mxu0 0.0
    %513 = vmatpush1.msra.mxu0 %v405
    %514 = vmatprep.subr.mxu0 0.0
    %515 = vmatpush1.msra.mxu0 0.0
    %516 = vmatprep.subr.mxu0 0.0
    %517 = vmatpush1.msra.mxu0 0.0
    %518 = vmatprep.subr.mxu0 0.0
    %519 = vmatpush1.msra.mxu0 0.0
    %520 = vmatprep.subr.mxu0 0.0
    %521 = vmatpush1.msra.mxu0 0.0
    %522 = vmatprep.subr.mxu0 0.0
    %523 = vmatpush1.msra.mxu0 0.0
    %524 = vmatprep.subr.mxu0 0.0
    %525 = vmatpush1.msra.mxu0 0.0
    %526 = vmatprep.subr.mxu0 0.0
    %527 = vmatpush1.msra.mxu0 0.0
    %528 = vmatprep.subr.mxu0 0.0
    %529 = vmatpush1.msra.mxu0 0.0
    %530 = vmatprep.subr.mxu0 0.0
    %531 = vmatpush1.msra.mxu0 0.0
    %532 = vmatprep.subr.mxu0 0.0
    %533 = vmatpush1.msra.mxu0 0.0
    %534 = vmatprep.subr.mxu0 0.0
    %535 = vmatpush1.msra.mxu0 0.0
    %536 = vmatprep.subr.mxu0 0.0
    %537 = vmatpush1.msra.mxu0 0.0
    %538 = vmatprep.subr.mxu0 0.0
    %539 = vmatpush1.msra.mxu0 0.0
    %540 = vmatprep.subr.mxu0 0.0
    %541 = vmatpush1.msra.mxu0 0.0
    %542 = vmatprep.subr.mxu0 0.0
    %543 = vmatpush1.msra.mxu0 0.0
    %544 = vmatprep.subr.mxu0 0.0
    %545 = vmatpush1.msra.mxu0 0.0
    %546 = vmatprep.mubr.f32.mxu0 0.0
    %547 = vmatmul.mubr.f32.gmra.mrb[0].mxu0 %v389
    %v548 = vpop.f32.mrb[0].mxu0
    %v549 = vadd.f32 0.0, %v548
    %v550 = vpop.f32.mrb[0].mxu0
    %551 = vdwg.mxu0
    %v552 = vrot.slane %v549, 4
    %v553 = vadd.f32 %v549, %v552
    %v554 = vrot.slane %v553, 2
    %v555 = vadd.f32 %v553, %v554
    %v556 = vrot.slane %v555, 1
    %v557 = vadd.f32 %v555, %v556
    %v558 = vmul.f32 %v481, 0.0078125
    %v559 = vmul.f32 %v557, 0.0078125
    %v560 = vmul.f32 %v558, %v558
    %v561 = vsub.f32 %v559, %v560
    %v562 = vmax.f32 %v561, 0.0
    %v563 = vld [vmem:[%s3] sm:$0x1]
    %v564 = vadd.f32 %v562, 1e-05
    %v565 = vrsqrt.pop %v564
    %v566 = vmul.f32 %v563, %v565
    %v567 = vld [vmem:[%s4] sm:$0x1]
    %v568 = vmul.f32 %v558, %v566
    %v569 = vsub.f32 %v567, %v568
    %v571 = vlaneseq
    %v572 = vshrl.u32 %v571, 7
    %v573 = vsub.s32 0, %v572
    %v574 = vrot.slane %v566, %v573
    %v576 = vmul.f32 %v374, %v574
    %v578 = vlaneseq
    %v579 = vshrl.u32 %v578, 7
    %v580 = vsub.s32 0, %v579
    %v581 = vrot.slane %v569, %v580
    %v583 = vadd.f32 %v576, %v581
    %v584 = vmax.f32 %v583, 0.0
    %v585 = vpack.c.bf16 %v584, %v584
    %586 = vst [vmem:[%s5] sm:$0xf] %v585
    %v587 = vld [vmem:[#allocation2 + $0x8] sm:$0xff]
    %v588 = vmul.f32 %v587, %v574
    %v589 = vadd.f32 %v588, %v581
    %v590 = vmax.f32 %v589, 0.0
    %v591 = vpack.c.bf16 %v590, %v590
    %592 = vst [vmem:[%s5 + $0x4] sm:$0xf] %v591
    %v593 = vld [vmem:[#allocation2 + $0x10] sm:$0xff]
    %v594 = vmul.f32 %v593, %v574
    %v595 = vadd.f32 %v594, %v581
    %v596 = vmax.f32 %v595, 0.0
    %v597 = vpack.c.bf16 %v596, %v596
    %598 = vst [vmem:[%s5 + $0x8] sm:$0xf] %v597
    %v599 = vld [vmem:[#allocation2 + $0x18] sm:$0xff]
    %v600 = vmul.f32 %v599, %v574
    %v601 = vadd.f32 %v600, %v581
    %v602 = vmax.f32 %v601, 0.0
    %v603 = vpack.c.bf16 %v602, %v602
    %604 = vst [vmem:[%s5 + $0xc] sm:$0xf] %v603
  $region29: #{_forward_impl.5} parent=0 // pred_fallthru
    _
  // Predicated region
  $region30: #{_forward_impl.5} parent=0 // pred_check
    _
  $region31: #{_forward_impl.5} parent=0 // pred_check_branch
    %606 = sbr.rel (0) target = $region33
  $region32: #{_forward_impl.5} parent=0 // pred_region
    _
  $region33: #{_forward_impl.5} parent=0 // pred_fallthru
    _
  // Predicated region
  $region34: #{_forward_impl.5} parent=0 // pred_check
    _
  $region35: #{_forward_impl.5} parent=0 // pred_check_branch
    %608 = sbr.rel (0) target = $region37
  $region36: #{_forward_impl.5} parent=0 // pred_region
    _
  $region37: #{_forward_impl.5} parent=0 // pred_fallthru
    _

// kernel: _forward_impl.4
$region0: #{_forward_impl.4}
  #allocation0 [shape = 'u32[]', space=smem, size = 0x4, offset = 0x4, fixed_abs, tag = 'smem constant byte address 0x4 - core index']
  #allocation1 [shape = 'u32[144,128]{1,0:T(1,128)}', space=vmem, size = 0x12000, scoped, tag = 'internal scratch']
  #allocation2 [shape = 'f32[8,512]{1,0:T(8,128)}', space=vmem, size = 0x4000, scoped, tag = 'scratch operand']
  %s0 = inlined_call_operand.vmem [shape: bf16[8,128], index: 0, kind: input, shape index: {}]
  %s1 = inlined_call_operand.hbm [shape: bf16[128,512], index: 1, kind: input, shape index: {}]
  %s2 = inlined_call_operand.hbm [shape: f32[512,512], index: 2, kind: input, shape index: {}]
  %s3 = inlined_call_operand.vmem [shape: f32[1,512], index: 3, kind: input, shape index: {}]
  %s4 = inlined_call_operand.vmem [shape: f32[1,512], index: 4, kind: input, shape index: {}]
  %s5 = inlined_call_operand.vmem [shape: bf16[8,512], index: 5, kind: output, shape index: {}]
  %s6 = sld [smem:[#allocation0]]
  $region46: #{_forward_impl.4} parent=0
    _
  %s8 = ssub.s32 1, %s6
  %s9 = scalar_select 0, %s8, %s6
  $region1: #{_forward_impl.4} parent=0
    #allocation3 [shape = 'u8[131072]{0}', space=vmem, size = 0x20000, scoped, tag = 'input window, operand 1, single buffered']
    #allocation4 [shape = 's32[1]{0}', space=sflag, size = 0x4, scoped, tag = 'scoped memory for _forward_impl.4']
    #allocation5 [shape = 'u8[1048576]{0}', space=vmem, size = 0x100000, scoped, tag = 'input window, operand 2, single buffered']
    #allocation6 [shape = 's32[1]{0}', space=sflag, size = 0x4, scoped, tag = 'scoped memory for _forward_impl.4']
    %10 = vsyncpa [#allocation4], 0
    %11 = vsyncpa [#allocation6], 0
    // Predicated region
    $region2: #{_forward_impl.4} parent=1 // pred_check
      _
    $region3: #{_forward_impl.4} parent=1 // pred_check_branch
      %13 = sbr.rel (0) target = $region5
    $region4: #{_forward_impl.4} parent=1 // pred_region
      _
    $region5: #{_forward_impl.4} parent=1 // pred_fallthru
      _
    // Predicated region
    $region6: #{_forward_impl.4} parent=1 // pred_check
      _
    $region7: #{_forward_impl.4} parent=1 // pred_check_branch
      %15 = sbr.rel (0) target = $region9
    $region8: #{_forward_impl.4} parent=1 // pred_region
      %s17 = ssub.s32 4096, 4096
      %18 = vsyncadd [#allocation4], %s17
      %s19 = sshll.u32 [#allocation3], 4
      %s20 = int_to_ptr.vmem [resolvable:$true] %s19
      %25 = dma.hbm_to_vmem [thread:$0]  %s1, 4096, %s20, [#allocation4], 256, 256, 16
    $region9: #{_forward_impl.4} parent=1 // pred_fallthru
      _
    // Predicated region
    $region10: #{_forward_impl.4} parent=1 // pred_check
      _
    $region11: #{_forward_impl.4} parent=1 // pred_check_branch
      %27 = sbr.rel (0) target = $region13
    $region12: #{_forward_impl.4} parent=1 // pred_region
      %s29 = ssub.s32 32768, 32768
      %30 = vsyncadd [#allocation6], %s29
      %s31 = sshll.u32 [#allocation5], 4
      %s32 = int_to_ptr.vmem [resolvable:$true] %s31
      %37 = dma.hbm_to_vmem [thread:$0]  %s2, 32768, %s32, [#allocation6], 512, 512, 32
    $region13: #{_forward_impl.4} parent=1 // pred_fallthru
      _
    // Predicated region
    $region14: #{_forward_impl.4} parent=1 // pred_check
      _
    $region15: #{_forward_impl.4} parent=1 // pred_check_branch
      %39 = sbr.rel (0) target = $region17
    $region16: #{_forward_impl.4} parent=1 // pred_region
      _
    $region17: #{_forward_impl.4} parent=1 // pred_fallthru
      _
    // Predicated region
    $region18: #{_forward_impl.4} parent=1 // pred_check
      _
    $region19: #{_forward_impl.4} parent=1 // pred_check_branch
      %41 = sbr.rel (0) target = $region21
    $region20: #{_forward_impl.4} parent=1 // pred_region
      _
    $region21: #{_forward_impl.4} parent=1 // pred_fallthru
      _
    // Predicated region
    $region22: #{_forward_impl.4} parent=1 // pred_check
      _
    $region23: #{_forward_impl.4} parent=1 // pred_check_branch
      %43 = sbr.rel (0) target = $region25
    $region24: #{_forward_impl.4} parent=1 // pred_region
      %44 = dma.done [#allocation4], 4096
    $region25: #{_forward_impl.4} parent=1 // pred_fallthru
      _
    // Predicated region
    $region26: #{_forward_impl.4} parent=1 // pred_check
      _
    $region27: #{_forward_impl.4} parent=1 // pred_check_branch
      %46 = sbr.rel (0) target = $region29
    $region28: #{_forward_impl.4} parent=1 // pred_region
      %47 = dma.done [#allocation6], 32768
    $region29: #{_forward_impl.4} parent=1 // pred_fallthru
      _
    %p49 = scmp.eq.s32.totalorder 0, 0
    // Predicated region
    $region30: #{_forward_impl.4} parent=1 // pred_check
      %p50 = pneg %p49
    $region31: #{_forward_impl.4} parent=1 // pred_check_branch
      %52 = sbr.rel (%p50) target = $region33
    $region32: #{_forward_impl.4} parent=1 // pred_region
      %53 = vst [vmem:[#allocation2] sm:$0xff] 0.0
      %54 = vst [vmem:[#allocation2 + $0x8] sm:$0xff] 0.0
      %55 = vst [vmem:[#allocation2 + $0x10] sm:$0xff] 0.0
      %56 = vst [vmem:[#allocation2 + $0x18] sm:$0xff] 0.0
    $region33: #{_forward_impl.4} parent=1 // pred_fallthru
      _
    %v57 = vld [vmem:[#allocation2] sm:$0xff]
    %v58 = vld [vmem:[#allocation2 + $0x8] sm:$0xff]
    %v59 = vld [vmem:[#allocation2 + $0x10] sm:$0xff]
    %v60 = vld [vmem:[#allocation2 + $0x18] sm:$0xff]
    %v61 = vld [vmem:[%s0] sm:$0xf]
    %v62 = vld [vmem:[#allocation3] sm:$0xff]
    %v63 = vld [vmem:[#allocation3 + $0x8] sm:$0xff]
    %v64 = vld [vmem:[#allocation3 + $0x10] sm:$0xff]
    %v65 = vld [vmem:[#allocation3 + $0x18] sm:$0xff]
    %v66 = vld [vmem:[#allocation3 + $0x20] sm:$0xff]
    %v67 = vld [vmem:[#allocation3 + $0x28] sm:$0xff]
    %v68 = vld [vmem:[#allocation3 + $0x30] sm:$0xff]
    %v69 = vld [vmem:[#allocation3 + $0x38] sm:$0xff]
    %v70 = vld [vmem:[#allocation3 + $0x40] sm:$0xff]
    %v71 = vld [vmem:[#allocation3 + $0x48] sm:$0xff]
    %v72 = vld [vmem:[#allocation3 + $0x50] sm:$0xff]
    %v73 = vld [vmem:[#allocation3 + $0x58] sm:$0xff]
    %v74 = vld [vmem:[#allocation3 + $0x60] sm:$0xff]
    %v75 = vld [vmem:[#allocation3 + $0x68] sm:$0xff]
    %v76 = vld [vmem:[#allocation3 + $0x70] sm:$0xff]
    %v77 = vld [vmem:[#allocation3 + $0x78] sm:$0xff]
    %v78 = vld [vmem:[#allocation3 + $0x80] sm:$0xff]
    %v79 = vld [vmem:[#allocation3 + $0x88] sm:$0xff]
    %v80 = vld [vmem:[#allocation3 + $0x90] sm:$0xff]
    %v81 = vld [vmem:[#allocation3 + $0x98] sm:$0xff]
    %v82 = vld [vmem:[#allocation3 + $0xa0] sm:$0xff]
    %v83 = vld [vmem:[#allocation3 + $0xa8] sm:$0xff]
    %v84 = vld [vmem:[#allocation3 + $0xb0] sm:$0xff]
    %v85 = vld [vmem:[#allocation3 + $0xb8] sm:$0xff]
    %v86 = vld [vmem:[#allocation3 + $0xc0] sm:$0xff]
    %v87 = vld [vmem:[#allocation3 + $0xc8] sm:$0xff]
    %v88 = vld [vmem:[#allocation3 + $0xd0] sm:$0xff]
    %v89 = vld [vmem:[#allocation3 + $0xd8] sm:$0xff]
    %v90 = vld [vmem:[#allocation3 + $0xe0] sm:$0xff]
    %v91 = vld [vmem:[#allocation3 + $0xe8] sm:$0xff]
    %v92 = vld [vmem:[#allocation3 + $0xf0] sm:$0xff]
    %v93 = vld [vmem:[#allocation3 + $0xf8] sm:$0xff]
    %v126 = vunpack.c.l.b16 %v62
    %v127 = vunpack.c.h.b16 %v62
    %v128 = vunpack.c.l.b16 %v63
    %v129 = vunpack.c.h.b16 %v63
    %v130 = vunpack.c.l.b16 %v64
    %v131 = vunpack.c.h.b16 %v64
    %v132 = vunpack.c.l.b16 %v65
    %v133 = vunpack.c.h.b16 %v65
    %v134 = vunpack.c.l.b16 %v66
    %v135 = vunpack.c.h.b16 %v66
    %v136 = vunpack.c.l.b16 %v67
    %v137 = vunpack.c.h.b16 %v67
    %v138 = vunpack.c.l.b16 %v68
    %v139 = vunpack.c.h.b16 %v68
    %v140 = vunpack.c.l.b16 %v69
    %v141 = vunpack.c.h.b16 %v69
    %v142 = vunpack.c.l.b16 %v70
    %v143 = vunpack.c.h.b16 %v70
    %v144 = vunpack.c.l.b16 %v71
    %v145 = vunpack.c.h.b16 %v71
    %v146 = vunpack.c.l.b16 %v72
    %v147 = vunpack.c.h.b16 %v72
    %v148 = vunpack.c.l.b16 %v73
    %v149 = vunpack.c.h.b16 %v73
    %v150 = vunpack.c.l.b16 %v74
    %v151 = vunpack.c.h.b16 %v74
    %v152 = vunpack.c.l.b16 %v75
    %v153 = vunpack.c.h.b16 %v75
    %v154 = vunpack.c.l.b16 %v76
    %v155 = vunpack.c.h.b16 %v76
    %v156 = vunpack.c.l.b16 %v77
    %v157 = vunpack.c.h.b16 %v77
    %v158 = vunpack.c.l.b16 %v78
    %v159 = vunpack.c.h.b16 %v78
    %v160 = vunpack.c.l.b16 %v79
    %v161 = vunpack.c.h.b16 %v79
    %v162 = vunpack.c.l.b16 %v80
    %v163 = vunpack.c.h.b16 %v80
    %v164 = vunpack.c.l.b16 %v81
    %v165 = vunpack.c.h.b16 %v81
    %v166 = vunpack.c.l.b16 %v82
    %v167 = vunpack.c.h.b16 %v82
    %v168 = vunpack.c.l.b16 %v83
    %v169 = vunpack.c.h.b16 %v83
    %v170 = vunpack.c.l.b16 %v84
    %v171 = vunpack.c.h.b16 %v84
    %v172 = vunpack.c.l.b16 %v85
    %v173 = vunpack.c.h.b16 %v85
    %v174 = vunpack.c.l.b16 %v86
    %v175 = vunpack.c.h.b16 %v86
    %v176 = vunpack.c.l.b16 %v87
    %v177 = vunpack.c.h.b16 %v87
    %v178 = vunpack.c.l.b16 %v88
    %v179 = vunpack.c.h.b16 %v88
    %v180 = vunpack.c.l.b16 %v89
    %v181 = vunpack.c.h.b16 %v89
    %v182 = vunpack.c.l.b16 %v90
    %v183 = vunpack.c.h.b16 %v90
    %v184 = vunpack.c.l.b16 %v91
    %v185 = vunpack.c.h.b16 %v91
    %v186 = vunpack.c.l.b16 %v92
    %v187 = vunpack.c.h.b16 %v92
    %v188 = vunpack.c.l.b16 %v93
    %v189 = vunpack.c.h.b16 %v93
    %v190 = vpack.c.b16 %v130, %v126
    %v191 = vpack.c.b16 %v131, %v127
    %v192 = vpack.c.b16 %v132, %v128
    %v193 = vpack.c.b16 %v133, %v129
    %v194 = vpack.c.b16 %v138, %v134
    %v195 = vpack.c.b16 %v139, %v135
    %v196 = vpack.c.b16 %v140, %v136
    %v197 = vpack.c.b16 %v141, %v137
    %v198 = vpack.c.b16 %v146, %v142
    %v199 = vpack.c.b16 %v147, %v143
    %v200 = vpack.c.b16 %v148, %v144
    %v201 = vpack.c.b16 %v149, %v145
    %v202 = vpack.c.b16 %v154, %v150
    %v203 = vpack.c.b16 %v155, %v151
    %v204 = vpack.c.b16 %v156, %v152
    %v205 = vpack.c.b16 %v157, %v153
    %v206 = vpack.c.b16 %v162, %v158
    %v207 = vpack.c.b16 %v163, %v159
    %v208 = vpack.c.b16 %v164, %v160
    %v209 = vpack.c.b16 %v165, %v161
    %v210 = vpack.c.b16 %v170, %v166
    %v211 = vpack.c.b16 %v171, %v167
    %v212 = vpack.c.b16 %v172, %v168
    %v213 = vpack.c.b16 %v173, %v169
    %v214 = vpack.c.b16 %v178, %v174
    %v215 = vpack.c.b16 %v179, %v175
    %v216 = vpack.c.b16 %v180, %v176
    %v217 = vpack.c.b16 %v181, %v177
    %v218 = vpack.c.b16 %v186, %v182
    %v219 = vpack.c.b16 %v187, %v183
    %v220 = vpack.c.b16 %v188, %v184
    %v221 = vpack.c.b16 %v189, %v185
    %254 = vmatprep.subr.bf16.mxu0 %v191
    %255 = vmatpush1.bf16.msra.mxu0 %v190
    %256 = vmatprep.subr.bf16.mxu0 %v195
    %257 = vmatpush1.bf16.msra.mxu0 %v194
    %258 = vmatprep.subr.bf16.mxu0 %v199
    %259 = vmatpush1.bf16.msra.mxu0 %v198
    %260 = vmatprep.subr.bf16.mxu0 %v203
    %261 = vmatpush1.bf16.msra.mxu0 %v202
    %262 = vmatprep.subr.bf16.mxu0 %v207
    %263 = vmatpush1.bf16.msra.mxu0 %v206
    %264 = vmatprep.subr.bf16.mxu0 %v211
    %265 = vmatpush1.bf16.msra.mxu0 %v210
    %266 = vmatprep.subr.bf16.mxu0 %v215
    %267 = vmatpush1.bf16.msra.mxu0 %v214
    %268 = vmatprep.subr.bf16.mxu0 %v219
    %269 = vmatpush1.bf16.msra.mxu0 %v218
    %270 = vmatprep.subr.bf16.mxu0 0
    %271 = vmatpush1.bf16.msra.mxu0 0
    %272 = vmatprep.subr.bf16.mxu0 0
    %273 = vmatpush1.bf16.msra.mxu0 0
    %274 = vmatprep.subr.bf16.mxu0 0
    %275 = vmatpush1.bf16.msra.mxu0 0
    %276 = vmatprep.subr.bf16.mxu0 0
    %277 = vmatpush1.bf16.msra.mxu0 0
    %278 = vmatprep.subr.bf16.mxu0 0
    %279 = vmatpush1.bf16.msra.mxu0 0
    %280 = vmatprep.subr.bf16.mxu0 0
    %281 = vmatpush1.bf16.msra.mxu0 0
    %282 = vmatprep.subr.bf16.mxu0 0
    %283 = vmatpush1.bf16.msra.mxu0 0
    %284 = vmatprep.subr.bf16.mxu0 0
    %285 = vmatpush1.bf16.msra.mxu0 0
    %286 = vmatprep.mubr.bf16.mxu0 0
    %287 = vmatmul.mubr.bf16.gmra.mrb[0].mxu0 %v61
    %v288 = vpop.f32.mrb[0].mxu0
    %v289 = vadd.f32 0.0, %v288
    %v290 = vpop.f32.mrb[0].mxu0
    %v291 = vadd.f32 0.0, %v290
    %v292 = vpop.f32.mrb[0].mxu0
    %v293 = vpop.f32.mrb[0].mxu0
    %294 = vdwg.mxu0
    %295 = vmatprep.subr.bf16.mxu0 %v193
    %296 = vmatpush1.bf16.msra.mxu0 %v192
    %297 = vmatprep.subr.bf16.mxu0 %v197
    %298 = vmatpush1.bf16.msra.mxu0 %v196
    %299 = vmatprep.subr.bf16.mxu0 %v201
    %300 = vmatpush1.bf16.msra.mxu0 %v200
    %301 = vmatprep.subr.bf16.mxu0 %v205
    %302 = vmatpush1.bf16.msra.mxu0 %v204
    %303 = vmatprep.subr.bf16.mxu0 %v209
    %304 = vmatpush1.bf16.msra.mxu0 %v208
    %305 = vmatprep.subr.bf16.mxu0 %v213
    %306 = vmatpush1.bf16.msra.mxu0 %v212
    %307 = vmatprep.subr.bf16.mxu0 %v217
    %308 = vmatpush1.bf16.msra.mxu0 %v216
    %309 = vmatprep.subr.bf16.mxu0 %v221
    %310 = vmatpush1.bf16.msra.mxu0 %v220
    %311 = vmatprep.subr.bf16.mxu0 0
    %312 = vmatpush1.bf16.msra.mxu0 0
    %313 = vmatprep.subr.bf16.mxu0 0
    %314 = vmatpush1.bf16.msra.mxu0 0
    %315 = vmatprep.subr.bf16.mxu0 0
    %316 = vmatpush1.bf16.msra.mxu0 0
    %317 = vmatprep.subr.bf16.mxu0 0
    %318 = vmatpush1.bf16.msra.mxu0 0
    %319 = vmatprep.subr.bf16.mxu0 0
    %320 = vmatpush1.bf16.msra.mxu0 0
    %321 = vmatprep.subr.bf16.mxu0 0
    %322 = vmatpush1.bf16.msra.mxu0 0
    %323 = vmatprep.subr.bf16.mxu0 0
    %324 = vmatpush1.bf16.msra.mxu0 0
    %325 = vmatprep.subr.bf16.mxu0 0
    %326 = vmatpush1.bf16.msra.mxu0 0
    %327 = vmatprep.mubr.bf16.mxu0 0
    %328 = vmatmul.mubr.bf16.gmra.mrb[0].mxu0 %v61
    %v329 = vpop.f32.mrb[0].mxu0
    %v330 = vadd.f32 0.0, %v329
    %v331 = vpop.f32.mrb[0].mxu0
    %v332 = vadd.f32 0.0, %v331
    %v333 = vpop.f32.mrb[0].mxu0
    %v334 = vpop.f32.mrb[0].mxu0
    %335 = vdwg.mxu0
    %v336 = vadd.f32 %v57, %v289
    %v337 = vadd.f32 %v58, %v291
    %v338 = vadd.f32 %v59, %v330
    %v339 = vadd.f32 %v60, %v332
    %340 = vst [vmem:[#allocation2] sm:$0xff] %v336
    %341 = vst [vmem:[#allocation2 + $0x8] sm:$0xff] %v337
    %342 = vst [vmem:[#allocation2 + $0x10] sm:$0xff] %v338
    %343 = vst [vmem:[#allocation2 + $0x18] sm:$0xff] %v339
    // Predicated region
    $region34: #{_forward_impl.4} parent=1 // pred_check
      %p344 = pneg %p49
    $region35: #{_forward_impl.4} parent=1 // pred_check_branch
      %346 = sbr.rel (%p344) target = $region37
    $region36: #{_forward_impl.4} parent=1 // pred_region
      %v347 = vld [vmem:[#allocation2] sm:$0xff]
      %v348 = vld [vmem:[#allocation2 + $0x8] sm:$0xff]
      %v349 = vld [vmem:[#allocation2 + $0x10] sm:$0xff]
      %v350 = vld [vmem:[#allocation2 + $0x18] sm:$0xff]
      %v351 = vadd.f32 %v347, 0.0
      %v352 = vadd.f32 %v348, 0.0
      %v353 = vadd.f32 %v349, 0.0
      %v354 = vadd.f32 %v350, 0.0
      %v355 = vmul.f32 %v347, %v347
      %v356 = vmul.f32 %v348, %v348
      %v357 = vmul.f32 %v349, %v349
      %v358 = vmul.f32 %v350, %v350
      %v359 = vadd.f32 %v355, 0.0
      %v360 = vadd.f32 %v356, 0.0
      %v361 = vadd.f32 %v357, 0.0
      %v362 = vadd.f32 %v358, 0.0
      %v363 = vld [vmem:[#allocation5] sm:$0xff]
      %v364 = vld [vmem:[#allocation5 + $0x8] sm:$0xff]
      %v365 = vld [vmem:[#allocation5 + $0x10] sm:$0xff]
      %v366 = vld [vmem:[#allocation5 + $0x18] sm:$0xff]
      %v367 = vld [vmem:[#allocation5 + $0x20] sm:$0xff]
      %v368 = vld [vmem:[#allocation5 + $0x28] sm:$0xff]
      %v369 = vld [vmem:[#allocation5 + $0x30] sm:$0xff]
      %v370 = vld [vmem:[#allocation5 + $0x38] sm:$0xff]
      %v371 = vld [vmem:[#allocation5 + $0x40] sm:$0xff]
      %v372 = vld [vmem:[#allocation5 + $0x48] sm:$0xff]
      %v373 = vld [vmem:[#allocation5 + $0x50] sm:$0xff]
      %v374 = vld [vmem:[#allocation5 + $0x58] sm:$0xff]
      %v375 = vld [vmem:[#allocation5 + $0x60] sm:$0xff]
      %v376 = vld [vmem:[#allocation5 + $0x68] sm:$0xff]
      %v377 = vld [vmem:[#allocation5 + $0x70] sm:$0xff]
      %v378 = vld [vmem:[#allocation5 + $0x78] sm:$0xff]
      %v379 = vld [vmem:[#allocation5 + $0x80] sm:$0xff]
      %v380 = vld [vmem:[#allocation5 + $0x88] sm:$0xff]
      %v381 = vld [vmem:[#allocation5 + $0x90] sm:$0xff]
      %v382 = vld [vmem:[#allocation5 + $0x98] sm:$0xff]
      %v383 = vld [vmem:[#allocation5 + $0xa0] sm:$0xff]
      %v384 = vld [vmem:[#allocation5 + $0xa8] sm:$0xff]
      %v385 = vld [vmem:[#allocation5 + $0xb0] sm:$0xff]
      %v386 = vld [vmem:[#allocation5 + $0xb8] sm:$0xff]
      %v387 = vld [vmem:[#allocation5 + $0xc0] sm:$0xff]
      %v388 = vld [vmem:[#allocation5 + $0xc8] sm:$0xff]
      %v389 = vld [vmem:[#allocation5 + $0xd0] sm:$0xff]
      %v390 = vld [vmem:[#allocation5 + $0xd8] sm:$0xff]
      %v391 = vld [vmem:[#allocation5 + $0xe0] sm:$0xff]
      %v392 = vld [vmem:[#allocation5 + $0xe8] sm:$0xff]
      %v393 = vld [vmem:[#allocation5 + $0xf0] sm:$0xff]
      %v394 = vld [vmem:[#allocation5 + $0xf8] sm:$0xff]
      %v395 = vld [vmem:[#allocation5 + $0x100] sm:$0xff]
      %v396 = vld [vmem:[#allocation5 + $0x108] sm:$0xff]
      %v397 = vld [vmem:[#allocation5 + $0x110] sm:$0xff]
      %v398 = vld [vmem:[#allocation5 + $0x118] sm:$0xff]
      %v399 = vld [vmem:[#allocation5 + $0x120] sm:$0xff]
      %v400 = vld [vmem:[#allocation5 + $0x128] sm:$0xff]
      %v401 = vld [vmem:[#allocation5 + $0x130] sm:$0xff]
      %v402 = vld [vmem:[#allocation5 + $0x138] sm:$0xff]
      %v403 = vld [vmem:[#allocation5 + $0x140] sm:$0xff]
      %v404 = vld [vmem:[#allocation5 + $0x148] sm:$0xff]
      %v405 = vld [vmem:[#allocation5 + $0x150] sm:$0xff]
      %v406 = vld [vmem:[#allocation5 + $0x158] sm:$0xff]
      %v407 = vld [vmem:[#allocation5 + $0x160] sm:$0xff]
      %v408 = vld [vmem:[#allocation5 + $0x168] sm:$0xff]
      %v409 = vld [vmem:[#allocation5 + $0x170] sm:$0xff]
      %v410 = vld [vmem:[#allocation5 + $0x178] sm:$0xff]
      %v411 = vld [vmem:[#allocation5 + $0x180] sm:$0xff]
      %v412 = vld [vmem:[#allocation5 + $0x188] sm:$0xff]
      %v413 = vld [vmem:[#allocation5 + $0x190] sm:$0xff]
      %v414 = vld [vmem:[#allocation5 + $0x198] sm:$0xff]
      %v415 = vld [vmem:[#allocation5 + $0x1a0] sm:$0xff]
      %v416 = vld [vmem:[#allocation5 + $0x1a8] sm:$0xff]
      %v417 = vld [vmem:[#allocation5 + $0x1b0] sm:$0xff]
      %v418 = vld [vmem:[#allocation5 + $0x1b8] sm:$0xff]
      %v419 = vld [vmem:[#allocation5 + $0x1c0] sm:$0xff]
      %v420 = vld [vmem:[#allocation5 + $0x1c8] sm:$0xff]
      %v421 = vld [vmem:[#allocation5 + $0x1d0] sm:$0xff]
      %v422 = vld [vmem:[#allocation5 + $0x1d8] sm:$0xff]
      %v423 = vld [vmem:[#allocation5 + $0x1e0] sm:$0xff]
      %v424 = vld [vmem:[#allocation5 + $0x1e8] sm:$0xff]
      %v425 = vld [vmem:[#allocation5 + $0x1f0] sm:$0xff]
      %v426 = vld [vmem:[#allocation5 + $0x1f8] sm:$0xff]
      %v427 = vld [vmem:[#allocation5 + $0x200] sm:$0xff]
      %v428 = vld [vmem:[#allocation5 + $0x208] sm:$0xff]
      %v429 = vld [vmem:[#allocation5 + $0x210] sm:$0xff]
      %v430 = vld [vmem:[#allocation5 + $0x218] sm:$0xff]
      %v431 = vld [vmem:[#allocation5 + $0x220] sm:$0xff]
      %v432 = vld [vmem:[#allocation5 + $0x228] sm:$0xff]
      %v433 = vld [vmem:[#allocation5 + $0x230] sm:$0xff]
      %v434 = vld [vmem:[#allocation5 + $0x238] sm:$0xff]
      %v435 = vld [vmem:[#allocation5 + $0x240] sm:$0xff]
      %v436 = vld [vmem:[#allocation5 + $0x248] sm:$0xff]
      %v437 = vld [vmem:[#allocation5 + $0x250] sm:$0xff]
      %v438 = vld [vmem:[#allocation5 + $0x258] sm:$0xff]
      %v439 = vld [vmem:[#allocation5 + $0x260] sm:$0xff]
      %v440 = vld [vmem:[#allocation5 + $0x268] sm:$0xff]
      %v441 = vld [vmem:[#allocation5 + $0x270] sm:$0xff]
      %v442 = vld [vmem:[#allocation5 + $0x278] sm:$0xff]
      %v443 = vld [vmem:[#allocation5 + $0x280] sm:$0xff]
      %v444 = vld [vmem:[#allocation5 + $0x288] sm:$0xff]
      %v445 = vld [vmem:[#allocation5 + $0x290] sm:$0xff]
      %v446 = vld [vmem:[#allocation5 + $0x298] sm:$0xff]
      %v447 = vld [vmem:[#allocation5 + $0x2a0] sm:$0xff]
      %v448 = vld [vmem:[#allocation5 + $0x2a8] sm:$0xff]
      %v449 = vld [vmem:[#allocation5 + $0x2b0] sm:$0xff]
      %v450 = vld [vmem:[#allocation5 + $0x2b8] sm:$0xff]
      %v451 = vld [vmem:[#allocation5 + $0x2c0] sm:$0xff]
      %v452 = vld [vmem:[#allocation5 + $0x2c8] sm:$0xff]
      %v453 = vld [vmem:[#allocation5 + $0x2d0] sm:$0xff]
      %v454 = vld [vmem:[#allocation5 + $0x2d8] sm:$0xff]
      %v455 = vld [vmem:[#allocation5 + $0x2e0] sm:$0xff]
      %v456 = vld [vmem:[#allocation5 + $0x2e8] sm:$0xff]
      %v457 = vld [vmem:[#allocation5 + $0x2f0] sm:$0xff]
      %v458 = vld [vmem:[#allocation5 + $0x2f8] sm:$0xff]
      %v459 = vld [vmem:[#allocation5 + $0x300] sm:$0xff]
      %v460 = vld [vmem:[#allocation5 + $0x308] sm:$0xff]
      %v461 = vld [vmem:[#allocation5 + $0x310] sm:$0xff]
      %v462 = vld [vmem:[#allocation5 + $0x318] sm:$0xff]
      %v463 = vld [vmem:[#allocation5 + $0x320] sm:$0xff]
      %v464 = vld [vmem:[#allocation5 + $0x328] sm:$0xff]
      %v465 = vld [vmem:[#allocation5 + $0x330] sm:$0xff]
      %v466 = vld [vmem:[#allocation5 + $0x338] sm:$0xff]
      %v467 = vld [vmem:[#allocation5 + $0x340] sm:$0xff]
      %v468 = vld [vmem:[#allocation5 + $0x348] sm:$0xff]
      %v469 = vld [vmem:[#allocation5 + $0x350] sm:$0xff]
      %v470 = vld [vmem:[#allocation5 + $0x358] sm:$0xff]
      %v471 = vld [vmem:[#allocation5 + $0x360] sm:$0xff]
      %v472 = vld [vmem:[#allocation5 + $0x368] sm:$0xff]
      %v473 = vld [vmem:[#allocation5 + $0x370] sm:$0xff]
      %v474 = vld [vmem:[#allocation5 + $0x378] sm:$0xff]
      %v475 = vld [vmem:[#allocation5 + $0x380] sm:$0xff]
      %v476 = vld [vmem:[#allocation5 + $0x388] sm:$0xff]
      %v477 = vld [vmem:[#allocation5 + $0x390] sm:$0xff]
      %v478 = vld [vmem:[#allocation5 + $0x398] sm:$0xff]
      %v479 = vld [vmem:[#allocation5 + $0x3a0] sm:$0xff]
      %v480 = vld [vmem:[#allocation5 + $0x3a8] sm:$0xff]
      %v481 = vld [vmem:[#allocation5 + $0x3b0] sm:$0xff]
      %v482 = vld [vmem:[#allocation5 + $0x3b8] sm:$0xff]
      %v483 = vld [vmem:[#allocation5 + $0x3c0] sm:$0xff]
      %v484 = vld [vmem:[#allocation5 + $0x3c8] sm:$0xff]
      %v485 = vld [vmem:[#allocation5 + $0x3d0] sm:$0xff]
      %v486 = vld [vmem:[#allocation5 + $0x3d8] sm:$0xff]
      %v487 = vld [vmem:[#allocation5 + $0x3e0] sm:$0xff]
      %v488 = vld [vmem:[#allocation5 + $0x3e8] sm:$0xff]
      %v489 = vld [vmem:[#allocation5 + $0x3f0] sm:$0xff]
      %v490 = vld [vmem:[#allocation5 + $0x3f8] sm:$0xff]
      %v491 = vld [vmem:[#allocation5 + $0x400] sm:$0xff]
      %v492 = vld [vmem:[#allocation5 + $0x408] sm:$0xff]
      %v493 = vld [vmem:[#allocation5 + $0x410] sm:$0xff]
      %v494 = vld [vmem:[#allocation5 + $0x418] sm:$0xff]
      %v495 = vld [vmem:[#allocation5 + $0x420] sm:$0xff]
      %v496 = vld [vmem:[#allocation5 + $0x428] sm:$0xff]
      %v497 = vld [vmem:[#allocation5 + $0x430] sm:$0xff]
      %v498 = vld [vmem:[#allocation5 + $0x438] sm:$0xff]
      %v499 = vld [vmem:[#allocation5 + $0x440] sm:$0xff]
      %v500 = vld [vmem:[#allocation5 + $0x448] sm:$0xff]
      %v501 = vld [vmem:[#allocation5 + $0x450] sm:$0xff]
      %v502 = vld [vmem:[#allocation5 + $0x458] sm:$0xff]
      %v503 = vld [vmem:[#allocation5 + $0x460] sm:$0xff]
      %v504 = vld [vmem:[#allocation5 + $0x468] sm:$0xff]
      %v505 = vld [vmem:[#allocation5 + $0x470] sm:$0xff]
      %v506 = vld [vmem:[#allocation5 + $0x478] sm:$0xff]
      %v507 = vld [vmem:[#allocation5 + $0x480] sm:$0xff]
      %v508 = vld [vmem:[#allocation5 + $0x488] sm:$0xff]
      %v509 = vld [vmem:[#allocation5 + $0x490] sm:$0xff]
      %v510 = vld [vmem:[#allocation5 + $0x498] sm:$0xff]
      %v511 = vld [vmem:[#allocation5 + $0x4a0] sm:$0xff]
      %v512 = vld [vmem:[#allocation5 + $0x4a8] sm:$0xff]
      %v513 = vld [vmem:[#allocation5 + $0x4b0] sm:$0xff]
      %v514 = vld [vmem:[#allocation5 + $0x4b8] sm:$0xff]
      %v515 = vld [vmem:[#allocation5 + $0x4c0] sm:$0xff]
      %v516 = vld [vmem:[#allocation5 + $0x4c8] sm:$0xff]
      %v517 = vld [vmem:[#allocation5 + $0x4d0] sm:$0xff]
      %v518 = vld [vmem:[#allocation5 + $0x4d8] sm:$0xff]
      %v519 = vld [vmem:[#allocation5 + $0x4e0] sm:$0xff]
      %v520 = vld [vmem:[#allocation5 + $0x4e8] sm:$0xff]
      %v521 = vld [vmem:[#allocation5 + $0x4f0] sm:$0xff]
      %v522 = vld [vmem:[#allocation5 + $0x4f8] sm:$0xff]
      %v523 = vld [vmem:[#allocation5 + $0x500] sm:$0xff]
      %v524 = vld [vmem:[#allocation5 + $0x508] sm:$0xff]
      %v525 = vld [vmem:[#allocation5 + $0x510] sm:$0xff]
      %v526 = vld [vmem:[#allocation5 + $0x518] sm:$0xff]
      %v527 = vld [vmem:[#allocation5 + $0x520] sm:$0xff]
      %v528 = vld [vmem:[#allocation5 + $0x528] sm:$0xff]
      %v529 = vld [vmem:[#allocation5 + $0x530] sm:$0xff]
      %v530 = vld [vmem:[#allocation5 + $0x538] sm:$0xff]
      %v531 = vld [vmem:[#allocation5 + $0x540] sm:$0xff]
      %v532 = vld [vmem:[#allocation5 + $0x548] sm:$0xff]
      %v533 = vld [vmem:[#allocation5 + $0x550] sm:$0xff]
      %v534 = vld [vmem:[#allocation5 + $0x558] sm:$0xff]
      %v535 = vld [vmem:[#allocation5 + $0x560] sm:$0xff]
      %v536 = vld [vmem:[#allocation5 + $0x568] sm:$0xff]
      %v537 = vld [vmem:[#allocation5 + $0x570] sm:$0xff]
      %v538 = vld [vmem:[#allocation5 + $0x578] sm:$0xff]
      %v539 = vld [vmem:[#allocation5 + $0x580] sm:$0xff]
      %v540 = vld [vmem:[#allocation5 + $0x588] sm:$0xff]
      %v541 = vld [vmem:[#allocation5 + $0x590] sm:$0xff]
      %v542 = vld [vmem:[#allocation5 + $0x598] sm:$0xff]
      %v543 = vld [vmem:[#allocation5 + $0x5a0] sm:$0xff]
      %v544 = vld [vmem:[#allocation5 + $0x5a8] sm:$0xff]
      %v545 = vld [vmem:[#allocation5 + $0x5b0] sm:$0xff]
      %v546 = vld [vmem:[#allocation5 + $0x5b8] sm:$0xff]
      %v547 = vld [vmem:[#allocation5 + $0x5c0] sm:$0xff]
      %v548 = vld [vmem:[#allocation5 + $0x5c8] sm:$0xff]
      %v549 = vld [vmem:[#allocation5 + $0x5d0] sm:$0xff]
      %v550 = vld [vmem:[#allocation5 + $0x5d8] sm:$0xff]
      %v551 = vld [vmem:[#allocation5 + $0x5e0] sm:$0xff]
      %v552 = vld [vmem:[#allocation5 + $0x5e8] sm:$0xff]
      %v553 = vld [vmem:[#allocation5 + $0x5f0] sm:$0xff]
      %v554 = vld [vmem:[#allocation5 + $0x5f8] sm:$0xff]
      %v555 = vld [vmem:[#allocation5 + $0x600] sm:$0xff]
      %v556 = vld [vmem:[#allocation5 + $0x608] sm:$0xff]
      %v557 = vld [vmem:[#allocation5 + $0x610] sm:$0xff]
      %v558 = vld [vmem:[#allocation5 + $0x618] sm:$0xff]
      %v559 = vld [vmem:[#allocation5 + $0x620] sm:$0xff]
      %v560 = vld [vmem:[#allocation5 + $0x628] sm:$0xff]
      %v561 = vld [vmem:[#allocation5 + $0x630] sm:$0xff]
      %v562 = vld [vmem:[#allocation5 + $0x638] sm:$0xff]
      %v563 = vld [vmem:[#allocation5 + $0x640] sm:$0xff]
      %v564 = vld [vmem:[#allocation5 + $0x648] sm:$0xff]
      %v565 = vld [vmem:[#allocation5 + $0x650] sm:$0xff]
      %v566 = vld [vmem:[#allocation5 + $0x658] sm:$0xff]
      %v567 = vld [vmem:[#allocation5 + $0x660] sm:$0xff]
      %v568 = vld [vmem:[#allocation5 + $0x668] sm:$0xff]
      %v569 = vld [vmem:[#allocation5 + $0x670] sm:$0xff]
      %v570 = vld [vmem:[#allocation5 + $0x678] sm:$0xff]
      %v571 = vld [vmem:[#allocation5 + $0x680] sm:$0xff]
      %v572 = vld [vmem:[#allocation5 + $0x688] sm:$0xff]
      %v573 = vld [vmem:[#allocation5 + $0x690] sm:$0xff]
      %v574 = vld [vmem:[#allocation5 + $0x698] sm:$0xff]
      %v575 = vld [vmem:[#allocation5 + $0x6a0] sm:$0xff]
      %v576 = vld [vmem:[#allocation5 + $0x6a8] sm:$0xff]
      %v577 = vld [vmem:[#allocation5 + $0x6b0] sm:$0xff]
      %v578 = vld [vmem:[#allocation5 + $0x6b8] sm:$0xff]
      %v579 = vld [vmem:[#allocation5 + $0x6c0] sm:$0xff]
      %v580 = vld [vmem:[#allocation5 + $0x6c8] sm:$0xff]
      %v581 = vld [vmem:[#allocation5 + $0x6d0] sm:$0xff]
      %v582 = vld [vmem:[#allocation5 + $0x6d8] sm:$0xff]
      %v583 = vld [vmem:[#allocation5 + $0x6e0] sm:$0xff]
      %v584 = vld [vmem:[#allocation5 + $0x6e8] sm:$0xff]
      %v585 = vld [vmem:[#allocation5 + $0x6f0] sm:$0xff]
      %v586 = vld [vmem:[#allocation5 + $0x6f8] sm:$0xff]
      %v587 = vld [vmem:[#allocation5 + $0x700] sm:$0xff]
      %v588 = vld [vmem:[#allocation5 + $0x708] sm:$0xff]
      %v589 = vld [vmem:[#allocation5 + $0x710] sm:$0xff]
      %v590 = vld [vmem:[#allocation5 + $0x718] sm:$0xff]
      %v591 = vld [vmem:[#allocation5 + $0x720] sm:$0xff]
      %v592 = vld [vmem:[#allocation5 + $0x728] sm:$0xff]
      %v593 = vld [vmem:[#allocation5 + $0x730] sm:$0xff]
      %v594 = vld [vmem:[#allocation5 + $0x738] sm:$0xff]
      %v595 = vld [vmem:[#allocation5 + $0x740] sm:$0xff]
      %v596 = vld [vmem:[#allocation5 + $0x748] sm:$0xff]
      %v597 = vld [vmem:[#allocation5 + $0x750] sm:$0xff]
      %v598 = vld [vmem:[#allocation5 + $0x758] sm:$0xff]
      %v599 = vld [vmem:[#allocation5 + $0x760] sm:$0xff]
      %v600 = vld [vmem:[#allocation5 + $0x768] sm:$0xff]
      %v601 = vld [vmem:[#allocation5 + $0x770] sm:$0xff]
      %v602 = vld [vmem:[#allocation5 + $0x778] sm:$0xff]
      %v603 = vld [vmem:[#allocation5 + $0x780] sm:$0xff]
      %v604 = vld [vmem:[#allocation5 + $0x788] sm:$0xff]
      %v605 = vld [vmem:[#allocation5 + $0x790] sm:$0xff]
      %v606 = vld [vmem:[#allocation5 + $0x798] sm:$0xff]
      %v607 = vld [vmem:[#allocation5 + $0x7a0] sm:$0xff]
      %v608 = vld [vmem:[#allocation5 + $0x7a8] sm:$0xff]
      %v609 = vld [vmem:[#allocation5 + $0x7b0] sm:$0xff]
      %v610 = vld [vmem:[#allocation5 + $0x7b8] sm:$0xff]
      %v611 = vld [vmem:[#allocation5 + $0x7c0] sm:$0xff]
      %v612 = vld [vmem:[#allocation5 + $0x7c8] sm:$0xff]
      %v613 = vld [vmem:[#allocation5 + $0x7d0] sm:$0xff]
      %v614 = vld [vmem:[#allocation5 + $0x7d8] sm:$0xff]
      %v615 = vld [vmem:[#allocation5 + $0x7e0] sm:$0xff]
      %v616 = vld [vmem:[#allocation5 + $0x7e8] sm:$0xff]
      %v617 = vld [vmem:[#allocation5 + $0x7f0] sm:$0xff]
      %v618 = vld [vmem:[#allocation5 + $0x7f8] sm:$0xff]
      %619 = vmatprep.subr.mxu0 %v364
      %620 = vmatpush1.msra.mxu0 %v363
      %621 = vmatprep.subr.mxu0 %v368
      %622 = vmatpush1.msra.mxu0 %v367
      %623 = vmatprep.subr.mxu0 %v372
      %624 = vmatpush1.msra.mxu0 %v371
      %625 = vmatprep.subr.mxu0 %v376
      %626 = vmatpush1.msra.mxu0 %v375
      %627 = vmatprep.subr.mxu0 %v380
      %628 = vmatpush1.msra.mxu0 %v379
      %629 = vmatprep.subr.mxu0 %v384
      %630 = vmatpush1.msra.mxu0 %v383
      %631 = vmatprep.subr.mxu0 %v388
      %632 = vmatpush1.msra.mxu0 %v387
      %633 = vmatprep.subr.mxu0 %v392
      %634 = vmatpush1.msra.mxu0 %v391
      %635 = vmatprep.subr.mxu0 %v396
      %636 = vmatpush1.msra.mxu0 %v395
      %637 = vmatprep.subr.mxu0 %v400
      %638 = vmatpush1.msra.mxu0 %v399
      %639 = vmatprep.subr.mxu0 %v404
      %640 = vmatpush1.msra.mxu0 %v403
      %641 = vmatprep.subr.mxu0 %v408
      %642 = vmatpush1.msra.mxu0 %v407
      %643 = vmatprep.subr.mxu0 %v412
      %644 = vmatpush1.msra.mxu0 %v411
      %645 = vmatprep.subr.mxu0 %v416
      %646 = vmatpush1.msra.mxu0 %v415
      %647 = vmatprep.subr.mxu0 %v420
      %648 = vmatpush1.msra.mxu0 %v419
      %649 = vmatprep.subr.mxu0 %v424
      %650 = vmatpush1.msra.mxu0 %v423
      %651 = vmatprep.subr.mxu0 %v428
      %652 = vmatpush1.msra.mxu0 %v427
      %653 = vmatprep.subr.mxu0 %v432
      %654 = vmatpush1.msra.mxu0 %v431
      %655 = vmatprep.subr.mxu0 %v436
      %656 = vmatpush1.msra.mxu0 %v435
      %657 = vmatprep.subr.mxu0 %v440
      %658 = vmatpush1.msra.mxu0 %v439
      %659 = vmatprep.subr.mxu0 %v444
      %660 = vmatpush1.msra.mxu0 %v443
      %661 = vmatprep.subr.mxu0 %v448
      %662 = vmatpush1.msra.mxu0 %v447
      %663 = vmatprep.subr.mxu0 %v452
      %664 = vmatpush1.msra.mxu0 %v451
      %665 = vmatprep.subr.mxu0 %v456
      %666 = vmatpush1.msra.mxu0 %v455
      %667 = vmatprep.subr.mxu0 %v460
      %668 = vmatpush1.msra.mxu0 %v459
      %669 = vmatprep.subr.mxu0 %v464
      %670 = vmatpush1.msra.mxu0 %v463
      %671 = vmatprep.subr.mxu0 %v468
      %672 = vmatpush1.msra.mxu0 %v467
      %673 = vmatprep.subr.mxu0 %v472
      %674 = vmatpush1.msra.mxu0 %v471
      %675 = vmatprep.subr.mxu0 %v476
      %676 = vmatpush1.msra.mxu0 %v475
      %677 = vmatprep.subr.mxu0 %v480
      %678 = vmatpush1.msra.mxu0 %v479
      %679 = vmatprep.subr.mxu0 %v484
      %680 = vmatpush1.msra.mxu0 %v483
      %681 = vmatprep.subr.mxu0 %v488
      %682 = vmatpush1.msra.mxu0 %v487
      %683 = vmatprep.mubr.f32.mxu0 %v352
      %684 = vmatmul.mubr.f32.gmra.mrb[0].mxu0 %v351
      %v685 = vpop.f32.mrb[0].mxu0
      %v686 = vadd.f32 0.0, %v685
      %v687 = vpop.f32.mrb[0].mxu0
      %v688 = vadd.f32 0.0, %v687
      %689 = vdwg.mxu0
      %690 = vmatprep.subr.mxu0 %v492
      %691 = vmatpush1.msra.mxu0 %v491
      %692 = vmatprep.subr.mxu0 %v496
      %693 = vmatpush1.msra.mxu0 %v495
      %694 = vmatprep.subr.mxu0 %v500
      %695 = vmatpush1.msra.mxu0 %v499
      %696 = vmatprep.subr.mxu0 %v504
      %697 = vmatpush1.msra.mxu0 %v503
      %698 = vmatprep.subr.mxu0 %v508
      %699 = vmatpush1.msra.mxu0 %v507
      %700 = vmatprep.subr.mxu0 %v512
      %701 = vmatpush1.msra.mxu0 %v511
      %702 = vmatprep.subr.mxu0 %v516
      %703 = vmatpush1.msra.mxu0 %v515
      %704 = vmatprep.subr.mxu0 %v520
      %705 = vmatpush1.msra.mxu0 %v519
      %706 = vmatprep.subr.mxu0 %v524
      %707 = vmatpush1.msra.mxu0 %v523
      %708 = vmatprep.subr.mxu0 %v528
      %709 = vmatpush1.msra.mxu0 %v527
      %710 = vmatprep.subr.mxu0 %v532
      %711 = vmatpush1.msra.mxu0 %v531
      %712 = vmatprep.subr.mxu0 %v536
      %713 = vmatpush1.msra.mxu0 %v535
      %714 = vmatprep.subr.mxu0 %v540
      %715 = vmatpush1.msra.mxu0 %v539
      %716 = vmatprep.subr.mxu0 %v544
      %717 = vmatpush1.msra.mxu0 %v543
      %718 = vmatprep.subr.mxu0 %v548
      %719 = vmatpush1.msra.mxu0 %v547
      %720 = vmatprep.subr.mxu0 %v552
      %721 = vmatpush1.msra.mxu0 %v551
      %722 = vmatprep.subr.mxu0 %v556
      %723 = vmatpush1.msra.mxu0 %v555
      %724 = vmatprep.subr.mxu0 %v560
      %725 = vmatpush1.msra.mxu0 %v559
      %726 = vmatprep.subr.mxu0 %v564
      %727 = vmatpush1.msra.mxu0 %v563
      %728 = vmatprep.subr.mxu0 %v568
      %729 = vmatpush1.msra.mxu0 %v567
      %730 = vmatprep.subr.mxu0 %v572
      %731 = vmatpush1.msra.mxu0 %v571
      %732 = vmatprep.subr.mxu0 %v576
      %733 = vmatpush1.msra.mxu0 %v575
      %734 = vmatprep.subr.mxu0 %v580
      %735 = vmatpush1.msra.mxu0 %v579
      %736 = vmatprep.subr.mxu0 %v584
      %737 = vmatpush1.msra.mxu0 %v583
      %738 = vmatprep.subr.mxu0 %v588
      %739 = vmatpush1.msra.mxu0 %v587
      %740 = vmatprep.subr.mxu0 %v592
      %741 = vmatpush1.msra.mxu0 %v591
      %742 = vmatprep.subr.mxu0 %v596
      %743 = vmatpush1.msra.mxu0 %v595
      %744 = vmatprep.subr.mxu0 %v600
      %745 = vmatpush1.msra.mxu0 %v599
      %746 = vmatprep.subr.mxu0 %v604
      %747 = vmatpush1.msra.mxu0 %v603
      %748 = vmatprep.subr.mxu0 %v608
      %749 = vmatpush1.msra.mxu0 %v607
      %750 = vmatprep.subr.mxu0 %v612
      %751 = vmatpush1.msra.mxu0 %v611
      %752 = vmatprep.subr.mxu0 %v616
      %753 = vmatpush1.msra.mxu0 %v615
      %754 = vmatprep.mubr.f32.mxu0 %v354
      %755 = vmatmul.mubr.f32.gmra.mrb[0].mxu0 %v353
      %v756 = vpop.f32.mrb[0].mxu0
      %v757 = vadd.f32 %v686, %v756
      %v758 = vpop.f32.mrb[0].mxu0
      %v759 = vadd.f32 %v688, %v758
      %760 = vdwg.mxu0
      %761 = vmatprep.subr.mxu0 %v366
      %762 = vmatpush1.msra.mxu0 %v365
      %763 = vmatprep.subr.mxu0 %v370
      %764 = vmatpush1.msra.mxu0 %v369
      %765 = vmatprep.subr.mxu0 %v374
      %766 = vmatpush1.msra.mxu0 %v373
      %767 = vmatprep.subr.mxu0 %v378
      %768 = vmatpush1.msra.mxu0 %v377
      %769 = vmatprep.subr.mxu0 %v382
      %770 = vmatpush1.msra.mxu0 %v381
      %771 = vmatprep.subr.mxu0 %v386
      %772 = vmatpush1.msra.mxu0 %v385
      %773 = vmatprep.subr.mxu0 %v390
      %774 = vmatpush1.msra.mxu0 %v389
      %775 = vmatprep.subr.mxu0 %v394
      %776 = vmatpush1.msra.mxu0 %v393
      %777 = vmatprep.subr.mxu0 %v398
      %778 = vmatpush1.msra.mxu0 %v397
      %779 = vmatprep.subr.mxu0 %v402
      %780 = vmatpush1.msra.mxu0 %v401
      %781 = vmatprep.subr.mxu0 %v406
      %782 = vmatpush1.msra.mxu0 %v405
      %783 = vmatprep.subr.mxu0 %v410
      %784 = vmatpush1.msra.mxu0 %v409
      %785 = vmatprep.subr.mxu0 %v414
      %786 = vmatpush1.msra.mxu0 %v413
      %787 = vmatprep.subr.mxu0 %v418
      %788 = vmatpush1.msra.mxu0 %v417
      %789 = vmatprep.subr.mxu0 %v422
      %790 = vmatpush1.msra.mxu0 %v421
      %791 = vmatprep.subr.mxu0 %v426
      %792 = vmatpush1.msra.mxu0 %v425
      %793 = vmatprep.subr.mxu0 %v430
      %794 = vmatpush1.msra.mxu0 %v429
      %795 = vmatprep.subr.mxu0 %v434
      %796 = vmatpush1.msra.mxu0 %v433
      %797 = vmatprep.subr.mxu0 %v438
      %798 = vmatpush1.msra.mxu0 %v437
      %799 = vmatprep.subr.mxu0 %v442
      %800 = vmatpush1.msra.mxu0 %v441
      %801 = vmatprep.subr.mxu0 %v446
      %802 = vmatpush1.msra.mxu0 %v445
      %803 = vmatprep.subr.mxu0 %v450
      %804 = vmatpush1.msra.mxu0 %v449
      %805 = vmatprep.subr.mxu0 %v454
      %806 = vmatpush1.msra.mxu0 %v453
      %807 = vmatprep.subr.mxu0 %v458
      %808 = vmatpush1.msra.mxu0 %v457
      %809 = vmatprep.subr.mxu0 %v462
      %810 = vmatpush1.msra.mxu0 %v461
      %811 = vmatprep.subr.mxu0 %v466
      %812 = vmatpush1.msra.mxu0 %v465
      %813 = vmatprep.subr.mxu0 %v470
      %814 = vmatpush1.msra.mxu0 %v469
      %815 = vmatprep.subr.mxu0 %v474
      %816 = vmatpush1.msra.mxu0 %v473
      %817 = vmatprep.subr.mxu0 %v478
      %818 = vmatpush1.msra.mxu0 %v477
      %819 = vmatprep.subr.mxu0 %v482
      %820 = vmatpush1.msra.mxu0 %v481
      %821 = vmatprep.subr.mxu0 %v486
      %822 = vmatpush1.msra.mxu0 %v485
      %823 = vmatprep.subr.mxu0 %v490
      %824 = vmatpush1.msra.mxu0 %v489
      %825 = vmatprep.mubr.f32.mxu0 %v352
      %826 = vmatmul.mubr.f32.gmra.mrb[0].mxu0 %v351
      %v827 = vpop.f32.mrb[0].mxu0
      %v828 = vadd.f32 0.0, %v827
      %v829 = vpop.f32.mrb[0].mxu0
      %v830 = vadd.f32 0.0, %v829
      %831 = vdwg.mxu0
      %832 = vmatprep.subr.mxu0 %v494
      %833 = vmatpush1.msra.mxu0 %v493
      %834 = vmatprep.subr.mxu0 %v498
      %835 = vmatpush1.msra.mxu0 %v497
      %836 = vmatprep.subr.mxu0 %v502
      %837 = vmatpush1.msra.mxu0 %v501
      %838 = vmatprep.subr.mxu0 %v506
      %839 = vmatpush1.msra.mxu0 %v505
      %840 = vmatprep.subr.mxu0 %v510
      %841 = vmatpush1.msra.mxu0 %v509
      %842 = vmatprep.subr.mxu0 %v514
      %843 = vmatpush1.msra.mxu0 %v513
      %844 = vmatprep.subr.mxu0 %v518
      %845 = vmatpush1.msra.mxu0 %v517
      %846 = vmatprep.subr.mxu0 %v522
      %847 = vmatpush1.msra.mxu0 %v521
      %848 = vmatprep.subr.mxu0 %v526
      %849 = vmatpush1.msra.mxu0 %v525
      %850 = vmatprep.subr.mxu0 %v530
      %851 = vmatpush1.msra.mxu0 %v529
      %852 = vmatprep.subr.mxu0 %v534
      %853 = vmatpush1.msra.mxu0 %v533
      %854 = vmatprep.subr.mxu0 %v538
      %855 = vmatpush1.msra.mxu0 %v537
      %856 = vmatprep.subr.mxu0 %v542
      %857 = vmatpush1.msra.mxu0 %v541
      %858 = vmatprep.subr.mxu0 %v546
      %859 = vmatpush1.msra.mxu0 %v545
      %860 = vmatprep.subr.mxu0 %v550
      %861 = vmatpush1.msra.mxu0 %v549
      %862 = vmatprep.subr.mxu0 %v554
      %863 = vmatpush1.msra.mxu0 %v553
      %864 = vmatprep.subr.mxu0 %v558
      %865 = vmatpush1.msra.mxu0 %v557
      %866 = vmatprep.subr.mxu0 %v562
      %867 = vmatpush1.msra.mxu0 %v561
      %868 = vmatprep.subr.mxu0 %v566
      %869 = vmatpush1.msra.mxu0 %v565
      %870 = vmatprep.subr.mxu0 %v570
      %871 = vmatpush1.msra.mxu0 %v569
      %872 = vmatprep.subr.mxu0 %v574
      %873 = vmatpush1.msra.mxu0 %v573
      %874 = vmatprep.subr.mxu0 %v578
      %875 = vmatpush1.msra.mxu0 %v577
      %876 = vmatprep.subr.mxu0 %v582
      %877 = vmatpush1.msra.mxu0 %v581
      %878 = vmatprep.subr.mxu0 %v586
      %879 = vmatpush1.msra.mxu0 %v585
      %880 = vmatprep.subr.mxu0 %v590
      %881 = vmatpush1.msra.mxu0 %v589
      %882 = vmatprep.subr.mxu0 %v594
      %883 = vmatpush1.msra.mxu0 %v593
      %884 = vmatprep.subr.mxu0 %v598
      %885 = vmatpush1.msra.mxu0 %v597
      %886 = vmatprep.subr.mxu0 %v602
      %887 = vmatpush1.msra.mxu0 %v601
      %888 = vmatprep.subr.mxu0 %v606
      %889 = vmatpush1.msra.mxu0 %v605
      %890 = vmatprep.subr.mxu0 %v610
      %891 = vmatpush1.msra.mxu0 %v609
      %892 = vmatprep.subr.mxu0 %v614
      %893 = vmatpush1.msra.mxu0 %v613
      %894 = vmatprep.subr.mxu0 %v618
      %895 = vmatpush1.msra.mxu0 %v617
      %896 = vmatprep.mubr.f32.mxu0 %v354
      %897 = vmatmul.mubr.f32.gmra.mrb[0].mxu0 %v353
      %v898 = vpop.f32.mrb[0].mxu0
      %v899 = vadd.f32 %v828, %v898
      %v900 = vpop.f32.mrb[0].mxu0
      %v901 = vadd.f32 %v830, %v900
      %902 = vdwg.mxu0
      %v903 = vrot.slane %v757, 4
      %v904 = vadd.f32 %v757, %v903
      %v905 = vrot.slane %v904, 2
      %v906 = vadd.f32 %v904, %v905
      %v907 = vrot.slane %v906, 1
      %v908 = vadd.f32 %v906, %v907
      %v909 = vrot.slane %v759, 4
      %v910 = vadd.f32 %v759, %v909
      %v911 = vrot.slane %v910, 2
      %v912 = vadd.f32 %v910, %v911
      %v913 = vrot.slane %v912, 1
      %v914 = vadd.f32 %v912, %v913
      %v915 = vrot.slane %v899, 4
      %v916 = vadd.f32 %v899, %v915
      %v917 = vrot.slane %v916, 2
      %v918 = vadd.f32 %v916, %v917
      %v919 = vrot.slane %v918, 1
      %v920 = vadd.f32 %v918, %v919
      %v921 = vrot.slane %v901, 4
      %v922 = vadd.f32 %v901, %v921
      %v923 = vrot.slane %v922, 2
      %v924 = vadd.f32 %v922, %v923
      %v925 = vrot.slane %v924, 1
      %v926 = vadd.f32 %v924, %v925
      %927 = vmatprep.subr.mxu0 %v364
      %928 = vmatpush1.msra.mxu0 %v363
      %929 = vmatprep.subr.mxu0 %v368
      %930 = vmatpush1.msra.mxu0 %v367
      %931 = vmatprep.subr.mxu0 %v372
      %932 = vmatpush1.msra.mxu0 %v371
      %933 = vmatprep.subr.mxu0 %v376
      %934 = vmatpush1.msra.mxu0 %v375
      %935 = vmatprep.subr.mxu0 %v380
      %936 = vmatpush1.msra.mxu0 %v379
      %937 = vmatprep.subr.mxu0 %v384
      %938 = vmatpush1.msra.mxu0 %v383
      %939 = vmatprep.subr.mxu0 %v388
      %940 = vmatpush1.msra.mxu0 %v387
      %941 = vmatprep.subr.mxu0 %v392
      %942 = vmatpush1.msra.mxu0 %v391
      %943 = vmatprep.subr.mxu0 %v396
      %944 = vmatpush1.msra.mxu0 %v395
      %945 = vmatprep.subr.mxu0 %v400
      %946 = vmatpush1.msra.mxu0 %v399
      %947 = vmatprep.subr.mxu0 %v404
      %948 = vmatpush1.msra.mxu0 %v403
      %949 = vmatprep.subr.mxu0 %v408
      %950 = vmatpush1.msra.mxu0 %v407
      %951 = vmatprep.subr.mxu0 %v412
      %952 = vmatpush1.msra.mxu0 %v411
      %953 = vmatprep.subr.mxu0 %v416
      %954 = vmatpush1.msra.mxu0 %v415
      %955 = vmatprep.subr.mxu0 %v420
      %956 = vmatpush1.msra.mxu0 %v419
      %957 = vmatprep.subr.mxu0 %v424
      %958 = vmatpush1.msra.mxu0 %v423
      %959 = vmatprep.subr.mxu0 %v428
      %960 = vmatpush1.msra.mxu0 %v427
      %961 = vmatprep.subr.mxu0 %v432
      %962 = vmatpush1.msra.mxu0 %v431
      %963 = vmatprep.subr.mxu0 %v436
      %964 = vmatpush1.msra.mxu0 %v435
      %965 = vmatprep.subr.mxu0 %v440
      %966 = vmatpush1.msra.mxu0 %v439
      %967 = vmatprep.subr.mxu0 %v444
      %968 = vmatpush1.msra.mxu0 %v443
      %969 = vmatprep.subr.mxu0 %v448
      %970 = vmatpush1.msra.mxu0 %v447
      %971 = vmatprep.subr.mxu0 %v452
      %972 = vmatpush1.msra.mxu0 %v451
      %973 = vmatprep.subr.mxu0 %v456
      %974 = vmatpush1.msra.mxu0 %v455
      %975 = vmatprep.subr.mxu0 %v460
      %976 = vmatpush1.msra.mxu0 %v459
      %977 = vmatprep.subr.mxu0 %v464
      %978 = vmatpush1.msra.mxu0 %v463
      %979 = vmatprep.subr.mxu0 %v468
      %980 = vmatpush1.msra.mxu0 %v467
      %981 = vmatprep.subr.mxu0 %v472
      %982 = vmatpush1.msra.mxu0 %v471
      %983 = vmatprep.subr.mxu0 %v476
      %984 = vmatpush1.msra.mxu0 %v475
      %985 = vmatprep.subr.mxu0 %v480
      %986 = vmatpush1.msra.mxu0 %v479
      %987 = vmatprep.subr.mxu0 %v484
      %988 = vmatpush1.msra.mxu0 %v483
      %989 = vmatprep.subr.mxu0 %v488
      %990 = vmatpush1.msra.mxu0 %v487
      %991 = vmatprep.mubr.f32.mxu0 %v360
      %992 = vmatmul.mubr.f32.gmra.mrb[0].mxu0 %v359
      %v993 = vpop.f32.mrb[0].mxu0
      %v994 = vadd.f32 0.0, %v993
      %v995 = vpop.f32.mrb[0].mxu0
      %v996 = vadd.f32 0.0, %v995
      %997 = vdwg.mxu0
      %998 = vmatprep.subr.mxu0 %v492
      %999 = vmatpush1.msra.mxu0 %v491
      %1000 = vmatprep.subr.mxu0 %v496
      %1001 = vmatpush1.msra.mxu0 %v495
      %1002 = vmatprep.subr.mxu0 %v500
      %1003 = vmatpush1.msra.mxu0 %v499
      %1004 = vmatprep.subr.mxu0 %v504
      %1005 = vmatpush1.msra.mxu0 %v503
      %1006 = vmatprep.subr.mxu0 %v508
      %1007 = vmatpush1.msra.mxu0 %v507
      %1008 = vmatprep.subr.mxu0 %v512
      %1009 = vmatpush1.msra.mxu0 %v511
      %1010 = vmatprep.subr.mxu0 %v516
      %1011 = vmatpush1.msra.mxu0 %v515
      %1012 = vmatprep.subr.mxu0 %v520
      %1013 = vmatpush1.msra.mxu0 %v519
      %1014 = vmatprep.subr.mxu0 %v524
      %1015 = vmatpush1.msra.mxu0 %v523
      %1016 = vmatprep.subr.mxu0 %v528
      %1017 = vmatpush1.msra.mxu0 %v527
      %1018 = vmatprep.subr.mxu0 %v532
      %1019 = vmatpush1.msra.mxu0 %v531
      %1020 = vmatprep.subr.mxu0 %v536
      %1021 = vmatpush1.msra.mxu0 %v535
      %1022 = vmatprep.subr.mxu0 %v540
      %1023 = vmatpush1.msra.mxu0 %v539
      %1024 = vmatprep.subr.mxu0 %v544
      %1025 = vmatpush1.msra.mxu0 %v543
      %1026 = vmatprep.subr.mxu0 %v548
      %1027 = vmatpush1.msra.mxu0 %v547
      %1028 = vmatprep.subr.mxu0 %v552
      %1029 = vmatpush1.msra.mxu0 %v551
      %1030 = vmatprep.subr.mxu0 %v556
      %1031 = vmatpush1.msra.mxu0 %v555
      %1032 = vmatprep.subr.mxu0 %v560
      %1033 = vmatpush1.msra.mxu0 %v559
      %1034 = vmatprep.subr.mxu0 %v564
      %1035 = vmatpush1.msra.mxu0 %v563
      %1036 = vmatprep.subr.mxu0 %v568
      %1037 = vmatpush1.msra.mxu0 %v567
      %1038 = vmatprep.subr.mxu0 %v572
      %1039 = vmatpush1.msra.mxu0 %v571
      %1040 = vmatprep.subr.mxu0 %v576
      %1041 = vmatpush1.msra.mxu0 %v575
      %1042 = vmatprep.subr.mxu0 %v580
      %1043 = vmatpush1.msra.mxu0 %v579
      %1044 = vmatprep.subr.mxu0 %v584
      %1045 = vmatpush1.msra.mxu0 %v583
      %1046 = vmatprep.subr.mxu0 %v588
      %1047 = vmatpush1.msra.mxu0 %v587
      %1048 = vmatprep.subr.mxu0 %v592
      %1049 = vmatpush1.msra.mxu0 %v591
      %1050 = vmatprep.subr.mxu0 %v596
      %1051 = vmatpush1.msra.mxu0 %v595
      %1052 = vmatprep.subr.mxu0 %v600
      %1053 = vmatpush1.msra.mxu0 %v599
      %1054 = vmatprep.subr.mxu0 %v604
      %1055 = vmatpush1.msra.mxu0 %v603
      %1056 = vmatprep.subr.mxu0 %v608
      %1057 = vmatpush1.msra.mxu0 %v607
      %1058 = vmatprep.subr.mxu0 %v612
      %1059 = vmatpush1.msra.mxu0 %v611
      %1060 = vmatprep.subr.mxu0 %v616
      %1061 = vmatpush1.msra.mxu0 %v615
      %1062 = vmatprep.mubr.f32.mxu0 %v362
      %1063 = vmatmul.mubr.f32.gmra.mrb[0].mxu0 %v361
      %v1064 = vpop.f32.mrb[0].mxu0
      %v1065 = vadd.f32 %v994, %v1064
      %v1066 = vpop.f32.mrb[0].mxu0
      %v1067 = vadd.f32 %v996, %v1066
      %1068 = vdwg.mxu0
      %1069 = vmatprep.subr.mxu0 %v366
      %1070 = vmatpush1.msra.mxu0 %v365
      %1071 = vmatprep.subr.mxu0 %v370
      %1072 = vmatpush1.msra.mxu0 %v369
      %1073 = vmatprep.subr.mxu0 %v374
      %1074 = vmatpush1.msra.mxu0 %v373
      %1075 = vmatprep.subr.mxu0 %v378
      %1076 = vmatpush1.msra.mxu0 %v377
      %1077 = vmatprep.subr.mxu0 %v382
      %1078 = vmatpush1.msra.mxu0 %v381
      %1079 = vmatprep.subr.mxu0 %v386
      %1080 = vmatpush1.msra.mxu0 %v385
      %1081 = vmatprep.subr.mxu0 %v390
      %1082 = vmatpush1.msra.mxu0 %v389
      %1083 = vmatprep.subr.mxu0 %v394
      %1084 = vmatpush1.msra.mxu0 %v393
      %1085 = vmatprep.subr.mxu0 %v398
      %1086 = vmatpush1.msra.mxu0 %v397
      %1087 = vmatprep.subr.mxu0 %v402
      %1088 = vmatpush1.msra.mxu0 %v401
      %1089 = vmatprep.subr.mxu0 %v406
      %1090 = vmatpush1.msra.mxu0 %v405
      %1091 = vmatprep.subr.mxu0 %v410
      %1092 = vmatpush1.msra.mxu0 %v409
      %1093 = vmatprep.subr.mxu0 %v414
      %1094 = vmatpush1.msra.mxu0 %v413
      %1095 = vmatprep.subr.mxu0 %v418
      %1096 = vmatpush1.msra.mxu0 %v417
      %1097 = vmatprep.subr.mxu0 %v422
      %1098 = vmatpush1.msra.mxu0 %v421
      %1099 = vmatprep.subr.mxu0 %v426
      %1100 = vmatpush1.msra.mxu0 %v425
      %1101 = vmatprep.subr.mxu0 %v430
      %1102 = vmatpush1.msra.mxu0 %v429
      %1103 = vmatprep.subr.mxu0 %v434
      %1104 = vmatpush1.msra.mxu0 %v433
      %1105 = vmatprep.subr.mxu0 %v438
      %1106 = vmatpush1.msra.mxu0 %v437
      %1107 = vmatprep.subr.mxu0 %v442
      %1108 = vmatpush1.msra.mxu0 %v441
      %1109 = vmatprep.subr.mxu0 %v446
      %1110 = vmatpush1.msra.mxu0 %v445
      %1111 = vmatprep.subr.mxu0 %v450
      %1112 = vmatpush1.msra.mxu0 %v449
      %1113 = vmatprep.subr.mxu0 %v454
      %1114 = vmatpush1.msra.mxu0 %v453
      %1115 = vmatprep.subr.mxu0 %v458
      %1116 = vmatpush1.msra.mxu0 %v457
      %1117 = vmatprep.subr.mxu0 %v462
      %1118 = vmatpush1.msra.mxu0 %v461
      %1119 = vmatprep.subr.mxu0 %v466
      %1120 = vmatpush1.msra.mxu0 %v465
      %1121 = vmatprep.subr.mxu0 %v470
      %1122 = vmatpush1.msra.mxu0 %v469
      %1123 = vmatprep.subr.mxu0 %v474
      %1124 = vmatpush1.msra.mxu0 %v473
      %1125 = vmatprep.subr.mxu0 %v478
      %1126 = vmatpush1.msra.mxu0 %v477
      %1127 = vmatprep.subr.mxu0 %v482
      %1128 = vmatpush1.msra.mxu0 %v481
      %1129 = vmatprep.subr.mxu0 %v486
      %1130 = vmatpush1.msra.mxu0 %v485
      %1131 = vmatprep.subr.mxu0 %v490
      %1132 = vmatpush1.msra.mxu0 %v489
      %1133 = vmatprep.mubr.f32.mxu0 %v360
      %1134 = vmatmul.mubr.f32.gmra.mrb[0].mxu0 %v359
      %v1135 = vpop.f32.mrb[0].mxu0
      %v1136 = vadd.f32 0.0, %v1135
      %v1137 = vpop.f32.mrb[0].mxu0
      %v1138 = vadd.f32 0.0, %v1137
      %1139 = vdwg.mxu0
      %1140 = vmatprep.subr.mxu0 %v494
      %1141 = vmatpush1.msra.mxu0 %v493
      %1142 = vmatprep.subr.mxu0 %v498
      %1143 = vmatpush1.msra.mxu0 %v497
      %1144 = vmatprep.subr.mxu0 %v502
      %1145 = vmatpush1.msra.mxu0 %v501
      %1146 = vmatprep.subr.mxu0 %v506
      %1147 = vmatpush1.msra.mxu0 %v505
      %1148 = vmatprep.subr.mxu0 %v510
      %1149 = vmatpush1.msra.mxu0 %v509
      %1150 = vmatprep.subr.mxu0 %v514
      %1151 = vmatpush1.msra.mxu0 %v513
      %1152 = vmatprep.subr.mxu0 %v518
      %1153 = vmatpush1.msra.mxu0 %v517
      %1154 = vmatprep.subr.mxu0 %v522
      %1155 = vmatpush1.msra.mxu0 %v521
      %1156 = vmatprep.subr.mxu0 %v526
      %1157 = vmatpush1.msra.mxu0 %v525
      %1158 = vmatprep.subr.mxu0 %v530
      %1159 = vmatpush1.msra.mxu0 %v529
      %1160 = vmatprep.subr.mxu0 %v534
      %1161 = vmatpush1.msra.mxu0 %v533
      %1162 = vmatprep.subr.mxu0 %v538
      %1163 = vmatpush1.msra.mxu0 %v537
      %1164 = vmatprep.subr.mxu0 %v542
      %1165 = vmatpush1.msra.mxu0 %v541
      %1166 = vmatprep.subr.mxu0 %v546
      %1167 = vmatpush1.msra.mxu0 %v545
      %1168 = vmatprep.subr.mxu0 %v550
      %1169 = vmatpush1.msra.mxu0 %v549
      %1170 = vmatprep.subr.mxu0 %v554
      %1171 = vmatpush1.msra.mxu0 %v553
      %1172 = vmatprep.subr.mxu0 %v558
      %1173 = vmatpush1.msra.mxu0 %v557
      %1174 = vmatprep.subr.mxu0 %v562
      %1175 = vmatpush1.msra.mxu0 %v561
      %1176 = vmatprep.subr.mxu0 %v566
      %1177 = vmatpush1.msra.mxu0 %v565
      %1178 = vmatprep.subr.mxu0 %v570
      %1179 = vmatpush1.msra.mxu0 %v569
      %1180 = vmatprep.subr.mxu0 %v574
      %1181 = vmatpush1.msra.mxu0 %v573
      %1182 = vmatprep.subr.mxu0 %v578
      %1183 = vmatpush1.msra.mxu0 %v577
      %1184 = vmatprep.subr.mxu0 %v582
      %1185 = vmatpush1.msra.mxu0 %v581
      %1186 = vmatprep.subr.mxu0 %v586
      %1187 = vmatpush1.msra.mxu0 %v585
      %1188 = vmatprep.subr.mxu0 %v590
      %1189 = vmatpush1.msra.mxu0 %v589
      %1190 = vmatprep.subr.mxu0 %v594
      %1191 = vmatpush1.msra.mxu0 %v593
      %1192 = vmatprep.subr.mxu0 %v598
      %1193 = vmatpush1.msra.mxu0 %v597
      %1194 = vmatprep.subr.mxu0 %v602
      %1195 = vmatpush1.msra.mxu0 %v601
      %1196 = vmatprep.subr.mxu0 %v606
      %1197 = vmatpush1.msra.mxu0 %v605
      %1198 = vmatprep.subr.mxu0 %v610
      %1199 = vmatpush1.msra.mxu0 %v609
      %1200 = vmatprep.subr.mxu0 %v614
      %1201 = vmatpush1.msra.mxu0 %v613
      %1202 = vmatprep.subr.mxu0 %v618
      %1203 = vmatpush1.msra.mxu0 %v617
      %1204 = vmatprep.mubr.f32.mxu0 %v362
      %1205 = vmatmul.mubr.f32.gmra.mrb[0].mxu0 %v361
      %v1206 = vpop.f32.mrb[0].mxu0
      %v1207 = vadd.f32 %v1136, %v1206
      %v1208 = vpop.f32.mrb[0].mxu0
      %v1209 = vadd.f32 %v1138, %v1208
      %1210 = vdwg.mxu0
      %v1211 = vrot.slane %v1065, 4
      %v1212 = vadd.f32 %v1065, %v1211
      %v1213 = vrot.slane %v1212, 2
      %v1214 = vadd.f32 %v1212, %v1213
      %v1215 = vrot.slane %v1214, 1
      %v1216 = vadd.f32 %v1214, %v1215
      %v1217 = vrot.slane %v1067, 4
      %v1218 = vadd.f32 %v1067, %v1217
      %v1219 = vrot.slane %v1218, 2
      %v1220 = vadd.f32 %v1218, %v1219
      %v1221 = vrot.slane %v1220, 1
      %v1222 = vadd.f32 %v1220, %v1221
      %v1223 = vrot.slane %v1207, 4
      %v1224 = vadd.f32 %v1207, %v1223
      %v1225 = vrot.slane %v1224, 2
      %v1226 = vadd.f32 %v1224, %v1225
      %v1227 = vrot.slane %v1226, 1
      %v1228 = vadd.f32 %v1226, %v1227
      %v1229 = vrot.slane %v1209, 4
      %v1230 = vadd.f32 %v1209, %v1229
      %v1231 = vrot.slane %v1230, 2
      %v1232 = vadd.f32 %v1230, %v1231
      %v1233 = vrot.slane %v1232, 1
      %v1234 = vadd.f32 %v1232, %v1233
      %v1235 = vmul.f32 %v908, 0.03125
      %v1236 = vmul.f32 %v914, 0.03125
      %v1237 = vmul.f32 %v920, 0.03125
      %v1238 = vmul.f32 %v926, 0.03125
      %v1239 = vmul.f32 %v1216, 0.03125
      %v1240 = vmul.f32 %v1222, 0.03125
      %v1241 = vmul.f32 %v1228, 0.03125
      %v1242 = vmul.f32 %v1234, 0.03125
      %v1243 = vmul.f32 %v1235, %v1235
      %v1244 = vmul.f32 %v1236, %v1236
      %v1245 = vmul.f32 %v1237, %v1237
      %v1246 = vmul.f32 %v1238, %v1238
      %v1247 = vsub.f32 %v1239, %v1243
      %v1248 = vsub.f32 %v1240, %v1244
      %v1249 = vsub.f32 %v1241, %v1245
      %v1250 = vsub.f32 %v1242, %v1246
      %v1251 = vmax.f32 %v1247, 0.0
      %v1252 = vmax.f32 %v1248, 0.0
      %v1253 = vmax.f32 %v1249, 0.0
      %v1254 = vmax.f32 %v1250, 0.0
      %v1255 = vld [vmem:[%s3] sm:$0xf]
      %v1256 = vadd.f32 %v1251, 1e-05
      %v1257 = vadd.f32 %v1252, 1e-05
      %v1258 = vadd.f32 %v1253, 1e-05
      %v1259 = vadd.f32 %v1254, 1e-05
      %v1260 = vrsqrt.pop %v1256
      %v1261 = vrsqrt.pop %v1257
      %v1262 = vrsqrt.pop %v1258
      %v1263 = vrsqrt.pop %v1259
      %v1268 = vcombine.low %v1260, %v1261
      %v1269 = vcombine.low %v1262, %v1263
      %v1271 = vunpack.c.l.s4 1966171168
      %v1272 = vunpack.c.0.s8 %v1271
      %v1273 = vlaneseq
      %v1274 = vshrl.u32 %v1273, 7
      %v1275 = vsub.s32 %v1272, %v1274
      %v1276 = vrot.slane %v1268, %v1275
      %v1278 = vunpack.c.l.s4 1966171168
      %v1279 = vunpack.c.0.s8 %v1278
      %v1280 = vlaneseq
      %v1281 = vshrl.u32 %v1280, 7
      %v1282 = vsub.s32 %v1279, %v1281
      %v1283 = vrot.slane %v1269, %v1282
      %v1284 = vcombine.low %v1276, %v1283
      %v1286 = vunpack.c.l.s4 1966171168
      %v1287 = vunpack.c.0.s8 %v1286
      %v1288 = vlaneseq
      %v1289 = vshrl.u32 %v1288, 7
      %v1290 = vsub.s32 %v1287, %v1289
      %v1291 = vrot.slane %v1284, %v1290
      %v1293 = vmul.f32 %v1255, %v1291
      %v1294 = vld [vmem:[%s4] sm:$0xf]
      %v1296 = vlaneseq
      %v1297 = vshrl.u32 %v1296, 7
      %v1298 = vsub.s32 0, %v1297
      %v1299 = vrot.slane %v1293, %v1298
      %v1300 = vlaneseq
      %v1301 = vshrl.u32 %v1300, 7
      %v1302 = vsub.s32 1, %v1301
      %v1303 = vrot.slane %v1293, %v1302
      %v1304 = vlaneseq
      %v1305 = vshrl.u32 %v1304, 7
      %v1306 = vsub.s32 2, %v1305
      %v1307 = vrot.slane %v1293, %v1306
      %v1308 = vlaneseq
      %v1309 = vshrl.u32 %v1308, 7
      %v1310 = vsub.s32 3, %v1309
      %v1311 = vrot.slane %v1293, %v1310
      %v1316 = vmul.f32 %v1235, %v1299
      %v1317 = vmul.f32 %v1236, %v1303
      %v1318 = vmul.f32 %v1237, %v1307
      %v1319 = vmul.f32 %v1238, %v1311
      %v1324 = vcombine.low %v1316, %v1317
      %v1325 = vcombine.low %v1318, %v1319
      %v1327 = vunpack.c.l.s4 1966171168
      %v1328 = vunpack.c.0.s8 %v1327
      %v1329 = vlaneseq
      %v1330 = vshrl.u32 %v1329, 7
      %v1331 = vsub.s32 %v1328, %v1330
      %v1332 = vrot.slane %v1324, %v1331
      %v1334 = vunpack.c.l.s4 1966171168
      %v1335 = vunpack.c.0.s8 %v1334
      %v1336 = vlaneseq
      %v1337 = vshrl.u32 %v1336, 7
      %v1338 = vsub.s32 %v1335, %v1337
      %v1339 = vrot.slane %v1325, %v1338
      %v1340 = vcombine.low %v1332, %v1339
      %v1342 = vunpack.c.l.s4 1966171168
      %v1343 = vunpack.c.0.s8 %v1342
      %v1344 = vlaneseq
      %v1345 = vshrl.u32 %v1344, 7
      %v1346 = vsub.s32 %v1343, %v1345
      %v1347 = vrot.slane %v1340, %v1346
      %v1349 = vsub.f32 %v1294, %v1347
      %v1350 = vmul.f32 %v347, %v1299
      %v1351 = vmul.f32 %v348, %v1303
      %v1352 = vmul.f32 %v349, %v1307
      %v1353 = vmul.f32 %v350, %v1311
      %v1355 = vlaneseq
      %v1356 = vshrl.u32 %v1355, 7
      %v1357 = vsub.s32 0, %v1356
      %v1358 = vrot.slane %v1349, %v1357
      %v1359 = vlaneseq
      %v1360 = vshrl.u32 %v1359, 7
      %v1361 = vsub.s32 1, %v1360
      %v1362 = vrot.slane %v1349, %v1361
      %v1363 = vlaneseq
      %v1364 = vshrl.u32 %v1363, 7
      %v1365 = vsub.s32 2, %v1364
      %v1366 = vrot.slane %v1349, %v1365
      %v1367 = vlaneseq
      %v1368 = vshrl.u32 %v1367, 7
      %v1369 = vsub.s32 3, %v1368
      %v1370 = vrot.slane %v1349, %v1369
      %v1375 = vadd.f32 %v1350, %v1358
      %v1376 = vadd.f32 %v1351, %v1362
      %v1377 = vadd.f32 %v1352, %v1366
      %v1378 = vadd.f32 %v1353, %v1370
      %v1379 = vmax.f32 %v1375, 0.0
      %v1380 = vmax.f32 %v1376, 0.0
      %v1381 = vmax.f32 %v1377, 0.0
      %v1382 = vmax.f32 %v1378, 0.0
      %v1383 = vpack.c.bf16 %v1379, %v1379
      %v1384 = vpack.c.bf16 %v1380, %v1380
      %v1385 = vpack.c.bf16 %v1381, %v1381
      %v1386 = vpack.c.bf16 %v1382, %v1382
      %v1391 = vunpack.c.l.b16 %v1383
      %v1392 = vunpack.c.l.b16 %v1384
      %v1393 = vunpack.c.l.b16 %v1385
      %v1394 = vunpack.c.l.b16 %v1386
      %v1395 = vpack.c.b16 %v1392, %v1391
      %v1396 = vpack.c.b16 %v1394, %v1393
      %1399 = vst [vmem:[%s5] sm:$0xff] %v1395
      %1400 = vst [vmem:[%s5 + $0x8] sm:$0xff] %v1396
    $region37: #{_forward_impl.4} parent=1 // pred_fallthru
      _
    // Predicated region
    $region38: #{_forward_impl.4} parent=1 // pred_check
      _
    $region39: #{_forward_impl.4} parent=1 // pred_check_branch
      %1402 = sbr.rel (0) target = $region41
    $region40: #{_forward_impl.4} parent=1 // pred_region
      _
    $region41: #{_forward_impl.4} parent=1 // pred_fallthru
      _
    // Predicated region
    $region42: #{_forward_impl.4} parent=1 // pred_check
      _
    $region43: #{_forward_impl.4} parent=1 // pred_check_branch
      %1404 = sbr.rel (0) target = $region45
    $region44: #{_forward_impl.4} parent=1 // pred_region
      _
    $region45: #{_forward_impl.4} parent=1 // pred_fallthru
      _
    %1405 = vsyncpa [#allocation4], 1
    %1406 = vsyncpa [#allocation6], 1

// kernel: tile.58
$region0: #{tile.58}
  #allocation0 [shape = 's32[1]{0}', space=sflag, size = 0x4, scoped, tag = 'scoped memory for tile.58']
  %s0 = inlined_call_operand.vmem [shape: f32[8], index: 0, kind: input, shape index: {}]
  %s1 = inlined_call_operand.vmem [shape: f32[4,8], index: 1, kind: output, shape index: {}]
  // Predicated region
  $region2: #{tile.58} parent=0 // pred_check
    _
  $region3: #{tile.58} parent=0 // pred_check_branch
    %3 = sbr.rel (0) target = $region5
  $region4: #{tile.58} parent=0 // pred_region
    _
  $region5: #{tile.58} parent=0 // pred_fallthru
    _
  %v4 = vld [vmem:[%s0] ss:$0 sm:$0xff]
  %5 = vst [vmem:[%s1] sm:$0xf] %v4

// kernel: tile.59
$region0: #{tile.59}
  %s0 = inlined_call_operand.vmem [shape: f32[4,8], index: 0, kind: input, shape index: {}]
  %s1 = inlined_call_operand.vmem [shape: f32[32], index: 1, kind: output, shape index: {}]
  $region1: #{tile.59} parent=0
    #allocation0 [shape = 'u8[4096]{0}', space=vmem, size = 0x1000, scoped, tag = 'scoped mem for output reshape']
    #allocation1 [shape = 'u8[4096]{0}', space=vmem, size = 0x1000, scoped, tag = 'scoped mem for input reshape']
    %s3 = sshllo.u32 0, 4
    %v4 = vld [vmem:[%s0] sm:%s3]
    %5 = vst [vmem:[#allocation1] sm:%s3] %v4
    %v6 = vld [vmem:[#allocation1] sm:$0x1]
    %vm7 = vcmask 64512
    %8 = vst.msk [vmem:[#allocation0] sm:$0x1] %vm7, %v6
    %s9 = scalar_lea.vmem [#allocation1], 3
    %v10 = vld [vmem:[%s9] sm:$0x1]
    %11 = vrot.lane.b32.xlu0 %v10, 24
    %v12 = vpop.permute.xlu0 %11
    %vm13 = vcmask 261312
    %14 = vst.msk [vmem:[#allocation0] sm:$0x1] %vm13, %v12
    %s15 = scalar_lea.vmem [#allocation1], 2
    %v16 = vld [vmem:[%s15] sm:$0x1]
    %17 = vrot.lane.b32.xlu0 %v16, 16
    %v18 = vpop.permute.xlu0 %17
    %vm19 = vcmask 195712
    %20 = vst.msk [vmem:[#allocation0] sm:$0x1] %vm19, %v18
    %s21 = scalar_lea.vmem [#allocation1], 1
    %v22 = vld [vmem:[%s21] sm:$0x1]
    %23 = vrot.lane.b32.xlu0 %v22, 8
    %v24 = vpop.permute.xlu0 %23
    %vm25 = vcmask 130112
    %26 = vst.msk [vmem:[#allocation0] sm:$0x1] %vm25, %v24
    %s28 = sshllo.u32 0, 1
    %v30 = vld [vmem:[#allocation0] sm:%s28]
    %s31 = sshllo.u32 0, 1
    %32 = vst [vmem:[%s1] sm:%s31] %v30

// kernel: _forward_impl.6
$region0: #{_forward_impl.6}
  #allocation0 [shape = 'u32[]', space=smem, size = 0x4, offset = 0x4, fixed_abs, tag = 'smem constant byte address 0x4 - core index']
  #allocation1 [shape = 'u32[144,128]{1,0:T(1,128)}', space=vmem, size = 0x12000, scoped, tag = 'internal scratch']
  #allocation2 [shape = 'f32[128,128]{1,0:T(8,128)}', space=vmem, size = 0x10000, scoped, tag = 'scratch operand']
  %s0 = inlined_call_operand.vmem [shape: bf16[128,256], index: 0, kind: input, shape index: {}]
  %s1 = inlined_call_operand.vmem [shape: bf16[256,128], index: 1, kind: input, shape index: {}]
  %s2 = inlined_call_operand.vmem [shape: f32[128,128], index: 2, kind: input, shape index: {}]
  %s3 = inlined_call_operand.vmem [shape: f32[1,128], index: 3, kind: input, shape index: {}]
  %s4 = inlined_call_operand.vmem [shape: f32[1,128], index: 4, kind: input, shape index: {}]
  %s5 = inlined_call_operand.vmem [shape: bf16[128,128], index: 5, kind: output, shape index: {}]
  %s6 = sld [smem:[#allocation0]]
  $region38: #{_forward_impl.6} parent=0
    _
  %s8 = ssub.s32 1, %s6
  %s9 = scalar_select 0, %s8, %s6
  // Predicated region
  $region2: #{_forward_impl.6} parent=0 // pred_check
    _
  $region3: #{_forward_impl.6} parent=0 // pred_check_branch
    %11 = sbr.rel (0) target = $region5
  $region4: #{_forward_impl.6} parent=0 // pred_region
    _
  $region5: #{_forward_impl.6} parent=0 // pred_fallthru
    _
  // Predicated region
  $region6: #{_forward_impl.6} parent=0 // pred_check
    _
  $region7: #{_forward_impl.6} parent=0 // pred_check_branch
    %13 = sbr.rel (0) target = $region9
  $region8: #{_forward_impl.6} parent=0 // pred_region
    _
  $region9: #{_forward_impl.6} parent=0 // pred_fallthru
    _
  // Predicated region
  $region10: #{_forward_impl.6} parent=0 // pred_check
    _
  $region11: #{_forward_impl.6} parent=0 // pred_check_branch
    %15 = sbr.rel (0) target = $region13
  $region12: #{_forward_impl.6} parent=0 // pred_region
    _
  $region13: #{_forward_impl.6} parent=0 // pred_fallthru
    _
  // Predicated region
  $region14: #{_forward_impl.6} parent=0 // pred_check
    _
  $region15: #{_forward_impl.6} parent=0 // pred_check_branch
    %17 = sbr.rel (0) target = $region17
  $region16: #{_forward_impl.6} parent=0 // pred_region
    _
  $region17: #{_forward_impl.6} parent=0 // pred_fallthru
    _
  // Predicated region
  $region18: #{_forward_impl.6} parent=0 // pred_check
    _
  $region19: #{_forward_impl.6} parent=0 // pred_check_branch
    %19 = sbr.rel (0) target = $region21
  $region20: #{_forward_impl.6} parent=0 // pred_region
    _
  $region21: #{_forward_impl.6} parent=0 // pred_fallthru
    _
  %p21 = scmp.eq.s32.totalorder 0, 0
  // Predicated region
  $region22: #{_forward_impl.6} parent=0 // pred_check
    %p22 = pneg %p21
  $region23: #{_forward_impl.6} parent=0 // pred_check_branch
    %24 = sbr.rel (%p22) target = $region25
  $region24: #{_forward_impl.6} parent=0 // pred_region
    %25 = vst [vmem:[#allocation2] sm:$0xff] 0.0
    %26 = vst [vmem:[#allocation2 + $0x8] sm:$0xff] 0.0
    %27 = vst [vmem:[#allocation2 + $0x10] sm:$0xff] 0.0
    %28 = vst [vmem:[#allocation2 + $0x18] sm:$0xff] 0.0
    %29 = vst [vmem:[#allocation2 + $0x20] sm:$0xff] 0.0
    %30 = vst [vmem:[#allocation2 + $0x28] sm:$0xff] 0.0
    %31 = vst [vmem:[#allocation2 + $0x30] sm:$0xff] 0.0
    %32 = vst [vmem:[#allocation2 + $0x38] sm:$0xff] 0.0
    %33 = vst [vmem:[#allocation2 + $0x40] sm:$0xff] 0.0
    %34 = vst [vmem:[#allocation2 + $0x48] sm:$0xff] 0.0
    %35 = vst [vmem:[#allocation2 + $0x50] sm:$0xff] 0.0
    %36 = vst [vmem:[#allocation2 + $0x58] sm:$0xff] 0.0
    %37 = vst [vmem:[#allocation2 + $0x60] sm:$0xff] 0.0
    %38 = vst [vmem:[#allocation2 + $0x68] sm:$0xff] 0.0
    %39 = vst [vmem:[#allocation2 + $0x70] sm:$0xff] 0.0
    %40 = vst [vmem:[#allocation2 + $0x78] sm:$0xff] 0.0
  $region25: #{_forward_impl.6} parent=0 // pred_fallthru
    _
  %v41 = vld [vmem:[#allocation2] sm:$0xff]
  %v42 = vld [vmem:[#allocation2 + $0x8] sm:$0xff]
  %v43 = vld [vmem:[#allocation2 + $0x10] sm:$0xff]
  %v44 = vld [vmem:[#allocation2 + $0x18] sm:$0xff]
  %v45 = vld [vmem:[#allocation2 + $0x20] sm:$0xff]
  %v46 = vld [vmem:[#allocation2 + $0x28] sm:$0xff]
  %v47 = vld [vmem:[#allocation2 + $0x30] sm:$0xff]
  %v48 = vld [vmem:[#allocation2 + $0x38] sm:$0xff]
  %v49 = vld [vmem:[#allocation2 + $0x40] sm:$0xff]
  %v50 = vld [vmem:[#allocation2 + $0x48] sm:$0xff]
  %v51 = vld [vmem:[#allocation2 + $0x50] sm:$0xff]
  %v52 = vld [vmem:[#allocation2 + $0x58] sm:$0xff]
  %v53 = vld [vmem:[#allocation2 + $0x60] sm:$0xff]
  %v54 = vld [vmem:[#allocation2 + $0x68] sm:$0xff]
  %v55 = vld [vmem:[#allocation2 + $0x70] sm:$0xff]
  %v56 = vld [vmem:[#allocation2 + $0x78] sm:$0xff]
  %v57 = vld [vmem:[%s0] sm:$0xff]
  %v58 = vld [vmem:[%s0 + $0x8] sm:$0xff]
  %v59 = vld [vmem:[%s0 + $0x10] sm:$0xff]
  %v60 = vld [vmem:[%s0 + $0x18] sm:$0xff]
  %v61 = vld [vmem:[%s0 + $0x20] sm:$0xff]
  %v62 = vld [vmem:[%s0 + $0x28] sm:$0xff]
  %v63 = vld [vmem:[%s0 + $0x30] sm:$0xff]
  %v64 = vld [vmem:[%s0 + $0x38] sm:$0xff]
  %v65 = vld [vmem:[%s0 + $0x40] sm:$0xff]
  %v66 = vld [vmem:[%s0 + $0x48] sm:$0xff]
  %v67 = vld [vmem:[%s0 + $0x50] sm:$0xff]
  %v68 = vld [vmem:[%s0 + $0x58] sm:$0xff]
  %v69 = vld [vmem:[%s0 + $0x60] sm:$0xff]
  %v70 = vld [vmem:[%s0 + $0x68] sm:$0xff]
  %v71 = vld [vmem:[%s0 + $0x70] sm:$0xff]
  %v72 = vld [vmem:[%s0 + $0x78] sm:$0xff]
  %v73 = vld [vmem:[%s1] sm:$0xf]
  %v74 = vld [vmem:[%s1 + $0x4] sm:$0xf]
  %v75 = vld [vmem:[%s1 + $0x8] sm:$0xf]
  %v76 = vld [vmem:[%s1 + $0xc] sm:$0xf]
  %v77 = vld [vmem:[%s1 + $0x10] sm:$0xf]
  %v78 = vld [vmem:[%s1 + $0x14] sm:$0xf]
  %v79 = vld [vmem:[%s1 + $0x18] sm:$0xf]
  %v80 = vld [vmem:[%s1 + $0x1c] sm:$0xf]
  %v81 = vld [vmem:[%s1 + $0x20] sm:$0xf]
  %v82 = vld [vmem:[%s1 + $0x24] sm:$0xf]
  %v83 = vld [vmem:[%s1 + $0x28] sm:$0xf]
  %v84 = vld [vmem:[%s1 + $0x2c] sm:$0xf]
  %v85 = vld [vmem:[%s1 + $0x30] sm:$0xf]
  %v86 = vld [vmem:[%s1 + $0x34] sm:$0xf]
  %v87 = vld [vmem:[%s1 + $0x38] sm:$0xf]
  %v88 = vld [vmem:[%s1 + $0x3c] sm:$0xf]
  %v89 = vld [vmem:[%s1 + $0x40] sm:$0xf]
  %v90 = vld [vmem:[%s1 + $0x44] sm:$0xf]
  %v91 = vld [vmem:[%s1 + $0x48] sm:$0xf]
  %v92 = vld [vmem:[%s1 + $0x4c] sm:$0xf]
  %v93 = vld [vmem:[%s1 + $0x50] sm:$0xf]
  %v94 = vld [vmem:[%s1 + $0x54] sm:$0xf]
  %v95 = vld [vmem:[%s1 + $0x58] sm:$0xf]
  %v96 = vld [vmem:[%s1 + $0x5c] sm:$0xf]
  %v97 = vld [vmem:[%s1 + $0x60] sm:$0xf]
  %v98 = vld [vmem:[%s1 + $0x64] sm:$0xf]
  %v99 = vld [vmem:[%s1 + $0x68] sm:$0xf]
  %v100 = vld [vmem:[%s1 + $0x6c] sm:$0xf]
  %v101 = vld [vmem:[%s1 + $0x70] sm:$0xf]
  %v102 = vld [vmem:[%s1 + $0x74] sm:$0xf]
  %v103 = vld [vmem:[%s1 + $0x78] sm:$0xf]
  %v104 = vld [vmem:[%s1 + $0x7c] sm:$0xf]
  %v121 = vunpack.c.l.b16 %v57
  %v122 = vunpack.c.h.b16 %v57
  %v123 = vunpack.c.l.b16 %v58
  %v124 = vunpack.c.h.b16 %v58
  %v125 = vunpack.c.l.b16 %v59
  %v126 = vunpack.c.h.b16 %v59
  %v127 = vunpack.c.l.b16 %v60
  %v128 = vunpack.c.h.b16 %v60
  %v129 = vunpack.c.l.b16 %v61
  %v130 = vunpack.c.h.b16 %v61
  %v131 = vunpack.c.l.b16 %v62
  %v132 = vunpack.c.h.b16 %v62
  %v133 = vunpack.c.l.b16 %v63
  %v134 = vunpack.c.h.b16 %v63
  %v135 = vunpack.c.l.b16 %v64
  %v136 = vunpack.c.h.b16 %v64
  %v137 = vunpack.c.l.b16 %v65
  %v138 = vunpack.c.h.b16 %v65
  %v139 = vunpack.c.l.b16 %v66
  %v140 = vunpack.c.h.b16 %v66
  %v141 = vunpack.c.l.b16 %v67
  %v142 = vunpack.c.h.b16 %v67
  %v143 = vunpack.c.l.b16 %v68
  %v144 = vunpack.c.h.b16 %v68
  %v145 = vunpack.c.l.b16 %v69
  %v146 = vunpack.c.h.b16 %v69
  %v147 = vunpack.c.l.b16 %v70
  %v148 = vunpack.c.h.b16 %v70
  %v149 = vunpack.c.l.b16 %v71
  %v150 = vunpack.c.h.b16 %v71
  %v151 = vunpack.c.l.b16 %v72
  %v152 = vunpack.c.h.b16 %v72
  %v153 = vpack.c.b16 %v123, %v121
  %v154 = vpack.c.b16 %v124, %v122
  %v155 = vpack.c.b16 %v127, %v125
  %v156 = vpack.c.b16 %v128, %v126
  %v157 = vpack.c.b16 %v131, %v129
  %v158 = vpack.c.b16 %v132, %v130
  %v159 = vpack.c.b16 %v135, %v133
  %v160 = vpack.c.b16 %v136, %v134
  %v161 = vpack.c.b16 %v139, %v137
  %v162 = vpack.c.b16 %v140, %v138
  %v163 = vpack.c.b16 %v143, %v141
  %v164 = vpack.c.b16 %v144, %v142
  %v165 = vpack.c.b16 %v147, %v145
  %v166 = vpack.c.b16 %v148, %v146
  %v167 = vpack.c.b16 %v151, %v149
  %v168 = vpack.c.b16 %v152, %v150
  %v217 = vunpack.c.l.b16 %v73
  %v218 = vunpack.c.l.b16 %v74
  %v219 = vunpack.c.l.b16 %v75
  %v220 = vunpack.c.l.b16 %v76
  %v221 = vunpack.c.l.b16 %v77
  %v222 = vunpack.c.l.b16 %v78
  %v223 = vunpack.c.l.b16 %v79
  %v224 = vunpack.c.l.b16 %v80
  %v225 = vunpack.c.l.b16 %v81
  %v226 = vunpack.c.l.b16 %v82
  %v227 = vunpack.c.l.b16 %v83
  %v228 = vunpack.c.l.b16 %v84
  %v229 = vunpack.c.l.b16 %v85
  %v230 = vunpack.c.l.b16 %v86
  %v231 = vunpack.c.l.b16 %v87
  %v232 = vunpack.c.l.b16 %v88
  %v233 = vunpack.c.l.b16 %v89
  %v234 = vunpack.c.l.b16 %v90
  %v235 = vunpack.c.l.b16 %v91
  %v236 = vunpack.c.l.b16 %v92
  %v237 = vunpack.c.l.b16 %v93
  %v238 = vunpack.c.l.b16 %v94
  %v239 = vunpack.c.l.b16 %v95
  %v240 = vunpack.c.l.b16 %v96
  %v241 = vunpack.c.l.b16 %v97
  %v242 = vunpack.c.l.b16 %v98
  %v243 = vunpack.c.l.b16 %v99
  %v244 = vunpack.c.l.b16 %v100
  %v245 = vunpack.c.l.b16 %v101
  %v246 = vunpack.c.l.b16 %v102
  %v247 = vunpack.c.l.b16 %v103
  %v248 = vunpack.c.l.b16 %v104
  %v249 = vpack.c.b16 %v218, %v217
  %v250 = vpack.c.b16 %v220, %v219
  %v251 = vpack.c.b16 %v222, %v221
  %v252 = vpack.c.b16 %v224, %v223
  %v253 = vpack.c.b16 %v226, %v225
  %v254 = vpack.c.b16 %v228, %v227
  %v255 = vpack.c.b16 %v230, %v229
  %v256 = vpack.c.b16 %v232, %v231
  %v257 = vpack.c.b16 %v234, %v233
  %v258 = vpack.c.b16 %v236, %v235
  %v259 = vpack.c.b16 %v238, %v237
  %v260 = vpack.c.b16 %v240, %v239
  %v261 = vpack.c.b16 %v242, %v241
  %v262 = vpack.c.b16 %v244, %v243
  %v263 = vpack.c.b16 %v246, %v245
  %v264 = vpack.c.b16 %v248, %v247
  %281 = vmatprep.subr.bf16.mxu0 0
  %282 = vmatpush1.bf16.msra.mxu0 %v249
  %283 = vmatprep.subr.bf16.mxu0 0
  %284 = vmatpush1.bf16.msra.mxu0 %v250
  %285 = vmatprep.subr.bf16.mxu0 0
  %286 = vmatpush1.bf16.msra.mxu0 %v251
  %287 = vmatprep.subr.bf16.mxu0 0
  %288 = vmatpush1.bf16.msra.mxu0 %v252
  %289 = vmatprep.subr.bf16.mxu0 0
  %290 = vmatpush1.bf16.msra.mxu0 %v253
  %291 = vmatprep.subr.bf16.mxu0 0
  %292 = vmatpush1.bf16.msra.mxu0 %v254
  %293 = vmatprep.subr.bf16.mxu0 0
  %294 = vmatpush1.bf16.msra.mxu0 %v255
  %295 = vmatprep.subr.bf16.mxu0 0
  %296 = vmatpush1.bf16.msra.mxu0 %v256
  %297 = vmatprep.subr.bf16.mxu0 0
  %298 = vmatpush1.bf16.msra.mxu0 %v257
  %299 = vmatprep.subr.bf16.mxu0 0
  %300 = vmatpush1.bf16.msra.mxu0 %v258
  %301 = vmatprep.subr.bf16.mxu0 0
  %302 = vmatpush1.bf16.msra.mxu0 %v259
  %303 = vmatprep.subr.bf16.mxu0 0
  %304 = vmatpush1.bf16.msra.mxu0 %v260
  %305 = vmatprep.subr.bf16.mxu0 0
  %306 = vmatpush1.bf16.msra.mxu0 %v261
  %307 = vmatprep.subr.bf16.mxu0 0
  %308 = vmatpush1.bf16.msra.mxu0 %v262
  %309 = vmatprep.subr.bf16.mxu0 0
  %310 = vmatpush1.bf16.msra.mxu0 %v263
  %311 = vmatprep.subr.bf16.mxu0 0
  %312 = vmatpush1.bf16.msra.mxu0 %v264
  %313 = vmatprep.mubr.bf16.mxu0 %v154
  %314 = vmatmul.mubr.bf16.gmra.mrb[0].mxu0 %v153
  %v315 = vpop.f32.mrb[0].mxu0
  %v316 = vadd.f32 0.0, %v315
  %v317 = vpop.f32.mrb[0].mxu0
  %v318 = vpop.f32.mrb[0].mxu0
  %v319 = vadd.f32 0.0, %v318
  %v320 = vpop.f32.mrb[0].mxu0
  %321 = vmatprep.mubr.bf16.mxu0 %v156
  %322 = vmatmul.mubr.bf16.gmra.mrb[0].mxu0 %v155
  %v323 = vpop.f32.mrb[0].mxu0
  %v324 = vadd.f32 0.0, %v323
  %v325 = vpop.f32.mrb[0].mxu0
  %v326 = vpop.f32.mrb[0].mxu0
  %v327 = vadd.f32 0.0, %v326
  %v328 = vpop.f32.mrb[0].mxu0
  %329 = vmatprep.mubr.bf16.mxu0 %v158
  %330 = vmatmul.mubr.bf16.gmra.mrb[0].mxu0 %v157
  %v331 = vpop.f32.mrb[0].mxu0
  %v332 = vadd.f32 0.0, %v331
  %v333 = vpop.f32.mrb[0].mxu0
  %v334 = vpop.f32.mrb[0].mxu0
  %v335 = vadd.f32 0.0, %v334
  %v336 = vpop.f32.mrb[0].mxu0
  %337 = vmatprep.mubr.bf16.mxu0 %v160
  %338 = vmatmul.mubr.bf16.gmra.mrb[0].mxu0 %v159
  %v339 = vpop.f32.mrb[0].mxu0
  %v340 = vadd.f32 0.0, %v339
  %v341 = vpop.f32.mrb[0].mxu0
  %v342 = vpop.f32.mrb[0].mxu0
  %v343 = vadd.f32 0.0, %v342
  %v344 = vpop.f32.mrb[0].mxu0
  %345 = vmatprep.mubr.bf16.mxu0 %v162
  %346 = vmatmul.mubr.bf16.gmra.mrb[0].mxu0 %v161
  %v347 = vpop.f32.mrb[0].mxu0
  %v348 = vadd.f32 0.0, %v347
  %v349 = vpop.f32.mrb[0].mxu0
  %v350 = vpop.f32.mrb[0].mxu0
  %v351 = vadd.f32 0.0, %v350
  %v352 = vpop.f32.mrb[0].mxu0
  %353 = vmatprep.mubr.bf16.mxu0 %v164
  %354 = vmatmul.mubr.bf16.gmra.mrb[0].mxu0 %v163
  %v355 = vpop.f32.mrb[0].mxu0
  %v356 = vadd.f32 0.0, %v355
  %v357 = vpop.f32.mrb[0].mxu0
  %v358 = vpop.f32.mrb[0].mxu0
  %v359 = vadd.f32 0.0, %v358
  %v360 = vpop.f32.mrb[0].mxu0
  %361 = vmatprep.mubr.bf16.mxu0 %v166
  %362 = vmatmul.mubr.bf16.gmra.mrb[0].mxu0 %v165
  %v363 = vpop.f32.mrb[0].mxu0
  %v364 = vadd.f32 0.0, %v363
  %v365 = vpop.f32.mrb[0].mxu0
  %v366 = vpop.f32.mrb[0].mxu0
  %v367 = vadd.f32 0.0, %v366
  %v368 = vpop.f32.mrb[0].mxu0
  %369 = vmatprep.mubr.bf16.mxu0 %v168
  %370 = vmatmul.mubr.bf16.gmra.mrb[0].mxu0 %v167
  %v371 = vpop.f32.mrb[0].mxu0
  %v372 = vadd.f32 0.0, %v371
  %v373 = vpop.f32.mrb[0].mxu0
  %v374 = vpop.f32.mrb[0].mxu0
  %v375 = vadd.f32 0.0, %v374
  %v376 = vpop.f32.mrb[0].mxu0
  %377 = vdwg.mxu0
  %v378 = vadd.f32 %v41, %v316
  %v379 = vadd.f32 %v42, %v319
  %v380 = vadd.f32 %v43, %v324
  %v381 = vadd.f32 %v44, %v327
  %v382 = vadd.f32 %v45, %v332
  %v383 = vadd.f32 %v46, %v335
  %v384 = vadd.f32 %v47, %v340
  %v385 = vadd.f32 %v48, %v343
  %v386 = vadd.f32 %v49, %v348
  %v387 = vadd.f32 %v50, %v351
  %v388 = vadd.f32 %v51, %v356
  %v389 = vadd.f32 %v52, %v359
  %v390 = vadd.f32 %v53, %v364
  %v391 = vadd.f32 %v54, %v367
  %v392 = vadd.f32 %v55, %v372
  %v393 = vadd.f32 %v56, %v375
  %394 = vst [vmem:[#allocation2] sm:$0xff] %v378
  %395 = vst [vmem:[#allocation2 + $0x8] sm:$0xff] %v379
  %396 = vst [vmem:[#allocation2 + $0x10] sm:$0xff] %v380
  %397 = vst [vmem:[#allocation2 + $0x18] sm:$0xff] %v381
  %398 = vst [vmem:[#allocation2 + $0x20] sm:$0xff] %v382
  %399 = vst [vmem:[#allocation2 + $0x28] sm:$0xff] %v383
  %400 = vst [vmem:[#allocation2 + $0x30] sm:$0xff] %v384
  %401 = vst [vmem:[#allocation2 + $0x38] sm:$0xff] %v385
  %402 = vst [vmem:[#allocation2 + $0x40] sm:$0xff] %v386
  %403 = vst [vmem:[#allocation2 + $0x48] sm:$0xff] %v387
  %404 = vst [vmem:[#allocation2 + $0x50] sm:$0xff] %v388
  %405 = vst [vmem:[#allocation2 + $0x58] sm:$0xff] %v389
  %406 = vst [vmem:[#allocation2 + $0x60] sm:$0xff] %v390
  %407 = vst [vmem:[#allocation2 + $0x68] sm:$0xff] %v391
  %408 = vst [vmem:[#allocation2 + $0x70] sm:$0xff] %v392
  %409 = vst [vmem:[#allocation2 + $0x78] sm:$0xff] %v393
  // Predicated region
  $region26: #{_forward_impl.6} parent=0 // pred_check
    %p410 = pneg %p21
  $region27: #{_forward_impl.6} parent=0 // pred_check_branch
    %412 = sbr.rel (%p410) target = $region29
  $region28: #{_forward_impl.6} parent=0 // pred_region
    %v413 = vld [vmem:[#allocation2] sm:$0xff]
    %v414 = vadd.f32 %v413, 0.0
    %v415 = vmul.f32 %v413, %v413
    %v416 = vadd.f32 %v415, 0.0
    %v417 = vld [vmem:[#allocation2 + $0x8] sm:$0xff]
    %v418 = vadd.f32 %v414, %v417
    %v419 = vmul.f32 %v417, %v417
    %v420 = vadd.f32 %v416, %v419
    %v421 = vld [vmem:[#allocation2 + $0x10] sm:$0xff]
    %v422 = vadd.f32 %v418, %v421
    %v423 = vmul.f32 %v421, %v421
    %v424 = vadd.f32 %v420, %v423
    %v425 = vld [vmem:[#allocation2 + $0x18] sm:$0xff]
    %v426 = vadd.f32 %v422, %v425
    %v427 = vmul.f32 %v425, %v425
    %v428 = vadd.f32 %v424, %v427
    %v429 = vld [vmem:[#allocation2 + $0x20] sm:$0xff]
    %v430 = vadd.f32 %v426, %v429
    %v431 = vmul.f32 %v429, %v429
    %v432 = vadd.f32 %v428, %v431
    %v433 = vld [vmem:[#allocation2 + $0x28] sm:$0xff]
    %v434 = vadd.f32 %v430, %v433
    %v435 = vmul.f32 %v433, %v433
    %v436 = vadd.f32 %v432, %v435
    %v437 = vld [vmem:[#allocation2 + $0x30] sm:$0xff]
    %v438 = vadd.f32 %v434, %v437
    %v439 = vmul.f32 %v437, %v437
    %v440 = vadd.f32 %v436, %v439
    %v441 = vld [vmem:[#allocation2 + $0x38] sm:$0xff]
    %v442 = vadd.f32 %v438, %v441
    %v443 = vmul.f32 %v441, %v441
    %v444 = vadd.f32 %v440, %v443
    %v445 = vld [vmem:[#allocation2 + $0x40] sm:$0xff]
    %v446 = vadd.f32 %v442, %v445
    %v447 = vmul.f32 %v445, %v445
    %v448 = vadd.f32 %v444, %v447
    %v449 = vld [vmem:[#allocation2 + $0x48] sm:$0xff]
    %v450 = vadd.f32 %v446, %v449
    %v451 = vmul.f32 %v449, %v449
    %v452 = vadd.f32 %v448, %v451
    %v453 = vld [vmem:[#allocation2 + $0x50] sm:$0xff]
    %v454 = vadd.f32 %v450, %v453
    %v455 = vmul.f32 %v453, %v453
    %v456 = vadd.f32 %v452, %v455
    %v457 = vld [vmem:[#allocation2 + $0x58] sm:$0xff]
    %v458 = vadd.f32 %v454, %v457
    %v459 = vmul.f32 %v457, %v457
    %v460 = vadd.f32 %v456, %v459
    %v461 = vld [vmem:[#allocation2 + $0x60] sm:$0xff]
    %v462 = vadd.f32 %v458, %v461
    %v463 = vmul.f32 %v461, %v461
    %v464 = vadd.f32 %v460, %v463
    %v465 = vld [vmem:[#allocation2 + $0x68] sm:$0xff]
    %v466 = vadd.f32 %v462, %v465
    %v467 = vmul.f32 %v465, %v465
    %v468 = vadd.f32 %v464, %v467
    %v469 = vld [vmem:[#allocation2 + $0x70] sm:$0xff]
    %v470 = vadd.f32 %v466, %v469
    %v471 = vmul.f32 %v469, %v469
    %v472 = vadd.f32 %v468, %v471
    %v473 = vld [vmem:[#allocation2 + $0x78] sm:$0xff]
    %v474 = vadd.f32 %v470, %v473
    %v475 = vmul.f32 %v473, %v473
    %v476 = vadd.f32 %v472, %v475
    %v477 = vld [vmem:[%s2] sm:$0xff]
    %v478 = vld [vmem:[%s2 + $0x8] sm:$0xff]
    %v479 = vld [vmem:[%s2 + $0x10] sm:$0xff]
    %v480 = vld [vmem:[%s2 + $0x18] sm:$0xff]
    %v481 = vld [vmem:[%s2 + $0x20] sm:$0xff]
    %v482 = vld [vmem:[%s2 + $0x28] sm:$0xff]
    %v483 = vld [vmem:[%s2 + $0x30] sm:$0xff]
    %v484 = vld [vmem:[%s2 + $0x38] sm:$0xff]
    %v485 = vld [vmem:[%s2 + $0x40] sm:$0xff]
    %v486 = vld [vmem:[%s2 + $0x48] sm:$0xff]
    %v487 = vld [vmem:[%s2 + $0x50] sm:$0xff]
    %v488 = vld [vmem:[%s2 + $0x58] sm:$0xff]
    %v489 = vld [vmem:[%s2 + $0x60] sm:$0xff]
    %v490 = vld [vmem:[%s2 + $0x68] sm:$0xff]
    %v491 = vld [vmem:[%s2 + $0x70] sm:$0xff]
    %v492 = vld [vmem:[%s2 + $0x78] sm:$0xff]
    %493 = vmatprep.subr.mxu0 0.0
    %494 = vmatpush1.msra.mxu0 %v477
    %495 = vmatprep.subr.mxu0 0.0
    %496 = vmatpush1.msra.mxu0 %v478
    %497 = vmatprep.subr.mxu0 0.0
    %498 = vmatpush1.msra.mxu0 %v479
    %499 = vmatprep.subr.mxu0 0.0
    %500 = vmatpush1.msra.mxu0 %v480
    %501 = vmatprep.subr.mxu0 0.0
    %502 = vmatpush1.msra.mxu0 %v481
    %503 = vmatprep.subr.mxu0 0.0
    %504 = vmatpush1.msra.mxu0 %v482
    %505 = vmatprep.subr.mxu0 0.0
    %506 = vmatpush1.msra.mxu0 %v483
    %507 = vmatprep.subr.mxu0 0.0
    %508 = vmatpush1.msra.mxu0 %v484
    %509 = vmatprep.subr.mxu0 0.0
    %510 = vmatpush1.msra.mxu0 %v485
    %511 = vmatprep.subr.mxu0 0.0
    %512 = vmatpush1.msra.mxu0 %v486
    %513 = vmatprep.subr.mxu0 0.0
    %514 = vmatpush1.msra.mxu0 %v487
    %515 = vmatprep.subr.mxu0 0.0
    %516 = vmatpush1.msra.mxu0 %v488
    %517 = vmatprep.subr.mxu0 0.0
    %518 = vmatpush1.msra.mxu0 %v489
    %519 = vmatprep.subr.mxu0 0.0
    %520 = vmatpush1.msra.mxu0 %v490
    %521 = vmatprep.subr.mxu0 0.0
    %522 = vmatpush1.msra.mxu0 %v491
    %523 = vmatprep.subr.mxu0 0.0
    %524 = vmatpush1.msra.mxu0 %v492
    %525 = vmatprep.subr.mxu0 0.0
    %526 = vmatpush1.msra.mxu0 0.0
    %527 = vmatprep.subr.mxu0 0.0
    %528 = vmatpush1.msra.mxu0 0.0
    %529 = vmatprep.subr.mxu0 0.0
    %530 = vmatpush1.msra.mxu0 0.0
    %531 = vmatprep.subr.mxu0 0.0
    %532 = vmatpush1.msra.mxu0 0.0
    %533 = vmatprep.subr.mxu0 0.0
    %534 = vmatpush1.msra.mxu0 0.0
    %535 = vmatprep.subr.mxu0 0.0
    %536 = vmatpush1.msra.mxu0 0.0
    %537 = vmatprep.subr.mxu0 0.0
    %538 = vmatpush1.msra.mxu0 0.0
    %539 = vmatprep.subr.mxu0 0.0
    %540 = vmatpush1.msra.mxu0 0.0
    %541 = vmatprep.subr.mxu0 0.0
    %542 = vmatpush1.msra.mxu0 0.0
    %543 = vmatprep.subr.mxu0 0.0
    %544 = vmatpush1.msra.mxu0 0.0
    %545 = vmatprep.subr.mxu0 0.0
    %546 = vmatpush1.msra.mxu0 0.0
    %547 = vmatprep.subr.mxu0 0.0
    %548 = vmatpush1.msra.mxu0 0.0
    %549 = vmatprep.subr.mxu0 0.0
    %550 = vmatpush1.msra.mxu0 0.0
    %551 = vmatprep.subr.mxu0 0.0
    %552 = vmatpush1.msra.mxu0 0.0
    %553 = vmatprep.subr.mxu0 0.0
    %554 = vmatpush1.msra.mxu0 0.0
    %555 = vmatprep.subr.mxu0 0.0
    %556 = vmatpush1.msra.mxu0 0.0
    %557 = vmatprep.mubr.f32.mxu0 0.0
    %558 = vmatmul.mubr.f32.gmra.mrb[0].mxu0 %v474
    %v559 = vpop.f32.mrb[0].mxu0
    %v560 = vadd.f32 0.0, %v559
    %v561 = vpop.f32.mrb[0].mxu0
    %562 = vdwg.mxu0
    %v563 = vrot.slane %v560, 4
    %v564 = vadd.f32 %v560, %v563
    %v565 = vrot.slane %v564, 2
    %v566 = vadd.f32 %v564, %v565
    %v567 = vrot.slane %v566, 1
    %v568 = vadd.f32 %v566, %v567
    %569 = vmatprep.subr.mxu0 0.0
    %570 = vmatpush1.msra.mxu0 %v477
    %571 = vmatprep.subr.mxu0 0.0
    %572 = vmatpush1.msra.mxu0 %v478
    %573 = vmatprep.subr.mxu0 0.0
    %574 = vmatpush1.msra.mxu0 %v479
    %575 = vmatprep.subr.mxu0 0.0
    %576 = vmatpush1.msra.mxu0 %v480
    %577 = vmatprep.subr.mxu0 0.0
    %578 = vmatpush1.msra.mxu0 %v481
    %579 = vmatprep.subr.mxu0 0.0
    %580 = vmatpush1.msra.mxu0 %v482
    %581 = vmatprep.subr.mxu0 0.0
    %582 = vmatpush1.msra.mxu0 %v483
    %583 = vmatprep.subr.mxu0 0.0
    %584 = vmatpush1.msra.mxu0 %v484
    %585 = vmatprep.subr.mxu0 0.0
    %586 = vmatpush1.msra.mxu0 %v485
    %587 = vmatprep.subr.mxu0 0.0
    %588 = vmatpush1.msra.mxu0 %v486
    %589 = vmatprep.subr.mxu0 0.0
    %590 = vmatpush1.msra.mxu0 %v487
    %591 = vmatprep.subr.mxu0 0.0
    %592 = vmatpush1.msra.mxu0 %v488
    %593 = vmatprep.subr.mxu0 0.0
    %594 = vmatpush1.msra.mxu0 %v489
    %595 = vmatprep.subr.mxu0 0.0
    %596 = vmatpush1.msra.mxu0 %v490
    %597 = vmatprep.subr.mxu0 0.0
    %598 = vmatpush1.msra.mxu0 %v491
    %599 = vmatprep.subr.mxu0 0.0
    %600 = vmatpush1.msra.mxu0 %v492
    %601 = vmatprep.subr.mxu0 0.0
    %602 = vmatpush1.msra.mxu0 0.0
    %603 = vmatprep.subr.mxu0 0.0
    %604 = vmatpush1.msra.mxu0 0.0
    %605 = vmatprep.subr.mxu0 0.0
    %606 = vmatpush1.msra.mxu0 0.0
    %607 = vmatprep.subr.mxu0 0.0
    %608 = vmatpush1.msra.mxu0 0.0
    %609 = vmatprep.subr.mxu0 0.0
    %610 = vmatpush1.msra.mxu0 0.0
    %611 = vmatprep.subr.mxu0 0.0
    %612 = vmatpush1.msra.mxu0 0.0
    %613 = vmatprep.subr.mxu0 0.0
    %614 = vmatpush1.msra.mxu0 0.0
    %615 = vmatprep.subr.mxu0 0.0
    %616 = vmatpush1.msra.mxu0 0.0
    %617 = vmatprep.subr.mxu0 0.0
    %618 = vmatpush1.msra.mxu0 0.0
    %619 = vmatprep.subr.mxu0 0.0
    %620 = vmatpush1.msra.mxu0 0.0
    %621 = vmatprep.subr.mxu0 0.0
    %622 = vmatpush1.msra.mxu0 0.0
    %623 = vmatprep.subr.mxu0 0.0
    %624 = vmatpush1.msra.mxu0 0.0
    %625 = vmatprep.subr.mxu0 0.0
    %626 = vmatpush1.msra.mxu0 0.0
    %627 = vmatprep.subr.mxu0 0.0
    %628 = vmatpush1.msra.mxu0 0.0
    %629 = vmatprep.subr.mxu0 0.0
    %630 = vmatpush1.msra.mxu0 0.0
    %631 = vmatprep.subr.mxu0 0.0
    %632 = vmatpush1.msra.mxu0 0.0
    %633 = vmatprep.mubr.f32.mxu0 0.0
    %634 = vmatmul.mubr.f32.gmra.mrb[0].mxu0 %v476
    %v635 = vpop.f32.mrb[0].mxu0
    %v636 = vadd.f32 0.0, %v635
    %v637 = vpop.f32.mrb[0].mxu0
    %638 = vdwg.mxu0
    %v639 = vrot.slane %v636, 4
    %v640 = vadd.f32 %v636, %v639
    %v641 = vrot.slane %v640, 2
    %v642 = vadd.f32 %v640, %v641
    %v643 = vrot.slane %v642, 1
    %v644 = vadd.f32 %v642, %v643
    %v645 = vmul.f32 %v568, 0.001953125
    %v646 = vmul.f32 %v644, 0.001953125
    %v647 = vmul.f32 %v645, %v645
    %v648 = vsub.f32 %v646, %v647
    %v649 = vmax.f32 %v648, 0.0
    %v650 = vld [vmem:[%s3] sm:$0x1]
    %v651 = vadd.f32 %v649, 1e-05
    %v652 = vrsqrt.pop %v651
    %v653 = vmul.f32 %v650, %v652
    %v654 = vld [vmem:[%s4] sm:$0x1]
    %v655 = vmul.f32 %v645, %v653
    %v656 = vsub.f32 %v654, %v655
    %v658 = vlaneseq
    %v659 = vshrl.u32 %v658, 7
    %v660 = vsub.s32 0, %v659
    %v661 = vrot.slane %v653, %v660
    %v663 = vmul.f32 %v413, %v661
    %v665 = vlaneseq
    %v666 = vshrl.u32 %v665, 7
    %v667 = vsub.s32 0, %v666
    %v668 = vrot.slane %v656, %v667
    %v670 = vadd.f32 %v663, %v668
    %v671 = vmax.f32 %v670, 0.0
    %v672 = vpack.c.bf16 %v671, %v671
    %673 = vst [vmem:[%s5] sm:$0xf] %v672
    %v674 = vld [vmem:[#allocation2 + $0x8] sm:$0xff]
    %v675 = vmul.f32 %v674, %v661
    %v676 = vadd.f32 %v675, %v668
    %v677 = vmax.f32 %v676, 0.0
    %v678 = vpack.c.bf16 %v677, %v677
    %679 = vst [vmem:[%s5 + $0x4] sm:$0xf] %v678
    %v680 = vld [vmem:[#allocation2 + $0x10] sm:$0xff]
    %v681 = vmul.f32 %v680, %v661
    %v682 = vadd.f32 %v681, %v668
    %v683 = vmax.f32 %v682, 0.0
    %v684 = vpack.c.bf16 %v683, %v683
    %685 = vst [vmem:[%s5 + $0x8] sm:$0xf] %v684
    %v686 = vld [vmem:[#allocation2 + $0x18] sm:$0xff]
    %v687 = vmul.f32 %v686, %v661
    %v688 = vadd.f32 %v687, %v668
    %v689 = vmax.f32 %v688, 0.0
    %v690 = vpack.c.bf16 %v689, %v689
    %691 = vst [vmem:[%s5 + $0xc] sm:$0xf] %v690
    %v692 = vld [vmem:[#allocation2 + $0x20] sm:$0xff]
    %v693 = vmul.f32 %v692, %v661
    %v694 = vadd.f32 %v693, %v668
    %v695 = vmax.f32 %v694, 0.0
    %v696 = vpack.c.bf16 %v695, %v695
    %697 = vst [vmem:[%s5 + $0x10] sm:$0xf] %v696
    %v698 = vld [vmem:[#allocation2 + $0x28] sm:$0xff]
    %v699 = vmul.f32 %v698, %v661
    %v700 = vadd.f32 %v699, %v668
    %v701 = vmax.f32 %v700, 0.0
    %v702 = vpack.c.bf16 %v701, %v701
    %703 = vst [vmem:[%s5 + $0x14] sm:$0xf] %v702
    %v704 = vld [vmem:[#allocation2 + $0x30] sm:$0xff]
    %v705 = vmul.f32 %v704, %v661
    %v706 = vadd.f32 %v705, %v668
    %v707 = vmax.f32 %v706, 0.0
    %v708 = vpack.c.bf16 %v707, %v707
    %709 = vst [vmem:[%s5 + $0x18] sm:$0xf] %v708
    %v710 = vld [vmem:[#allocation2 + $0x38] sm:$0xff]
    %v711 = vmul.f32 %v710, %v661
    %v712 = vadd.f32 %v711, %v668
    %v713 = vmax.f32 %v712, 0.0
    %v714 = vpack.c.bf16 %v713, %v713
    %715 = vst [vmem:[%s5 + $0x1c] sm:$0xf] %v714
    %v716 = vld [vmem:[#allocation2 + $0x40] sm:$0xff]
    %v717 = vmul.f32 %v716, %v661
    %v718 = vadd.f32 %v717, %v668
    %v719 = vmax.f32 %v718, 0.0
    %v720 = vpack.c.bf16 %v719, %v719
    %721 = vst [vmem:[%s5 + $0x20] sm:$0xf] %v720
    %v722 = vld [vmem:[#allocation2 + $0x48] sm:$0xff]
    %v723 = vmul.f32 %v722, %v661
    %v724 = vadd.f32 %v723, %v668
    %v725 = vmax.f32 %v724, 0.0
    %v726 = vpack.c.bf16 %v725, %v725
    %727 = vst [vmem:[%s5 + $0x24] sm:$0xf] %v726
    %v728 = vld [vmem:[#allocation2 + $0x50] sm:$0xff]
    %v729 = vmul.f32 %v728, %v661
    %v730 = vadd.f32 %v729, %v668
    %v731 = vmax.f32 %v730, 0.0
    %v732 = vpack.c.bf16 %v731, %v731
    %733 = vst [vmem:[%s5 + $0x28] sm:$0xf] %v732
    %v734 = vld [vmem:[#allocation2 + $0x58] sm:$0xff]
    %v735 = vmul.f32 %v734, %v661
    %v736 = vadd.f32 %v735, %v668
    %v737 = vmax.f32 %v736, 0.0
    %v738 = vpack.c.bf16 %v737, %v737
    %739 = vst [vmem:[%s5 + $0x2c] sm:$0xf] %v738
    %v740 = vld [vmem:[#allocation2 + $0x60] sm:$0xff]
    %v741 = vmul.f32 %v740, %v661
    %v742 = vadd.f32 %v741, %v668
    %v743 = vmax.f32 %v742, 0.0
    %v744 = vpack.c.bf16 %v743, %v743
    %745 = vst [vmem:[%s5 + $0x30] sm:$0xf] %v744
    %v746 = vld [vmem:[#allocation2 + $0x68] sm:$0xff]
    %v747 = vmul.f32 %v746, %v661
    %v748 = vadd.f32 %v747, %v668
    %v749 = vmax.f32 %v748, 0.0
    %v750 = vpack.c.bf16 %v749, %v749
    %751 = vst [vmem:[%s5 + $0x34] sm:$0xf] %v750
    %v752 = vld [vmem:[#allocation2 + $0x70] sm:$0xff]
    %v753 = vmul.f32 %v752, %v661
    %v754 = vadd.f32 %v753, %v668
    %v755 = vmax.f32 %v754, 0.0
    %v756 = vpack.c.bf16 %v755, %v755
    %757 = vst [vmem:[%s5 + $0x38] sm:$0xf] %v756
    %v758 = vld [vmem:[#allocation2 + $0x78] sm:$0xff]
    %v759 = vmul.f32 %v758, %v661
    %v760 = vadd.f32 %v759, %v668
    %v761 = vmax.f32 %v760, 0.0
    %v762 = vpack.c.bf16 %v761, %v761
    %763 = vst [vmem:[%s5 + $0x3c] sm:$0xf] %v762
  $region29: #{_forward_impl.6} parent=0 // pred_fallthru
    _
  // Predicated region
  $region30: #{_forward_impl.6} parent=0 // pred_check
    _
  $region31: #{_forward_impl.6} parent=0 // pred_check_branch
    %765 = sbr.rel (0) target = $region33
  $region32: #{_forward_impl.6} parent=0 // pred_region
    _
  $region33: #{_forward_impl.6} parent=0 // pred_fallthru
    _
  // Predicated region
  $region34: #{_forward_impl.6} parent=0 // pred_check
    _
  $region35: #{_forward_impl.6} parent=0 // pred_check_branch
    %767 = sbr.rel (0) target = $region37
  $region36: #{_forward_impl.6} parent=0 // pred_region
    _
  $region37: #{_forward_impl.6} parent=0 // pred_fallthru
    _

// kernel: tile.68
$region0: #{tile.68}
  #allocation0 [shape = 's32[1]{0}', space=sflag, size = 0x4, scoped, tag = 'scoped memory for tile.68']
  %s0 = inlined_call_operand.vmem [shape: f32[3], index: 0, kind: input, shape index: {}]
  %s1 = inlined_call_operand.vmem [shape: f32[4,3], index: 1, kind: output, shape index: {}]
  // Predicated region
  $region2: #{tile.68} parent=0 // pred_check
    _
  $region3: #{tile.68} parent=0 // pred_check_branch
    %3 = sbr.rel (0) target = $region5
  $region4: #{tile.68} parent=0 // pred_region
    _
  $region5: #{tile.68} parent=0 // pred_fallthru
    _
  %v4 = vld [vmem:[%s0] ss:$0 sm:$0xff]
  %5 = vst [vmem:[%s1] sm:$0xf] %v4

// kernel: tile.69
$region0: #{tile.69}
  %s0 = inlined_call_operand.vmem [shape: f32[4,3], index: 0, kind: input, shape index: {}]
  %s1 = inlined_call_operand.vmem [shape: f32[12], index: 1, kind: output, shape index: {}]
  $region1: #{tile.69} parent=0
    #allocation0 [shape = 'u8[4096]{0}', space=vmem, size = 0x1000, scoped, tag = 'scoped mem for output reshape']
    #allocation1 [shape = 'u8[4096]{0}', space=vmem, size = 0x1000, scoped, tag = 'scoped mem for input reshape']
    %s3 = sshllo.u32 0, 4
    %v4 = vld [vmem:[%s0] sm:%s3]
    %5 = vst [vmem:[#allocation1] sm:%s3] %v4
    %v6 = vld [vmem:[#allocation1] sm:$0x1]
    %vm7 = vcmask 23552
    %8 = vst.msk [vmem:[#allocation0] sm:$0x1] %vm7, %v6
    %s9 = scalar_lea.vmem [#allocation1], 3
    %v10 = vld [vmem:[%s9] sm:$0x1]
    %11 = vrot.lane.b32.xlu0 %v10, 9
    %v12 = vpop.permute.xlu0 %11
    %vm13 = vcmask 97352
    %14 = vst.msk [vmem:[#allocation0] sm:$0x1] %vm13, %v12
    %s15 = scalar_lea.vmem [#allocation1], 2
    %v16 = vld [vmem:[%s15] sm:$0x1]
    %17 = vrot.lane.b32.xlu0 %v16, 6
    %v18 = vpop.permute.xlu0 %17
    %vm19 = vcmask 72752
    %20 = vst.msk [vmem:[#allocation0] sm:$0x1] %vm19, %v18
    %s21 = scalar_lea.vmem [#allocation1], 1
    %v22 = vld [vmem:[%s21] sm:$0x1]
    %23 = vrot.lane.b32.xlu0 %v22, 3
    %v24 = vpop.permute.xlu0 %23
    %vm25 = vcmask 48152
    %26 = vst.msk [vmem:[#allocation0] sm:$0x1] %vm25, %v24
    %s28 = sshllo.u32 0, 1
    %v30 = vld [vmem:[#allocation0] sm:%s28]
    %s31 = sshllo.u32 0, 1
    %32 = vst [vmem:[%s1] sm:%s31] %v30

// kernel: _forward_impl.7
$region0: #{_forward_impl.7}
  #allocation0 [shape = 'u32[]', space=smem, size = 0x4, offset = 0x4, fixed_abs, tag = 'smem constant byte address 0x4 - core index']
  #allocation1 [shape = 'u32[144,128]{1,0:T(1,128)}', space=vmem, size = 0x12000, scoped, tag = 'internal scratch']
  #allocation2 [shape = 'f32[128,128]{1,0:T(8,128)}', space=vmem, size = 0x10000, scoped, tag = 'scratch operand']
  %s0 = inlined_call_operand.vmem [shape: bf16[512,128], index: 0, kind: input, shape index: {}]
  %s1 = inlined_call_operand.vmem [shape: bf16[128,128], index: 1, kind: input, shape index: {}]
  %s2 = inlined_call_operand.vmem [shape: f32[1,128], index: 2, kind: input, shape index: {}]
  %s3 = inlined_call_operand.vmem [shape: f32[512,128], index: 3, kind: output, shape index: {}]
  %s4 = sld [smem:[#allocation0]]
  $region53: #{_forward_impl.7} parent=0
    _
  %s6 = ssub.s32 1, %s4
  %s7 = scalar_select 0, %s6, %s4
  loop: start=0, step=1, limit=6
  $region2: #{_forward_impl.7} parent=0 // loop_pre_header
    _
  $region3: #{_forward_impl.7} parent=0 // loop_header
    %s9 = sphi 0, %s13
    %p10 = scmp.ge.s32.totalorder %s9, 6
    %s16 = sphi 0, %s35
    %s17 = sphi 0, %s31
    %s18 = sphi 0, %s27
    %s19 = sphi 0, %s16
    %s20 = sphi 0, %s17
    %s21 = sphi 0, %s18
    %s22 = sphi 0, %s19
    %s23 = sphi 0, %s20
    %s24 = sphi 0, %s21
    %s40 = sphi 0, %s42
    %s43 = sphi 0, %s40
    %s44 = sphi 0, %s43
    %s60 = sphi 0, %s44
    %s68 = sphi 0, %s70
    %s71 = sphi 0, %s68
    %s72 = sphi 0, %s71
    %s88 = sphi 0, %s72
    %s94 = sphi 0, %s96
    %s97 = sphi 0, %s94
    %s98 = sphi 0, %s97
    %s114 = sphi 0, %s98
    %s122 = sphi 0, %s124
    %s125 = sphi 0, %s122
    %s126 = sphi 0, %s125
    %s142 = sphi 0, %s126
  $region4: #{_forward_impl.7} parent=0 // loop_header_branch
    %12 = sbr.rel (%p10) target = $region8
  $region5: #{_forward_impl.7} parent=0 // loop_body
    %s14 = ssub.s32 %s9, 1
    %s15 = ssub.s32 %s9, 2
    %s25 = sadd.s32 1, %s18
    %p26 = scmp.ge.s32.totalorder %s25, 1
    %s27 = scalar_select %p26, 0, %s25
    %s28 = sadd.s32 1, %s17
    %s29 = scalar_select %p26, %s28, %s17
    %p30 = scmp.ge.s32.totalorder %s29, 1
    %s31 = scalar_select %p30, 0, %s29
    %s32 = sadd.s32 1, %s16
    %s33 = scalar_select %p30, %s32, %s16
    %p34 = scmp.ge.s32.totalorder %s33, 4
    %s35 = scalar_select %p34, 0, %s33
    %s36 = ssub.s32 %s16, %s35
    %s37 = ssub.s32 %s18, %s27
    %s38 = sor.u32 %s36, %s37
    %p39 = scmp.eq.s32.totalorder %s38, 0
    %s41 = sadd.s32 %s40, 1
    %s42 = scalar_select %p39, %s40, %s41
    %p45 = pneg %p39
    %p46 = scmp.eq.s32.totalorder %s9, 3
    %p47 = por %p45, %p46
    %p48 = scmp.ne.s32.totalorder %s40, %s43
    %p49 = scmp.eq.s32.totalorder %s9, 0
    %p50 = por %p48, %p49
    %p51 = scmp.ne.s32.totalorder %s40, %s43
    %p52 = scmp.eq.s32.totalorder %s14, 3
    %p53 = por %p51, %p52
    %p54 = scmp.ne.s32.totalorder %s43, %s44
    %p55 = scmp.eq.s32.totalorder %s14, 0
    %p56 = por %p54, %p55
    %p57 = scmp.ne.s32.totalorder %s43, %s44
    %p58 = scmp.eq.s32.totalorder %s15, 3
    %p59 = por %p57, %p58
    %p61 = scmp.ne.s32.totalorder %s44, %s60
    %p62 = scmp.eq.s32.totalorder %s15, 0
    %p63 = por %p61, %p62
    %s64 = ssub.s32 %s18, %s27
    %s65 = ssub.s32 %s17, %s31
    %s66 = sor.u32 %s64, %s65
    %p67 = scmp.eq.s32.totalorder %s66, 0
    %s69 = sadd.s32 %s68, 1
    %s70 = scalar_select %p67, %s68, %s69
    %p73 = pneg %p67
    %p74 = scmp.eq.s32.totalorder %s9, 3
    %p75 = por %p73, %p74
    %p76 = scmp.ne.s32.totalorder %s68, %s71
    %p77 = scmp.eq.s32.totalorder %s9, 0
    %p78 = por %p76, %p77
    %p79 = scmp.ne.s32.totalorder %s68, %s71
    %p80 = scmp.eq.s32.totalorder %s14, 3
    %p81 = por %p79, %p80
    %p82 = scmp.ne.s32.totalorder %s71, %s72
    %p83 = scmp.eq.s32.totalorder %s14, 0
    %p84 = por %p82, %p83
    %p85 = scmp.ne.s32.totalorder %s71, %s72
    %p86 = scmp.eq.s32.totalorder %s15, 3
    %p87 = por %p85, %p86
    %p89 = scmp.ne.s32.totalorder %s72, %s88
    %p90 = scmp.eq.s32.totalorder %s15, 0
    %p91 = por %p89, %p90
    %s92 = ssub.s32 %s17, %s31
    %p93 = scmp.eq.s32.totalorder %s92, 0
    %s95 = sadd.s32 %s94, 1
    %s96 = scalar_select %p93, %s94, %s95
    %p99 = pneg %p93
    %p100 = scmp.eq.s32.totalorder %s9, 3
    %p101 = por %p99, %p100
    %p102 = scmp.ne.s32.totalorder %s94, %s97
    %p103 = scmp.eq.s32.totalorder %s9, 0
    %p104 = por %p102, %p103
    %p105 = scmp.ne.s32.totalorder %s94, %s97
    %p106 = scmp.eq.s32.totalorder %s14, 3
    %p107 = por %p105, %p106
    %p108 = scmp.ne.s32.totalorder %s97, %s98
    %p109 = scmp.eq.s32.totalorder %s14, 0
    %p110 = por %p108, %p109
    %p111 = scmp.ne.s32.totalorder %s97, %s98
    %p112 = scmp.eq.s32.totalorder %s15, 3
    %p113 = por %p111, %p112
    %p115 = scmp.ne.s32.totalorder %s98, %s114
    %p116 = scmp.eq.s32.totalorder %s15, 0
    %p117 = por %p115, %p116
    %s118 = ssub.s32 %s16, %s35
    %s119 = ssub.s32 %s17, %s31
    %s120 = sor.u32 %s118, %s119
    %p121 = scmp.eq.s32.totalorder %s120, 0
    %s123 = sadd.s32 %s122, 1
    %s124 = scalar_select %p121, %s122, %s123
    %p127 = pneg %p121
    %p128 = scmp.eq.s32.totalorder %s9, 3
    %p129 = por %p127, %p128
    %p130 = scmp.ne.s32.totalorder %s122, %s125
    %p131 = scmp.eq.s32.totalorder %s9, 0
    %p132 = por %p130, %p131
    %p133 = scmp.ne.s32.totalorder %s122, %s125
    %p134 = scmp.eq.s32.totalorder %s14, 3
    %p135 = por %p133, %p134
    %p136 = scmp.ne.s32.totalorder %s125, %s126
    %p137 = scmp.eq.s32.totalorder %s14, 0
    %p138 = por %p136, %p137
    %p139 = scmp.ne.s32.totalorder %s125, %s126
    %p140 = scmp.eq.s32.totalorder %s15, 3
    %p141 = por %p139, %p140
    %p143 = scmp.ne.s32.totalorder %s126, %s142
    %p144 = scmp.eq.s32.totalorder %s15, 0
    %p145 = por %p143, %p144
    %p146 = scmp.le.s32.totalorder 1, %s9
    %p147 = scmp.lt.s32.totalorder %s9, 5
    %p148 = pnand %p146, %p147
    %p149 = pneg %p148
    // Predicated region
    $region9: #{_forward_impl.7} parent=5 // pred_check
      _
    $region10: #{_forward_impl.7} parent=5 // pred_check_branch
      %151 = sbr.rel (%p148) target = $region12
    $region11: #{_forward_impl.7} parent=5 // pred_region
      %s152 = ssub.s32 %s9, 1
      // Predicated region
      $region13: #{_forward_impl.7} parent=11 // pred_check
        %p153 = pneg %p84
      $region14: #{_forward_impl.7} parent=11 // pred_check_branch
        %155 = sbr.rel (%p153) target = $region16
      $region15: #{_forward_impl.7} parent=11 // pred_region
        %s156 = smul.u32 16, %s21
        %p157 = scmp.lt.s32.totalorder %s156, 15
        %s158 = scalar_select %p157, %s156, 15
        %p159 = scmp.lt.s32.totalorder %s20, 0
        %s160 = scalar_select %p159, %s20, 0
        %s161 = sadd.s32 %s160, %s158
        %s162 = smul.addr %s161, 4
        %s163 = scalar_lea.vmem %s1, %s162
        %s164 = smul.u32 16, %s21
      $region16: #{_forward_impl.7} parent=11 // pred_fallthru
        _
      // Predicated region
      $region17: #{_forward_impl.7} parent=11 // pred_check
        %p165 = pneg %p110
      $region18: #{_forward_impl.7} parent=11 // pred_check_branch
        %167 = sbr.rel (%p165) target = $region20
      $region19: #{_forward_impl.7} parent=11 // pred_region
        %p168 = scmp.lt.s32.totalorder %s20, 0
        %s169 = scalar_select %p168, %s20, 0
        %s170 = scalar_lea.vmem %s2, %s169
      $region20: #{_forward_impl.7} parent=11 // pred_fallthru
        _
    $region12: #{_forward_impl.7} parent=5 // pred_fallthru
      _
    %p171 = scmp.lt.s32.totalorder %s9, 4
    // Predicated region
    $region21: #{_forward_impl.7} parent=5 // pred_check
      %p172 = pneg %p171
    $region22: #{_forward_impl.7} parent=5 // pred_check_branch
      %174 = sbr.rel (%p172) target = $region24
    $region23: #{_forward_impl.7} parent=5 // pred_region
      // Predicated region
      $region25: #{_forward_impl.7} parent=23 // pred_check
        %p175 = pneg %p50
      $region26: #{_forward_impl.7} parent=23 // pred_check_branch
        %177 = sbr.rel (%p175) target = $region28
      $region27: #{_forward_impl.7} parent=23 // pred_region
        %s178 = smul.u32 16, %s16
        %p179 = scmp.lt.s32.totalorder %s178, 63
        %s180 = scalar_select %p179, %s178, 63
        %p181 = scmp.lt.s32.totalorder %s18, 0
        %s182 = scalar_select %p181, %s18, 0
        %s183 = sadd.s32 %s182, %s180
        %s184 = smul.addr %s183, 4
        %s185 = scalar_lea.vmem %s0, %s184
        %s186 = smul.u32 16, %s16
      $region28: #{_forward_impl.7} parent=23 // pred_fallthru
        _
    $region24: #{_forward_impl.7} parent=5 // pred_fallthru
      _
    %p187 = scmp.le.s32.totalorder 1, %s9
    %p188 = scmp.lt.s32.totalorder %s9, 5
    %p189 = pnand %p187, %p188
    %p190 = pneg %p189
    // Predicated region
    $region29: #{_forward_impl.7} parent=5 // pred_check
      _
    $region30: #{_forward_impl.7} parent=5 // pred_check_branch
      %192 = sbr.rel (%p189) target = $region32
    $region31: #{_forward_impl.7} parent=5 // pred_region
      %s193 = ssub.s32 %s9, 1
      %s194 = smul.u32 16, %s19
      %p195 = scmp.lt.s32.totalorder %s194, 63
      %s196 = scalar_select %p195, %s194, 63
      %p197 = scmp.lt.s32.totalorder %s21, 0
      %s198 = scalar_select %p197, %s21, 0
      %s199 = sadd.s32 %s198, %s196
      %s200 = smul.addr %s199, 4
      %s201 = scalar_lea.vmem %s0, %s200
      %p202 = pneg %p56
      %p203 = pneg %p53
      %s204 = smul.u32 16, %s21
      %p205 = scmp.lt.s32.totalorder %s204, 15
      %s206 = scalar_select %p205, %s204, 15
      %p207 = scmp.lt.s32.totalorder %s20, 0
      %s208 = scalar_select %p207, %s20, 0
      %s209 = sadd.s32 %s208, %s206
      %s210 = smul.addr %s209, 4
      %s211 = scalar_lea.vmem %s1, %s210
      %p212 = pneg %p84
      %p213 = pneg %p81
      %p214 = scmp.lt.s32.totalorder %s20, 0
      %s215 = scalar_select %p214, %s20, 0
      %s216 = scalar_lea.vmem %s2, %s215
      %p217 = pneg %p110
      %p218 = pneg %p107
      %p219 = pneg %p138
      %p220 = pneg %p135
      %s221 = smul.u32 16, %s19
      %p222 = scmp.lt.s32.totalorder %s221, 63
      %s223 = scalar_select %p222, %s221, 63
      %p224 = scmp.lt.s32.totalorder %s20, 0
      %s225 = scalar_select %p224, %s20, 0
      %s226 = sadd.s32 %s225, %s223
      %s227 = smul.addr %s226, 8
      %s228 = scalar_lea.vmem %s3, %s227
      %s229 = smul.u32 16, %s19
      %p230 = scmp.lt.s32.totalorder %s229, 63
      %s231 = scalar_select %p230, %s229, 63
      %p232 = scmp.lt.s32.totalorder %s21, 0
      %s233 = scalar_select %p232, %s21, 0
      %s234 = sadd.s32 %s233, %s231
      %s235 = smul.addr %s234, 4
      %s236 = scalar_lea.vmem %s0, %s235
      %s237 = smul.u32 16, %s19
      %s238 = smul.u32 16, %s21
      %p239 = scmp.lt.s32.totalorder %s238, 15
      %s240 = scalar_select %p239, %s238, 15
      %p241 = scmp.lt.s32.totalorder %s20, 0
      %s242 = scalar_select %p241, %s20, 0
      %s243 = sadd.s32 %s242, %s240
      %s244 = smul.addr %s243, 4
      %s245 = scalar_lea.vmem %s1, %s244
      %s246 = smul.u32 16, %s21
      %p247 = scmp.lt.s32.totalorder %s20, 0
      %s248 = scalar_select %p247, %s20, 0
      %s249 = scalar_lea.vmem %s2, %s248
      %s250 = smul.u32 16, %s19
      %p251 = scmp.lt.s32.totalorder %s250, 63
      %s252 = scalar_select %p251, %s250, 63
      %p253 = scmp.lt.s32.totalorder %s20, 0
      %s254 = scalar_select %p253, %s20, 0
      %s255 = sadd.s32 %s254, %s252
      %s256 = smul.addr %s255, 8
      %s257 = scalar_lea.vmem %s3, %s256
      %s258 = smul.u32 16, %s19
      %p260 = scmp.eq.s32.totalorder %s21, 0
      // Predicated region
      $region33: #{_forward_impl.7} parent=31 // pred_check
        %p261 = pneg %p260
      $region34: #{_forward_impl.7} parent=31 // pred_check_branch
        %263 = sbr.rel (%p261) target = $region36
      $region35: #{_forward_impl.7} parent=31 // pred_region
        %264 = vst [vmem:[#allocation2] sm:$0xff] 0.0
        %265 = vst [vmem:[#allocation2 + $0x8] sm:$0xff] 0.0
        %266 = vst [vmem:[#allocation2 + $0x10] sm:$0xff] 0.0
        %267 = vst [vmem:[#allocation2 + $0x18] sm:$0xff] 0.0
        %268 = vst [vmem:[#allocation2 + $0x20] sm:$0xff] 0.0
        %269 = vst [vmem:[#allocation2 + $0x28] sm:$0xff] 0.0
        %270 = vst [vmem:[#allocation2 + $0x30] sm:$0xff] 0.0
        %271 = vst [vmem:[#allocation2 + $0x38] sm:$0xff] 0.0
        %272 = vst [vmem:[#allocation2 + $0x40] sm:$0xff] 0.0
        %273 = vst [vmem:[#allocation2 + $0x48] sm:$0xff] 0.0
        %274 = vst [vmem:[#allocation2 + $0x50] sm:$0xff] 0.0
        %275 = vst [vmem:[#allocation2 + $0x58] sm:$0xff] 0.0
        %276 = vst [vmem:[#allocation2 + $0x60] sm:$0xff] 0.0
        %277 = vst [vmem:[#allocation2 + $0x68] sm:$0xff] 0.0
        %278 = vst [vmem:[#allocation2 + $0x70] sm:$0xff] 0.0
        %279 = vst [vmem:[#allocation2 + $0x78] sm:$0xff] 0.0
      $region36: #{_forward_impl.7} parent=31 // pred_fallthru
        _
      %v280 = vld [vmem:[#allocation2] sm:$0xff]
      %v281 = vld [vmem:[#allocation2 + $0x8] sm:$0xff]
      %v282 = vld [vmem:[#allocation2 + $0x10] sm:$0xff]
      %v283 = vld [vmem:[#allocation2 + $0x18] sm:$0xff]
      %v284 = vld [vmem:[#allocation2 + $0x20] sm:$0xff]
      %v285 = vld [vmem:[#allocation2 + $0x28] sm:$0xff]
      %v286 = vld [vmem:[#allocation2 + $0x30] sm:$0xff]
      %v287 = vld [vmem:[#allocation2 + $0x38] sm:$0xff]
      %v288 = vld [vmem:[#allocation2 + $0x40] sm:$0xff]
      %v289 = vld [vmem:[#allocation2 + $0x48] sm:$0xff]
      %v290 = vld [vmem:[#allocation2 + $0x50] sm:$0xff]
      %v291 = vld [vmem:[#allocation2 + $0x58] sm:$0xff]
      %v292 = vld [vmem:[#allocation2 + $0x60] sm:$0xff]
      %v293 = vld [vmem:[#allocation2 + $0x68] sm:$0xff]
      %v294 = vld [vmem:[#allocation2 + $0x70] sm:$0xff]
      %v295 = vld [vmem:[#allocation2 + $0x78] sm:$0xff]
      %v296 = vld [vmem:[%s236] sm:$0xf]
      %v297 = vld [vmem:[%s236 + $0x4] sm:$0xf]
      %v298 = vld [vmem:[%s236 + $0x8] sm:$0xf]
      %v299 = vld [vmem:[%s236 + $0xc] sm:$0xf]
      %v300 = vld [vmem:[%s236 + $0x10] sm:$0xf]
      %v301 = vld [vmem:[%s236 + $0x14] sm:$0xf]
      %v302 = vld [vmem:[%s236 + $0x18] sm:$0xf]
      %v303 = vld [vmem:[%s236 + $0x1c] sm:$0xf]
      %v304 = vld [vmem:[%s236 + $0x20] sm:$0xf]
      %v305 = vld [vmem:[%s236 + $0x24] sm:$0xf]
      %v306 = vld [vmem:[%s236 + $0x28] sm:$0xf]
      %v307 = vld [vmem:[%s236 + $0x2c] sm:$0xf]
      %v308 = vld [vmem:[%s236 + $0x30] sm:$0xf]
      %v309 = vld [vmem:[%s236 + $0x34] sm:$0xf]
      %v310 = vld [vmem:[%s236 + $0x38] sm:$0xf]
      %v311 = vld [vmem:[%s236 + $0x3c] sm:$0xf]
      %v312 = vld [vmem:[%s245] sm:$0xf]
      %v313 = vld [vmem:[%s245 + $0x4] sm:$0xf]
      %v314 = vld [vmem:[%s245 + $0x8] sm:$0xf]
      %v315 = vld [vmem:[%s245 + $0xc] sm:$0xf]
      %v316 = vld [vmem:[%s245 + $0x10] sm:$0xf]
      %v317 = vld [vmem:[%s245 + $0x14] sm:$0xf]
      %v318 = vld [vmem:[%s245 + $0x18] sm:$0xf]
      %v319 = vld [vmem:[%s245 + $0x1c] sm:$0xf]
      %v320 = vld [vmem:[%s245 + $0x20] sm:$0xf]
      %v321 = vld [vmem:[%s245 + $0x24] sm:$0xf]
      %v322 = vld [vmem:[%s245 + $0x28] sm:$0xf]
      %v323 = vld [vmem:[%s245 + $0x2c] sm:$0xf]
      %v324 = vld [vmem:[%s245 + $0x30] sm:$0xf]
      %v325 = vld [vmem:[%s245 + $0x34] sm:$0xf]
      %v326 = vld [vmem:[%s245 + $0x38] sm:$0xf]
      %v327 = vld [vmem:[%s245 + $0x3c] sm:$0xf]
      %v344 = vunpack.c.l.b16 %v296
      %v345 = vunpack.c.l.b16 %v297
      %v346 = vunpack.c.l.b16 %v298
      %v347 = vunpack.c.l.b16 %v299
      %v348 = vunpack.c.l.b16 %v300
      %v349 = vunpack.c.l.b16 %v301
      %v350 = vunpack.c.l.b16 %v302
      %v351 = vunpack.c.l.b16 %v303
      %v352 = vunpack.c.l.b16 %v304
      %v353 = vunpack.c.l.b16 %v305
      %v354 = vunpack.c.l.b16 %v306
      %v355 = vunpack.c.l.b16 %v307
      %v356 = vunpack.c.l.b16 %v308
      %v357 = vunpack.c.l.b16 %v309
      %v358 = vunpack.c.l.b16 %v310
      %v359 = vunpack.c.l.b16 %v311
      %v360 = vpack.c.b16 %v345, %v344
      %v361 = vpack.c.b16 %v347, %v346
      %v362 = vpack.c.b16 %v349, %v348
      %v363 = vpack.c.b16 %v351, %v350
      %v364 = vpack.c.b16 %v353, %v352
      %v365 = vpack.c.b16 %v355, %v354
      %v366 = vpack.c.b16 %v357, %v356
      %v367 = vpack.c.b16 %v359, %v358
      %v392 = vunpack.c.l.b16 %v312
      %v393 = vunpack.c.l.b16 %v313
      %v394 = vunpack.c.l.b16 %v314
      %v395 = vunpack.c.l.b16 %v315
      %v396 = vunpack.c.l.b16 %v316
      %v397 = vunpack.c.l.b16 %v317
      %v398 = vunpack.c.l.b16 %v318
      %v399 = vunpack.c.l.b16 %v319
      %v400 = vunpack.c.l.b16 %v320
      %v401 = vunpack.c.l.b16 %v321
      %v402 = vunpack.c.l.b16 %v322
      %v403 = vunpack.c.l.b16 %v323
      %v404 = vunpack.c.l.b16 %v324
      %v405 = vunpack.c.l.b16 %v325
      %v406 = vunpack.c.l.b16 %v326
      %v407 = vunpack.c.l.b16 %v327
      %v408 = vpack.c.b16 %v393, %v392
      %v409 = vpack.c.b16 %v395, %v394
      %v410 = vpack.c.b16 %v397, %v396
      %v411 = vpack.c.b16 %v399, %v398
      %v412 = vpack.c.b16 %v401, %v400
      %v413 = vpack.c.b16 %v403, %v402
      %v414 = vpack.c.b16 %v405, %v404
      %v415 = vpack.c.b16 %v407, %v406
      %424 = vmatprep.subr.bf16.mxu0 0
      %425 = vmatpush1.bf16.msra.mxu0 %v408
      %426 = vmatprep.subr.bf16.mxu0 0
      %427 = vmatpush1.bf16.msra.mxu0 %v409
      %428 = vmatprep.subr.bf16.mxu0 0
      %429 = vmatpush1.bf16.msra.mxu0 %v410
      %430 = vmatprep.subr.bf16.mxu0 0
      %431 = vmatpush1.bf16.msra.mxu0 %v411
      %432 = vmatprep.subr.bf16.mxu0 0
      %433 = vmatpush1.bf16.msra.mxu0 %v412
      %434 = vmatprep.subr.bf16.mxu0 0
      %435 = vmatpush1.bf16.msra.mxu0 %v413
      %436 = vmatprep.subr.bf16.mxu0 0
      %437 = vmatpush1.bf16.msra.mxu0 %v414
      %438 = vmatprep.subr.bf16.mxu0 0
      %439 = vmatpush1.bf16.msra.mxu0 %v415
      %440 = vmatprep.subr.bf16.mxu0 0
      %441 = vmatpush1.bf16.msra.mxu0 0
      %442 = vmatprep.subr.bf16.mxu0 0
      %443 = vmatpush1.bf16.msra.mxu0 0
      %444 = vmatprep.subr.bf16.mxu0 0
      %445 = vmatpush1.bf16.msra.mxu0 0
      %446 = vmatprep.subr.bf16.mxu0 0
      %447 = vmatpush1.bf16.msra.mxu0 0
      %448 = vmatprep.subr.bf16.mxu0 0
      %449 = vmatpush1.bf16.msra.mxu0 0
      %450 = vmatprep.subr.bf16.mxu0 0
      %451 = vmatpush1.bf16.msra.mxu0 0
      %452 = vmatprep.subr.bf16.mxu0 0
      %453 = vmatpush1.bf16.msra.mxu0 0
      %454 = vmatprep.subr.bf16.mxu0 0
      %455 = vmatpush1.bf16.msra.mxu0 0
      %456 = vmatprep.mubr.bf16.mxu0 0
      %457 = vmatmul.mubr.bf16.gmra.mrb[0].mxu0 %v360
      %v458 = vpop.f32.mrb[0].mxu0
      %v459 = vadd.f32 0.0, %v458
      %v460 = vpop.f32.mrb[0].mxu0
      %v461 = vpop.f32.mrb[0].mxu0
      %v462 = vadd.f32 0.0, %v461
      %v463 = vpop.f32.mrb[0].mxu0
      %464 = vmatprep.mubr.bf16.mxu0 0
      %465 = vmatmul.mubr.bf16.gmra.mrb[0].mxu0 %v361
      %v466 = vpop.f32.mrb[0].mxu0
      %v467 = vadd.f32 0.0, %v466
      %v468 = vpop.f32.mrb[0].mxu0
      %v469 = vpop.f32.mrb[0].mxu0
      %v470 = vadd.f32 0.0, %v469
      %v471 = vpop.f32.mrb[0].mxu0
      %472 = vmatprep.mubr.bf16.mxu0 0
      %473 = vmatmul.mubr.bf16.gmra.mrb[0].mxu0 %v362
      %v474 = vpop.f32.mrb[0].mxu0
      %v475 = vadd.f32 0.0, %v474
      %v476 = vpop.f32.mrb[0].mxu0
      %v477 = vpop.f32.mrb[0].mxu0
      %v478 = vadd.f32 0.0, %v477
      %v479 = vpop.f32.mrb[0].mxu0
      %480 = vmatprep.mubr.bf16.mxu0 0
      %481 = vmatmul.mubr.bf16.gmra.mrb[0].mxu0 %v363
      %v482 = vpop.f32.mrb[0].mxu0
      %v483 = vadd.f32 0.0, %v482
      %v484 = vpop.f32.mrb[0].mxu0
      %v485 = vpop.f32.mrb[0].mxu0
      %v486 = vadd.f32 0.0, %v485
      %v487 = vpop.f32.mrb[0].mxu0
      %488 = vmatprep.mubr.bf16.mxu0 0
      %489 = vmatmul.mubr.bf16.gmra.mrb[0].mxu0 %v364
      %v490 = vpop.f32.mrb[0].mxu0
      %v491 = vadd.f32 0.0, %v490
      %v492 = vpop.f32.mrb[0].mxu0
      %v493 = vpop.f32.mrb[0].mxu0
      %v494 = vadd.f32 0.0, %v493
      %v495 = vpop.f32.mrb[0].mxu0
      %496 = vmatprep.mubr.bf16.mxu0 0
      %497 = vmatmul.mubr.bf16.gmra.mrb[0].mxu0 %v365
      %v498 = vpop.f32.mrb[0].mxu0
      %v499 = vadd.f32 0.0, %v498
      %v500 = vpop.f32.mrb[0].mxu0
      %v501 = vpop.f32.mrb[0].mxu0
      %v502 = vadd.f32 0.0, %v501
      %v503 = vpop.f32.mrb[0].mxu0
      %504 = vmatprep.mubr.bf16.mxu0 0
      %505 = vmatmul.mubr.bf16.gmra.mrb[0].mxu0 %v366
      %v506 = vpop.f32.mrb[0].mxu0
      %v507 = vadd.f32 0.0, %v506
      %v508 = vpop.f32.mrb[0].mxu0
      %v509 = vpop.f32.mrb[0].mxu0
      %v510 = vadd.f32 0.0, %v509
      %v511 = vpop.f32.mrb[0].mxu0
      %512 = vmatprep.mubr.bf16.mxu0 0
      %513 = vmatmul.mubr.bf16.gmra.mrb[0].mxu0 %v367
      %v514 = vpop.f32.mrb[0].mxu0
      %v515 = vadd.f32 0.0, %v514
      %v516 = vpop.f32.mrb[0].mxu0
      %v517 = vpop.f32.mrb[0].mxu0
      %v518 = vadd.f32 0.0, %v517
      %v519 = vpop.f32.mrb[0].mxu0
      %520 = vdwg.mxu0
      %v521 = vadd.f32 %v280, %v459
      %v522 = vadd.f32 %v281, %v462
      %v523 = vadd.f32 %v282, %v467
      %v524 = vadd.f32 %v283, %v470
      %v525 = vadd.f32 %v284, %v475
      %v526 = vadd.f32 %v285, %v478
      %v527 = vadd.f32 %v286, %v483
      %v528 = vadd.f32 %v287, %v486
      %v529 = vadd.f32 %v288, %v491
      %v530 = vadd.f32 %v289, %v494
      %v531 = vadd.f32 %v290, %v499
      %v532 = vadd.f32 %v291, %v502
      %v533 = vadd.f32 %v292, %v507
      %v534 = vadd.f32 %v293, %v510
      %v535 = vadd.f32 %v294, %v515
      %v536 = vadd.f32 %v295, %v518
      %537 = vst [vmem:[#allocation2] sm:$0xff] %v521
      %538 = vst [vmem:[#allocation2 + $0x8] sm:$0xff] %v522
      %539 = vst [vmem:[#allocation2 + $0x10] sm:$0xff] %v523
      %540 = vst [vmem:[#allocation2 + $0x18] sm:$0xff] %v524
      %541 = vst [vmem:[#allocation2 + $0x20] sm:$0xff] %v525
      %542 = vst [vmem:[#allocation2 + $0x28] sm:$0xff] %v526
      %543 = vst [vmem:[#allocation2 + $0x30] sm:$0xff] %v527
      %544 = vst [vmem:[#allocation2 + $0x38] sm:$0xff] %v528
      %545 = vst [vmem:[#allocation2 + $0x40] sm:$0xff] %v529
      %546 = vst [vmem:[#allocation2 + $0x48] sm:$0xff] %v530
      %547 = vst [vmem:[#allocation2 + $0x50] sm:$0xff] %v531
      %548 = vst [vmem:[#allocation2 + $0x58] sm:$0xff] %v532
      %549 = vst [vmem:[#allocation2 + $0x60] sm:$0xff] %v533
      %550 = vst [vmem:[#allocation2 + $0x68] sm:$0xff] %v534
      %551 = vst [vmem:[#allocation2 + $0x70] sm:$0xff] %v535
      %552 = vst [vmem:[#allocation2 + $0x78] sm:$0xff] %v536
      // Predicated region
      $region37: #{_forward_impl.7} parent=31 // pred_check
        %p553 = pneg %p260
      $region38: #{_forward_impl.7} parent=31 // pred_check_branch
        %555 = sbr.rel (%p553) target = $region40
      $region39: #{_forward_impl.7} parent=31 // pred_region
        %v556 = vld [vmem:[#allocation2] sm:$0xff]
        %v557 = vld [vmem:[#allocation2 + $0x8] sm:$0xff]
        %v558 = vld [vmem:[#allocation2 + $0x10] sm:$0xff]
        %v559 = vld [vmem:[#allocation2 + $0x18] sm:$0xff]
        %v560 = vld [vmem:[#allocation2 + $0x20] sm:$0xff]
        %v561 = vld [vmem:[#allocation2 + $0x28] sm:$0xff]
        %v562 = vld [vmem:[#allocation2 + $0x30] sm:$0xff]
        %v563 = vld [vmem:[#allocation2 + $0x38] sm:$0xff]
        %v564 = vld [vmem:[#allocation2 + $0x40] sm:$0xff]
        %v565 = vld [vmem:[#allocation2 + $0x48] sm:$0xff]
        %v566 = vld [vmem:[#allocation2 + $0x50] sm:$0xff]
        %v567 = vld [vmem:[#allocation2 + $0x58] sm:$0xff]
        %v568 = vld [vmem:[#allocation2 + $0x60] sm:$0xff]
        %v569 = vld [vmem:[#allocation2 + $0x68] sm:$0xff]
        %v570 = vld [vmem:[#allocation2 + $0x70] sm:$0xff]
        %v571 = vld [vmem:[#allocation2 + $0x78] sm:$0xff]
        %v572 = vld [vmem:[%s249] sm:$0x1]
        %v574 = vlaneseq
        %v575 = vshrl.u32 %v574, 7
        %v576 = vsub.s32 0, %v575
        %v577 = vrot.slane %v572, %v576
        %v579 = vadd.f32 %v556, %v577
        %v580 = vadd.f32 %v557, %v577
        %v581 = vadd.f32 %v558, %v577
        %v582 = vadd.f32 %v559, %v577
        %v583 = vadd.f32 %v560, %v577
        %v584 = vadd.f32 %v561, %v577
        %v585 = vadd.f32 %v562, %v577
        %v586 = vadd.f32 %v563, %v577
        %v587 = vadd.f32 %v564, %v577
        %v588 = vadd.f32 %v565, %v577
        %v589 = vadd.f32 %v566, %v577
        %v590 = vadd.f32 %v567, %v577
        %v591 = vadd.f32 %v568, %v577
        %v592 = vadd.f32 %v569, %v577
        %v593 = vadd.f32 %v570, %v577
        %v594 = vadd.f32 %v571, %v577
        %v595 = vtanh.pop %v579
        %v596 = vtanh.pop %v580
        %v597 = vtanh.pop %v581
        %v598 = vtanh.pop %v582
        %v599 = vtanh.pop %v583
        %v600 = vtanh.pop %v584
        %v601 = vtanh.pop %v585
        %v602 = vtanh.pop %v586
        %v603 = vtanh.pop %v587
        %v604 = vtanh.pop %v588
        %v605 = vtanh.pop %v589
        %v606 = vtanh.pop %v590
        %v607 = vtanh.pop %v591
        %v608 = vtanh.pop %v592
        %v609 = vtanh.pop %v593
        %v610 = vtanh.pop %v594
        %611 = vst [vmem:[%s257] sm:$0xff] %v595
        %612 = vst [vmem:[%s257 + $0x8] sm:$0xff] %v596
        %613 = vst [vmem:[%s257 + $0x10] sm:$0xff] %v597
        %614 = vst [vmem:[%s257 + $0x18] sm:$0xff] %v598
        %615 = vst [vmem:[%s257 + $0x20] sm:$0xff] %v599
        %616 = vst [vmem:[%s257 + $0x28] sm:$0xff] %v600
        %617 = vst [vmem:[%s257 + $0x30] sm:$0xff] %v601
        %618 = vst [vmem:[%s257 + $0x38] sm:$0xff] %v602
        %619 = vst [vmem:[%s257 + $0x40] sm:$0xff] %v603
        %620 = vst [vmem:[%s257 + $0x48] sm:$0xff] %v604
        %621 = vst [vmem:[%s257 + $0x50] sm:$0xff] %v605
        %622 = vst [vmem:[%s257 + $0x58] sm:$0xff] %v606
        %623 = vst [vmem:[%s257 + $0x60] sm:$0xff] %v607
        %624 = vst [vmem:[%s257 + $0x68] sm:$0xff] %v608
        %625 = vst [vmem:[%s257 + $0x70] sm:$0xff] %v609
        %626 = vst [vmem:[%s257 + $0x78] sm:$0xff] %v610
      $region40: #{_forward_impl.7} parent=31 // pred_fallthru
        _
      %s627 = smul.u32 16, %s19
      %p628 = scmp.lt.s32.totalorder %s627, 63
      %s629 = scalar_select %p628, %s627, 63
      %p630 = scmp.lt.s32.totalorder %s20, 0
      %s631 = scalar_select %p630, %s20, 0
      %s632 = sadd.s32 %s631, %s629
      %s633 = smul.addr %s632, 8
      %s634 = scalar_lea.vmem %s3, %s633
      // Predicated region
      $region41: #{_forward_impl.7} parent=31 // pred_check
        %p635 = pneg %p135
      $region42: #{_forward_impl.7} parent=31 // pred_check_branch
        %637 = sbr.rel (%p635) target = $region44
      $region43: #{_forward_impl.7} parent=31 // pred_region
        %s638 = smul.u32 16, %s19
      $region44: #{_forward_impl.7} parent=31 // pred_fallthru
        _
    $region32: #{_forward_impl.7} parent=5 // pred_fallthru
      _
    %p639 = scmp.le.s32.totalorder 2, %s9
    // Predicated region
    $region45: #{_forward_impl.7} parent=5 // pred_check
      %p640 = pneg %p639
    $region46: #{_forward_impl.7} parent=5 // pred_check_branch
      %642 = sbr.rel (%p640) target = $region48
    $region47: #{_forward_impl.7} parent=5 // pred_region
      %s643 = ssub.s32 %s9, 2
      // Predicated region
      $region49: #{_forward_impl.7} parent=47 // pred_check
        %p644 = pneg %p141
      $region50: #{_forward_impl.7} parent=47 // pred_check_branch
        %646 = sbr.rel (%p644) target = $region52
      $region51: #{_forward_impl.7} parent=47 // pred_region
        %s647 = smul.u32 16, %s22
        %p648 = scmp.lt.s32.totalorder %s647, 63
        %s649 = scalar_select %p648, %s647, 63
        %p650 = scmp.lt.s32.totalorder %s23, 0
        %s651 = scalar_select %p650, %s23, 0
        %s652 = sadd.s32 %s651, %s649
        %s653 = smul.addr %s652, 8
        %s654 = scalar_lea.vmem %s3, %s653
      $region52: #{_forward_impl.7} parent=47 // pred_fallthru
        _
    $region48: #{_forward_impl.7} parent=5 // pred_fallthru
      _
  $region6: #{_forward_impl.7} parent=0 // loop_footer
    %s13 = sadd.s32 1, %s9
  $region7: #{_forward_impl.7} parent=0 // loop_footer_branch
    %8 = sbr.rel target = $region3
  $region8: #{_forward_impl.7} parent=0 // loop_exit
    _

</llo_original>
